<compile_context>
chip_gen: v5e
topology: v5e:2x2
jax: 0.10.0
libtpu: 0.0.40
codegen_flags: <defaults>
</compile_context>

<pallas_src>
import functools

import jax
import jax.numpy as jnp
from jax import lax
from jax.experimental import pallas as pl
from jax.experimental.pallas import tpu as pltpu

# ---- model hyper-parameters (from GNNLSTM.__init__) ----
N_CODES = 5        # n_diagnosis_codes
EMB = 20           # emb_size == input_size
HIDDEN = 20        # hidden_size
HID_CH = 15        # hidden_channels
N_CLASSES = 3
N_LAYERS = 4       # lstm num_layers
ATT_HID = 64       # SelfAttention projection hidden


def _vmem():
    return pl.BlockSpec(memory_space=pltpu.MemorySpace.VMEM)


# ---------------------------------------------------------------------------
# Single fused kernel: embed+relu -> 4-layer LSTM -> self-attention pooling ->
# label-masked cosine similarity -> top-5 neighbour graph -> SAGEConv x2 ->
# Linear -> softmax.  All shapes are tiny (T=8, B=8, H=20): full-array VMEM
# blocks, no grid.
# ---------------------------------------------------------------------------
def fused_kernel(x_ref, emb_ref, wih_ref, whh_ref, b_ref,
                 aw1_ref, ab1_ref, aw2_ref, ab2_ref, y_ref,
                 s1wl_ref, s1b_ref, s1wr_ref,
                 s2wl_ref, s2b_ref, s2wr_ref,
                 lw_ref, lb_ref,
                 out2_ref, xfeat_ref, conv_ref, a_out_ref,
                 *, T, B):
    f32 = jnp.float32
    H = HIDDEN

    # ---- 1. embedding-weighted sum + ReLU:  (x * emb).sum(codes) == x @ emb ----
    seq = jnp.maximum(
        jnp.dot(x_ref[...], emb_ref[...], preferred_element_type=f32), 0.0)    # (T*B, H)

    # ---- 2. 4-layer LSTM (time-major), fused gates [i, f, o, g] ----
    for layer in range(N_LAYERS):
        wih = wih_ref[layer]              # (H, 4H)
        whh = whh_ref[layer]              # (H, 4H)
        bias = b_ref[layer]               # (1, 4H) = b_ih + b_hh, pre-added
        # hoisted input-to-hidden path: one matmul per layer instead of T*4
        pre = jnp.dot(seq, wih, preferred_element_type=f32) + bias             # (T*B, 4H)
        h = jnp.zeros((B, H), f32)
        c = jnp.zeros((B, H), f32)
        hs = []
        for t in range(T):                # T is static -> fully unrolled
            gates = pre[t * B:(t + 1) * B, :] + jnp.dot(
                h, whh, preferred_element_type=f32)                            # (B, 4H)
            ifo = jax.nn.sigmoid(gates[:, :3 * H])                             # i, f, o slab
            g_g = jnp.tanh(gates[:, 3 * H:])                                   # g
            i_g = ifo[:, :H]
            f_g = ifo[:, H:2 * H]
            o_g = ifo[:, 2 * H:]
            c = f_g * c + i_g * g_g
            h = o_g * jnp.tanh(c)
            hs.append(h)
        seq = jnp.concatenate(hs, axis=0)                                      # (T*B, H)

    # ---- 3. SelfAttention over time (softmax over T per batch element) ----
    hproj = jnp.maximum(
        jnp.dot(seq, aw1_ref[...], preferred_element_type=f32) + ab1_ref[...], 0.0)
    energy = (jnp.dot(hproj, aw2_ref[...], preferred_element_type=f32)
              + ab2_ref[...])                                                  # (T*B, 1)
    eb = [energy[t * B:(t + 1) * B, :] for t in range(T)]                      # T x (B,1)
    mx = eb[0]
    for t in range(1, T):
        mx = jnp.maximum(mx, eb[t])
    ex = [jnp.exp(eb[t] - mx) for t in range(T)]
    denom = ex[0]
    for t in range(1, T):
        denom = denom + ex[t]
    x_feat = jnp.zeros((B, H), f32)
    for t in range(T):
        w_t = ex[t] / denom                                                    # (B, 1)
        x_feat = x_feat + seq[t * B:(t + 1) * B, :] * w_t                      # (B, H)
    xfeat_ref[...] = x_feat

    # ---- 4. label-masked cosine similarity matrix ----
    y = y_ref[...]
    dn = (((1,), (1,)), ((), ()))
    label = lax.dot_general(y, y, dn, preferred_element_type=f32)
    label = jnp.where(label > 0, jnp.ones_like(label), label)
    sim = lax.dot_general(x_feat, x_feat, dn, preferred_element_type=f32)
    norm = jnp.sqrt(jnp.sum(x_feat * x_feat, axis=1, keepdims=True))           # (B, 1)
    nprod = lax.dot_general(norm, norm, dn, preferred_element_type=f32)
    # tiny eps guard against an all-zero feature row (PyTorch ref would NaN here)
    a = sim / jnp.maximum(nprod, 1e-12) * label

    # ---- 5. top-6 neighbours per row, drop the first (self); A = nbr + nbr^T ----
    col = lax.broadcasted_iota(jnp.int32, (B, B), 1).astype(f32)
    row = lax.broadcasted_iota(jnp.int32, (B, B), 0).astype(f32)
    NEG = jnp.float32(-1e30)
    work = a
    nbr = jnp.zeros((B, B), f32)
    for k in range(6):
        m = jnp.max(work, axis=1, keepdims=True)
        # tie-break: smallest column index among maxima
        idx = jnp.min(jnp.where(work == m, col, jnp.float32(B)), axis=1, keepdims=True)
        onehot = (col == idx).astype(f32)
        if k > 0:
            nbr = nbr + onehot
        work = jnp.where(onehot > 0, NEG, work)
    eye = (row == col).astype(f32)
    # nbr^T via an 8x8 MXU matmul (avoids a small minor-dim transpose lowering)
    nbr_t = lax.dot_general(nbr, eye, (((0,), (0,)), ((), ())),
                            preferred_element_type=f32)
    A = nbr + nbr_t
    a_out_ref[...] = A

    # ---- 6. SAGEConv(20->15) + ReLU + SAGEConv(15->20) + Linear(20->3) + softmax
    # SAGEConv (PyG default): out = lin_l(mean_{j in N(i)} x_j) + lin_r(x_i)
    adj = (A > 0).astype(f32)
    deg = jnp.maximum(jnp.sum(adj, axis=1, keepdims=True), 1.0)
    agg1 = jnp.dot(adj, x_feat, preferred_element_type=f32) / deg
    h1 = (jnp.dot(agg1, s1wl_ref[...], preferred_element_type=f32) + s1b_ref[...]
          + jnp.dot(x_feat, s1wr_ref[...], preferred_element_type=f32))
    h1 = jnp.maximum(h1, 0.0)
    # TODO(synk): F.dropout(p=0.5, training=self.training) — identity in eval mode.
    agg2 = jnp.dot(adj, h1, preferred_element_type=f32) / deg
    h2 = (jnp.dot(agg2, s2wl_ref[...], preferred_element_type=f32) + s2b_ref[...]
          + jnp.dot(h1, s2wr_ref[...], preferred_element_type=f32))
    conv_ref[...] = h2

    logits = jnp.dot(h2, lw_ref[...], preferred_element_type=f32) + lb_ref[...]
    lm = jnp.max(logits, axis=1, keepdims=True)
    le = jnp.exp(logits - lm)
    out2_ref[...] = le / jnp.sum(le, axis=1, keepdims=True)


# ---------------------------------------------------------------------------
# Parameters (deterministic synthetic init; PyTorch-style per-gate layout) and a
# one-time "prepare" step that fuses the LSTM gates / biases for the kernel.
# ---------------------------------------------------------------------------
def init_params(key):
    ks = jax.random.split(key, 17)
    s = 0.1
    return {
        'emb':      s * jax.random.normal(ks[0],  (N_CODES, EMB), jnp.float32),
        # per-gate order (i, f, g, o), stored (in, out) per gate
        'wih':      s * jax.random.normal(ks[1],  (N_LAYERS, 4, HIDDEN, HIDDEN), jnp.float32),
        'whh':      s * jax.random.normal(ks[2],  (N_LAYERS, 4, HIDDEN, HIDDEN), jnp.float32),
        'bih':      s * jax.random.normal(ks[3],  (N_LAYERS, 4, 1, HIDDEN), jnp.float32),
        'bhh':      s * jax.random.normal(ks[4],  (N_LAYERS, 4, 1, HIDDEN), jnp.float32),
        'att_w1':   s * jax.random.normal(ks[5],  (HIDDEN, ATT_HID), jnp.float32),
        'att_b1':   s * jax.random.normal(ks[6],  (1, ATT_HID), jnp.float32),
        'att_w2':   s * jax.random.normal(ks[7],  (ATT_HID, 1), jnp.float32),
        'att_b2':   s * jax.random.normal(ks[8],  (1, 1), jnp.float32),
        'sage1_wl': s * jax.random.normal(ks[9],  (HIDDEN, HID_CH), jnp.float32),
        'sage1_b':  s * jax.random.normal(ks[10], (1, HID_CH), jnp.float32),
        'sage1_wr': s * jax.random.normal(ks[11], (HIDDEN, HID_CH), jnp.float32),
        'sage2_wl': s * jax.random.normal(ks[12], (HID_CH, HIDDEN), jnp.float32),
        'sage2_b':  s * jax.random.normal(ks[13], (1, HIDDEN), jnp.float32),
        'sage2_wr': s * jax.random.normal(ks[14], (HID_CH, HIDDEN), jnp.float32),
        'lin_w':    s * jax.random.normal(ks[15], (HIDDEN, N_CLASSES), jnp.float32),
        'lin_b':    s * jax.random.normal(ks[16], (1, N_CLASSES), jnp.float32),
    }


def _fuse_gates(w):
    # (L, 4, ..., H) in PyTorch gate order (i, f, g, o) -> (L, ..., 4H) in [i, f, o, g]
    return jnp.concatenate([w[:, 0], w[:, 1], w[:, 3], w[:, 2]], axis=-1)


def prepare_params(p):
    """One-time (outside jit) fusion of LSTM gate weights and biases."""
    q = {k: v for k, v in p.items() if k not in ('wih', 'whh', 'bih', 'bhh')}
    q['wih_f'] = _fuse_gates(p['wih'])              # (L, H, 4H)
    q['whh_f'] = _fuse_gates(p['whh'])              # (L, H, 4H)
    q['b_f'] = _fuse_gates(p['bih'] + p['bhh'])     # (L, 1, 4H)
    return q


# ---------------------------------------------------------------------------
# Full forward: a single pallas_call.
# ---------------------------------------------------------------------------
def gnn_lstm_forward(params, x, y):
    T, B, C = x.shape
    kern = functools.partial(fused_kernel, T=T, B=B)
    out2, x_feat, conv_out, A = pl.pallas_call(
        kern,
        out_shape=(jax.ShapeDtypeStruct((B, N_CLASSES), jnp.float32),
                   jax.ShapeDtypeStruct((B, HIDDEN), jnp.float32),
                   jax.ShapeDtypeStruct((B, HIDDEN), jnp.float32),
                   jax.ShapeDtypeStruct((B, B), jnp.float32)),
        in_specs=[_vmem()] * 18,
        out_specs=(_vmem(), _vmem(), _vmem(), _vmem()),
        cost_estimate=pl.CostEstimate(
            flops=2_000_000, transcendentals=30_000, bytes_accessed=70_000),
    )(x.reshape(T * B, C), params['emb'],
      params['wih_f'], params['whh_f'], params['b_f'],
      params['att_w1'], params['att_b1'], params['att_w2'], params['att_b2'], y,
      params['sage1_wl'], params['sage1_b'], params['sage1_wr'],
      params['sage2_wl'], params['sage2_b'], params['sage2_wr'],
      params['lin_w'], params['lin_b'])
    # TODO(synk): torch returns `edges` of data-dependent shape (2, E); we return the
    # dense symmetric adjacency A (static shape) instead.
    return out2, x_feat, conv_out, A


if __name__ == "__main__":
    key = jax.random.PRNGKey(0)
    kx, ky, kp = jax.random.split(key, 3)
    T, B = 8, 8
    x = jax.random.uniform(kx, (T, B, N_CODES), jnp.float32)          # (seq, batch, codes)
    labels = jax.random.randint(ky, (B,), 0, N_CLASSES)
    y = jax.nn.one_hot(labels, N_CLASSES, dtype=jnp.float32)          # (batch, classes)
    params = prepare_params(init_params(kp))

    out2, x_feat, conv_out, A = jax.jit(gnn_lstm_forward)(params, x, y)
    jax.block_until_ready((out2, x_feat, conv_out, A))
    assert out2.shape == (B, N_CLASSES)
    assert x_feat.shape == (B, HIDDEN)
    assert conv_out.shape == (B, HIDDEN)
    assert A.shape == (B, B)
    print("KERNEL_OK")
</pallas_src>

<mosaic_0001>
module attributes {stable_mosaic.version = 11 : i64} {
  func.func @fused_kernel(%arg0: memref<64x5xf32, #tpu.memory_space<vmem>>, %arg1: memref<5x20xf32, #tpu.memory_space<vmem>>, %arg2: memref<4x20x80xf32, #tpu.memory_space<vmem>>, %arg3: memref<4x20x80xf32, #tpu.memory_space<vmem>>, %arg4: memref<4x1x80xf32, #tpu.memory_space<vmem>>, %arg5: memref<20x64xf32, #tpu.memory_space<vmem>>, %arg6: memref<1x64xf32, #tpu.memory_space<vmem>>, %arg7: memref<64x1xf32, #tpu.memory_space<vmem>>, %arg8: memref<1x1xf32, #tpu.memory_space<vmem>>, %arg9: memref<8x3xf32, #tpu.memory_space<vmem>>, %arg10: memref<20x15xf32, #tpu.memory_space<vmem>>, %arg11: memref<1x15xf32, #tpu.memory_space<vmem>>, %arg12: memref<20x15xf32, #tpu.memory_space<vmem>>, %arg13: memref<15x20xf32, #tpu.memory_space<vmem>>, %arg14: memref<1x20xf32, #tpu.memory_space<vmem>>, %arg15: memref<15x20xf32, #tpu.memory_space<vmem>>, %arg16: memref<20x3xf32, #tpu.memory_space<vmem>>, %arg17: memref<1x3xf32, #tpu.memory_space<vmem>>, %arg18: memref<8x3xf32, #tpu.memory_space<vmem>>, %arg19: memref<8x20xf32, #tpu.memory_space<vmem>>, %arg20: memref<8x20xf32, #tpu.memory_space<vmem>>, %arg21: memref<8x8xf32, #tpu.memory_space<vmem>>) attributes {dimension_semantics = [], scalar_prefetch = 0 : i64, scratch_operands = 0 : i64, tpu.core_type = #tpu.core_type<tc>} {
    %c0 = arith.constant 0 : index
    %c0_0 = arith.constant 0 : index
    %0 = vector.load %arg0[%c0, %c0_0] : memref<64x5xf32, #tpu.memory_space<vmem>>, vector<64x5xf32>
    %c0_1 = arith.constant 0 : index
    %c0_2 = arith.constant 0 : index
    %1 = vector.load %arg1[%c0_1, %c0_2] : memref<5x20xf32, #tpu.memory_space<vmem>>, vector<5x20xf32>
    %cst = arith.constant dense<0.000000e+00> : vector<64x20xf32>
    %2 = tpu.matmul %0, %1, %cst {dimension_numbers = #tpu.dot_dimension_numbers<[1], [0], [0], [1], [0, 0, 1, 1], [], []>} : vector<64x5xf32>, vector<5x20xf32>, vector<64x20xf32> -> vector<64x20xf32>
    %cst_3 = arith.constant 0.000000e+00 : f32
    %3 = vector.broadcast %cst_3 : f32 to vector<64x20xf32>
    %4 = arith.maximumf %2, %3 : vector<64x20xf32>
    %c0_4 = arith.constant 0 : index
    %c0_5 = arith.constant 0 : index
    %c0_6 = arith.constant 0 : index
    %5 = vector.load %arg2[%c0_4, %c0_5, %c0_6] : memref<4x20x80xf32, #tpu.memory_space<vmem>>, vector<1x20x80xf32>
    %6 = vector.shape_cast %5 : vector<1x20x80xf32> to vector<20x80xf32>
    %c0_7 = arith.constant 0 : index
    %c0_8 = arith.constant 0 : index
    %c0_9 = arith.constant 0 : index
    %7 = vector.load %arg3[%c0_7, %c0_8, %c0_9] : memref<4x20x80xf32, #tpu.memory_space<vmem>>, vector<1x20x80xf32>
    %8 = vector.shape_cast %7 : vector<1x20x80xf32> to vector<20x80xf32>
    %c0_10 = arith.constant 0 : index
    %c0_11 = arith.constant 0 : index
    %c0_12 = arith.constant 0 : index
    %9 = vector.load %arg4[%c0_10, %c0_11, %c0_12] : memref<4x1x80xf32, #tpu.memory_space<vmem>>, vector<1x1x80xf32>
    %10 = vector.shape_cast %9 : vector<1x1x80xf32> to vector<1x80xf32>
    %cst_13 = arith.constant dense<0.000000e+00> : vector<64x80xf32>
    %11 = tpu.matmul %4, %6, %cst_13 {dimension_numbers = #tpu.dot_dimension_numbers<[1], [0], [0], [1], [0, 0, 1, 1], [], []>} : vector<64x20xf32>, vector<20x80xf32>, vector<64x80xf32> -> vector<64x80xf32>
    %12 = vector.broadcast %10 : vector<1x80xf32> to vector<64x80xf32>
    %13 = arith.addf %11, %12 : vector<64x80xf32>
    %cst_14 = arith.constant 0.000000e+00 : f32
    %14 = vector.broadcast %cst_14 : f32 to vector<8x20xf32>
    %cst_15 = arith.constant 0.000000e+00 : f32
    %15 = vector.broadcast %cst_15 : f32 to vector<8x20xf32>
    %16 = vector.extract_strided_slice %13 {offsets = [0, 0], sizes = [8, 80], strides = [1, 1]} : vector<64x80xf32> to vector<8x80xf32>
    %cst_16 = arith.constant dense<0.000000e+00> : vector<8x80xf32>
    %17 = tpu.matmul %14, %8, %cst_16 {dimension_numbers = #tpu.dot_dimension_numbers<[1], [0], [0], [1], [0, 0, 1, 1], [], []>} : vector<8x20xf32>, vector<20x80xf32>, vector<8x80xf32> -> vector<8x80xf32>
    %18 = arith.addf %16, %17 : vector<8x80xf32>
    %19 = vector.extract_strided_slice %18 {offsets = [0, 0], sizes = [8, 60], strides = [1, 1]} : vector<8x80xf32> to vector<8x60xf32>
    %20 = arith.negf %19 : vector<8x60xf32>
    %21 = math.exp %20 : vector<8x60xf32>
    %cst_17 = arith.constant 1.000000e+00 : f32
    %22 = vector.broadcast %cst_17 : f32 to vector<8x60xf32>
    %23 = arith.addf %22, %21 : vector<8x60xf32>
    %24 = arith.divf %22, %23 : vector<8x60xf32>
    %25 = vector.extract_strided_slice %18 {offsets = [0, 60], sizes = [8, 20], strides = [1, 1]} : vector<8x80xf32> to vector<8x20xf32>
    %26 = math.tanh %25 : vector<8x20xf32>
    %27 = vector.extract_strided_slice %24 {offsets = [0, 0], sizes = [8, 20], strides = [1, 1]} : vector<8x60xf32> to vector<8x20xf32>
    %28 = vector.extract_strided_slice %24 {offsets = [0, 20], sizes = [8, 20], strides = [1, 1]} : vector<8x60xf32> to vector<8x20xf32>
    %29 = vector.extract_strided_slice %24 {offsets = [0, 40], sizes = [8, 20], strides = [1, 1]} : vector<8x60xf32> to vector<8x20xf32>
    %30 = arith.mulf %28, %15 : vector<8x20xf32>
    %31 = arith.mulf %27, %26 : vector<8x20xf32>
    %32 = arith.addf %30, %31 : vector<8x20xf32>
    %33 = math.tanh %32 : vector<8x20xf32>
    %34 = arith.mulf %29, %33 : vector<8x20xf32>
    %35 = vector.extract_strided_slice %13 {offsets = [8, 0], sizes = [8, 80], strides = [1, 1]} : vector<64x80xf32> to vector<8x80xf32>
    %cst_18 = arith.constant dense<0.000000e+00> : vector<8x80xf32>
    %36 = tpu.matmul %34, %8, %cst_18 {dimension_numbers = #tpu.dot_dimension_numbers<[1], [0], [0], [1], [0, 0, 1, 1], [], []>} : vector<8x20xf32>, vector<20x80xf32>, vector<8x80xf32> -> vector<8x80xf32>
    %37 = arith.addf %35, %36 : vector<8x80xf32>
    %38 = vector.extract_strided_slice %37 {offsets = [0, 0], sizes = [8, 60], strides = [1, 1]} : vector<8x80xf32> to vector<8x60xf32>
    %39 = arith.negf %38 : vector<8x60xf32>
    %40 = math.exp %39 : vector<8x60xf32>
    %cst_19 = arith.constant 1.000000e+00 : f32
    %41 = vector.broadcast %cst_19 : f32 to vector<8x60xf32>
    %42 = arith.addf %41, %40 : vector<8x60xf32>
    %43 = arith.divf %41, %42 : vector<8x60xf32>
    %44 = vector.extract_strided_slice %37 {offsets = [0, 60], sizes = [8, 20], strides = [1, 1]} : vector<8x80xf32> to vector<8x20xf32>
    %45 = math.tanh %44 : vector<8x20xf32>
    %46 = vector.extract_strided_slice %43 {offsets = [0, 0], sizes = [8, 20], strides = [1, 1]} : vector<8x60xf32> to vector<8x20xf32>
    %47 = vector.extract_strided_slice %43 {offsets = [0, 20], sizes = [8, 20], strides = [1, 1]} : vector<8x60xf32> to vector<8x20xf32>
    %48 = vector.extract_strided_slice %43 {offsets = [0, 40], sizes = [8, 20], strides = [1, 1]} : vector<8x60xf32> to vector<8x20xf32>
    %49 = arith.mulf %47, %32 : vector<8x20xf32>
    %50 = arith.mulf %46, %45 : vector<8x20xf32>
    %51 = arith.addf %49, %50 : vector<8x20xf32>
    %52 = math.tanh %51 : vector<8x20xf32>
    %53 = arith.mulf %48, %52 : vector<8x20xf32>
    %54 = vector.extract_strided_slice %13 {offsets = [16, 0], sizes = [8, 80], strides = [1, 1]} : vector<64x80xf32> to vector<8x80xf32>
    %cst_20 = arith.constant dense<0.000000e+00> : vector<8x80xf32>
    %55 = tpu.matmul %53, %8, %cst_20 {dimension_numbers = #tpu.dot_dimension_numbers<[1], [0], [0], [1], [0, 0, 1, 1], [], []>} : vector<8x20xf32>, vector<20x80xf32>, vector<8x80xf32> -> vector<8x80xf32>
    %56 = arith.addf %54, %55 : vector<8x80xf32>
    %57 = vector.extract_strided_slice %56 {offsets = [0, 0], sizes = [8, 60], strides = [1, 1]} : vector<8x80xf32> to vector<8x60xf32>
    %58 = arith.negf %57 : vector<8x60xf32>
    %59 = math.exp %58 : vector<8x60xf32>
    %cst_21 = arith.constant 1.000000e+00 : f32
    %60 = vector.broadcast %cst_21 : f32 to vector<8x60xf32>
    %61 = arith.addf %60, %59 : vector<8x60xf32>
    %62 = arith.divf %60, %61 : vector<8x60xf32>
    %63 = vector.extract_strided_slice %56 {offsets = [0, 60], sizes = [8, 20], strides = [1, 1]} : vector<8x80xf32> to vector<8x20xf32>
    %64 = math.tanh %63 : vector<8x20xf32>
    %65 = vector.extract_strided_slice %62 {offsets = [0, 0], sizes = [8, 20], strides = [1, 1]} : vector<8x60xf32> to vector<8x20xf32>
    %66 = vector.extract_strided_slice %62 {offsets = [0, 20], sizes = [8, 20], strides = [1, 1]} : vector<8x60xf32> to vector<8x20xf32>
    %67 = vector.extract_strided_slice %62 {offsets = [0, 40], sizes = [8, 20], strides = [1, 1]} : vector<8x60xf32> to vector<8x20xf32>
    %68 = arith.mulf %66, %51 : vector<8x20xf32>
    %69 = arith.mulf %65, %64 : vector<8x20xf32>
    %70 = arith.addf %68, %69 : vector<8x20xf32>
    %71 = math.tanh %70 : vector<8x20xf32>
    %72 = arith.mulf %67, %71 : vector<8x20xf32>
    %73 = vector.extract_strided_slice %13 {offsets = [24, 0], sizes = [8, 80], strides = [1, 1]} : vector<64x80xf32> to vector<8x80xf32>
    %cst_22 = arith.constant dense<0.000000e+00> : vector<8x80xf32>
    %74 = tpu.matmul %72, %8, %cst_22 {dimension_numbers = #tpu.dot_dimension_numbers<[1], [0], [0], [1], [0, 0, 1, 1], [], []>} : vector<8x20xf32>, vector<20x80xf32>, vector<8x80xf32> -> vector<8x80xf32>
    %75 = arith.addf %73, %74 : vector<8x80xf32>
    %76 = vector.extract_strided_slice %75 {offsets = [0, 0], sizes = [8, 60], strides = [1, 1]} : vector<8x80xf32> to vector<8x60xf32>
    %77 = arith.negf %76 : vector<8x60xf32>
    %78 = math.exp %77 : vector<8x60xf32>
    %cst_23 = arith.constant 1.000000e+00 : f32
    %79 = vector.broadcast %cst_23 : f32 to vector<8x60xf32>
    %80 = arith.addf %79, %78 : vector<8x60xf32>
    %81 = arith.divf %79, %80 : vector<8x60xf32>
    %82 = vector.extract_strided_slice %75 {offsets = [0, 60], sizes = [8, 20], strides = [1, 1]} : vector<8x80xf32> to vector<8x20xf32>
    %83 = math.tanh %82 : vector<8x20xf32>
    %84 = vector.extract_strided_slice %81 {offsets = [0, 0], sizes = [8, 20], strides = [1, 1]} : vector<8x60xf32> to vector<8x20xf32>
    %85 = vector.extract_strided_slice %81 {offsets = [0, 20], sizes = [8, 20], strides = [1, 1]} : vector<8x60xf32> to vector<8x20xf32>
    %86 = vector.extract_strided_slice %81 {offsets = [0, 40], sizes = [8, 20], strides = [1, 1]} : vector<8x60xf32> to vector<8x20xf32>
    %87 = arith.mulf %85, %70 : vector<8x20xf32>
    %88 = arith.mulf %84, %83 : vector<8x20xf32>
    %89 = arith.addf %87, %88 : vector<8x20xf32>
    %90 = math.tanh %89 : vector<8x20xf32>
    %91 = arith.mulf %86, %90 : vector<8x20xf32>
    %92 = vector.extract_strided_slice %13 {offsets = [32, 0], sizes = [8, 80], strides = [1, 1]} : vector<64x80xf32> to vector<8x80xf32>
    %cst_24 = arith.constant dense<0.000000e+00> : vector<8x80xf32>
    %93 = tpu.matmul %91, %8, %cst_24 {dimension_numbers = #tpu.dot_dimension_numbers<[1], [0], [0], [1], [0, 0, 1, 1], [], []>} : vector<8x20xf32>, vector<20x80xf32>, vector<8x80xf32> -> vector<8x80xf32>
    %94 = arith.addf %92, %93 : vector<8x80xf32>
    %95 = vector.extract_strided_slice %94 {offsets = [0, 0], sizes = [8, 60], strides = [1, 1]} : vector<8x80xf32> to vector<8x60xf32>
    %96 = arith.negf %95 : vector<8x60xf32>
    %97 = math.exp %96 : vector<8x60xf32>
    %cst_25 = arith.constant 1.000000e+00 : f32
    %98 = vector.broadcast %cst_25 : f32 to vector<8x60xf32>
    %99 = arith.addf %98, %97 : vector<8x60xf32>
    %100 = arith.divf %98, %99 : vector<8x60xf32>
    %101 = vector.extract_strided_slice %94 {offsets = [0, 60], sizes = [8, 20], strides = [1, 1]} : vector<8x80xf32> to vector<8x20xf32>
    %102 = math.tanh %101 : vector<8x20xf32>
    %103 = vector.extract_strided_slice %100 {offsets = [0, 0], sizes = [8, 20], strides = [1, 1]} : vector<8x60xf32> to vector<8x20xf32>
    %104 = vector.extract_strided_slice %100 {offsets = [0, 20], sizes = [8, 20], strides = [1, 1]} : vector<8x60xf32> to vector<8x20xf32>
    %105 = vector.extract_strided_slice %100 {offsets = [0, 40], sizes = [8, 20], strides = [1, 1]} : vector<8x60xf32> to vector<8x20xf32>
    %106 = arith.mulf %104, %89 : vector<8x20xf32>
    %107 = arith.mulf %103, %102 : vector<8x20xf32>
    %108 = arith.addf %106, %107 : vector<8x20xf32>
    %109 = math.tanh %108 : vector<8x20xf32>
    %110 = arith.mulf %105, %109 : vector<8x20xf32>
    %111 = vector.extract_strided_slice %13 {offsets = [40, 0], sizes = [8, 80], strides = [1, 1]} : vector<64x80xf32> to vector<8x80xf32>
    %cst_26 = arith.constant dense<0.000000e+00> : vector<8x80xf32>
    %112 = tpu.matmul %110, %8, %cst_26 {dimension_numbers = #tpu.dot_dimension_numbers<[1], [0], [0], [1], [0, 0, 1, 1], [], []>} : vector<8x20xf32>, vector<20x80xf32>, vector<8x80xf32> -> vector<8x80xf32>
    %113 = arith.addf %111, %112 : vector<8x80xf32>
    %114 = vector.extract_strided_slice %113 {offsets = [0, 0], sizes = [8, 60], strides = [1, 1]} : vector<8x80xf32> to vector<8x60xf32>
    %115 = arith.negf %114 : vector<8x60xf32>
    %116 = math.exp %115 : vector<8x60xf32>
    %cst_27 = arith.constant 1.000000e+00 : f32
    %117 = vector.broadcast %cst_27 : f32 to vector<8x60xf32>
    %118 = arith.addf %117, %116 : vector<8x60xf32>
    %119 = arith.divf %117, %118 : vector<8x60xf32>
    %120 = vector.extract_strided_slice %113 {offsets = [0, 60], sizes = [8, 20], strides = [1, 1]} : vector<8x80xf32> to vector<8x20xf32>
    %121 = math.tanh %120 : vector<8x20xf32>
    %122 = vector.extract_strided_slice %119 {offsets = [0, 0], sizes = [8, 20], strides = [1, 1]} : vector<8x60xf32> to vector<8x20xf32>
    %123 = vector.extract_strided_slice %119 {offsets = [0, 20], sizes = [8, 20], strides = [1, 1]} : vector<8x60xf32> to vector<8x20xf32>
    %124 = vector.extract_strided_slice %119 {offsets = [0, 40], sizes = [8, 20], strides = [1, 1]} : vector<8x60xf32> to vector<8x20xf32>
    %125 = arith.mulf %123, %108 : vector<8x20xf32>
    %126 = arith.mulf %122, %121 : vector<8x20xf32>
    %127 = arith.addf %125, %126 : vector<8x20xf32>
    %128 = math.tanh %127 : vector<8x20xf32>
    %129 = arith.mulf %124, %128 : vector<8x20xf32>
    %130 = vector.extract_strided_slice %13 {offsets = [48, 0], sizes = [8, 80], strides = [1, 1]} : vector<64x80xf32> to vector<8x80xf32>
    %cst_28 = arith.constant dense<0.000000e+00> : vector<8x80xf32>
    %131 = tpu.matmul %129, %8, %cst_28 {dimension_numbers = #tpu.dot_dimension_numbers<[1], [0], [0], [1], [0, 0, 1, 1], [], []>} : vector<8x20xf32>, vector<20x80xf32>, vector<8x80xf32> -> vector<8x80xf32>
    %132 = arith.addf %130, %131 : vector<8x80xf32>
    %133 = vector.extract_strided_slice %132 {offsets = [0, 0], sizes = [8, 60], strides = [1, 1]} : vector<8x80xf32> to vector<8x60xf32>
    %134 = arith.negf %133 : vector<8x60xf32>
    %135 = math.exp %134 : vector<8x60xf32>
    %cst_29 = arith.constant 1.000000e+00 : f32
    %136 = vector.broadcast %cst_29 : f32 to vector<8x60xf32>
    %137 = arith.addf %136, %135 : vector<8x60xf32>
    %138 = arith.divf %136, %137 : vector<8x60xf32>
    %139 = vector.extract_strided_slice %132 {offsets = [0, 60], sizes = [8, 20], strides = [1, 1]} : vector<8x80xf32> to vector<8x20xf32>
    %140 = math.tanh %139 : vector<8x20xf32>
    %141 = vector.extract_strided_slice %138 {offsets = [0, 0], sizes = [8, 20], strides = [1, 1]} : vector<8x60xf32> to vector<8x20xf32>
    %142 = vector.extract_strided_slice %138 {offsets = [0, 20], sizes = [8, 20], strides = [1, 1]} : vector<8x60xf32> to vector<8x20xf32>
    %143 = vector.extract_strided_slice %138 {offsets = [0, 40], sizes = [8, 20], strides = [1, 1]} : vector<8x60xf32> to vector<8x20xf32>
    %144 = arith.mulf %142, %127 : vector<8x20xf32>
    %145 = arith.mulf %141, %140 : vector<8x20xf32>
    %146 = arith.addf %144, %145 : vector<8x20xf32>
    %147 = math.tanh %146 : vector<8x20xf32>
    %148 = arith.mulf %143, %147 : vector<8x20xf32>
    %149 = vector.extract_strided_slice %13 {offsets = [56, 0], sizes = [8, 80], strides = [1, 1]} : vector<64x80xf32> to vector<8x80xf32>
    %cst_30 = arith.constant dense<0.000000e+00> : vector<8x80xf32>
    %150 = tpu.matmul %148, %8, %cst_30 {dimension_numbers = #tpu.dot_dimension_numbers<[1], [0], [0], [1], [0, 0, 1, 1], [], []>} : vector<8x20xf32>, vector<20x80xf32>, vector<8x80xf32> -> vector<8x80xf32>
    %151 = arith.addf %149, %150 : vector<8x80xf32>
    %152 = vector.extract_strided_slice %151 {offsets = [0, 0], sizes = [8, 60], strides = [1, 1]} : vector<8x80xf32> to vector<8x60xf32>
    %153 = arith.negf %152 : vector<8x60xf32>
    %154 = math.exp %153 : vector<8x60xf32>
    %cst_31 = arith.constant 1.000000e+00 : f32
    %155 = vector.broadcast %cst_31 : f32 to vector<8x60xf32>
    %156 = arith.addf %155, %154 : vector<8x60xf32>
    %157 = arith.divf %155, %156 : vector<8x60xf32>
    %158 = vector.extract_strided_slice %151 {offsets = [0, 60], sizes = [8, 20], strides = [1, 1]} : vector<8x80xf32> to vector<8x20xf32>
    %159 = math.tanh %158 : vector<8x20xf32>
    %160 = vector.extract_strided_slice %157 {offsets = [0, 0], sizes = [8, 20], strides = [1, 1]} : vector<8x60xf32> to vector<8x20xf32>
    %161 = vector.extract_strided_slice %157 {offsets = [0, 20], sizes = [8, 20], strides = [1, 1]} : vector<8x60xf32> to vector<8x20xf32>
    %162 = vector.extract_strided_slice %157 {offsets = [0, 40], sizes = [8, 20], strides = [1, 1]} : vector<8x60xf32> to vector<8x20xf32>
    %163 = arith.mulf %161, %146 : vector<8x20xf32>
    %164 = arith.mulf %160, %159 : vector<8x20xf32>
    %165 = arith.addf %163, %164 : vector<8x20xf32>
    %166 = math.tanh %165 : vector<8x20xf32>
    %167 = arith.mulf %162, %166 : vector<8x20xf32>
    %168 = tpu.concatenate %34, %53, %72, %91, %110, %129, %148, %167 in 0 : vector<8x20xf32>, vector<8x20xf32>, vector<8x20xf32>, vector<8x20xf32>, vector<8x20xf32>, vector<8x20xf32>, vector<8x20xf32>, vector<8x20xf32> -> vector<64x20xf32>
    %c1 = arith.constant 1 : index
    %c0_32 = arith.constant 0 : index
    %c0_33 = arith.constant 0 : index
    %169 = vector.load %arg2[%c1, %c0_32, %c0_33] : memref<4x20x80xf32, #tpu.memory_space<vmem>>, vector<1x20x80xf32>
    %170 = vector.shape_cast %169 : vector<1x20x80xf32> to vector<20x80xf32>
    %c1_34 = arith.constant 1 : index
    %c0_35 = arith.constant 0 : index
    %c0_36 = arith.constant 0 : index
    %171 = vector.load %arg3[%c1_34, %c0_35, %c0_36] : memref<4x20x80xf32, #tpu.memory_space<vmem>>, vector<1x20x80xf32>
    %172 = vector.shape_cast %171 : vector<1x20x80xf32> to vector<20x80xf32>
    %c1_37 = arith.constant 1 : index
    %c0_38 = arith.constant 0 : index
    %c0_39 = arith.constant 0 : index
    %173 = vector.load %arg4[%c1_37, %c0_38, %c0_39] : memref<4x1x80xf32, #tpu.memory_space<vmem>>, vector<1x1x80xf32>
    %174 = vector.shape_cast %173 : vector<1x1x80xf32> to vector<1x80xf32>
    %cst_40 = arith.constant dense<0.000000e+00> : vector<64x80xf32>
    %175 = tpu.matmul %168, %170, %cst_40 {dimension_numbers = #tpu.dot_dimension_numbers<[1], [0], [0], [1], [0, 0, 1, 1], [], []>} : vector<64x20xf32>, vector<20x80xf32>, vector<64x80xf32> -> vector<64x80xf32>
    %176 = vector.broadcast %174 : vector<1x80xf32> to vector<64x80xf32>
    %177 = arith.addf %175, %176 : vector<64x80xf32>
    %cst_41 = arith.constant 0.000000e+00 : f32
    %178 = vector.broadcast %cst_41 : f32 to vector<8x20xf32>
    %cst_42 = arith.constant 0.000000e+00 : f32
    %179 = vector.broadcast %cst_42 : f32 to vector<8x20xf32>
    %180 = vector.extract_strided_slice %177 {offsets = [0, 0], sizes = [8, 80], strides = [1, 1]} : vector<64x80xf32> to vector<8x80xf32>
    %cst_43 = arith.constant dense<0.000000e+00> : vector<8x80xf32>
    %181 = tpu.matmul %178, %172, %cst_43 {dimension_numbers = #tpu.dot_dimension_numbers<[1], [0], [0], [1], [0, 0, 1, 1], [], []>} : vector<8x20xf32>, vector<20x80xf32>, vector<8x80xf32> -> vector<8x80xf32>
    %182 = arith.addf %180, %181 : vector<8x80xf32>
    %183 = vector.extract_strided_slice %182 {offsets = [0, 0], sizes = [8, 60], strides = [1, 1]} : vector<8x80xf32> to vector<8x60xf32>
    %184 = arith.negf %183 : vector<8x60xf32>
    %185 = math.exp %184 : vector<8x60xf32>
    %cst_44 = arith.constant 1.000000e+00 : f32
    %186 = vector.broadcast %cst_44 : f32 to vector<8x60xf32>
    %187 = arith.addf %186, %185 : vector<8x60xf32>
    %188 = arith.divf %186, %187 : vector<8x60xf32>
    %189 = vector.extract_strided_slice %182 {offsets = [0, 60], sizes = [8, 20], strides = [1, 1]} : vector<8x80xf32> to vector<8x20xf32>
    %190 = math.tanh %189 : vector<8x20xf32>
    %191 = vector.extract_strided_slice %188 {offsets = [0, 0], sizes = [8, 20], strides = [1, 1]} : vector<8x60xf32> to vector<8x20xf32>
    %192 = vector.extract_strided_slice %188 {offsets = [0, 20], sizes = [8, 20], strides = [1, 1]} : vector<8x60xf32> to vector<8x20xf32>
    %193 = vector.extract_strided_slice %188 {offsets = [0, 40], sizes = [8, 20], strides = [1, 1]} : vector<8x60xf32> to vector<8x20xf32>
    %194 = arith.mulf %192, %179 : vector<8x20xf32>
    %195 = arith.mulf %191, %190 : vector<8x20xf32>
    %196 = arith.addf %194, %195 : vector<8x20xf32>
    %197 = math.tanh %196 : vector<8x20xf32>
    %198 = arith.mulf %193, %197 : vector<8x20xf32>
    %199 = vector.extract_strided_slice %177 {offsets = [8, 0], sizes = [8, 80], strides = [1, 1]} : vector<64x80xf32> to vector<8x80xf32>
    %cst_45 = arith.constant dense<0.000000e+00> : vector<8x80xf32>
    %200 = tpu.matmul %198, %172, %cst_45 {dimension_numbers = #tpu.dot_dimension_numbers<[1], [0], [0], [1], [0, 0, 1, 1], [], []>} : vector<8x20xf32>, vector<20x80xf32>, vector<8x80xf32> -> vector<8x80xf32>
    %201 = arith.addf %199, %200 : vector<8x80xf32>
    %202 = vector.extract_strided_slice %201 {offsets = [0, 0], sizes = [8, 60], strides = [1, 1]} : vector<8x80xf32> to vector<8x60xf32>
    %203 = arith.negf %202 : vector<8x60xf32>
    %204 = math.exp %203 : vector<8x60xf32>
    %cst_46 = arith.constant 1.000000e+00 : f32
    %205 = vector.broadcast %cst_46 : f32 to vector<8x60xf32>
    %206 = arith.addf %205, %204 : vector<8x60xf32>
    %207 = arith.divf %205, %206 : vector<8x60xf32>
    %208 = vector.extract_strided_slice %201 {offsets = [0, 60], sizes = [8, 20], strides = [1, 1]} : vector<8x80xf32> to vector<8x20xf32>
    %209 = math.tanh %208 : vector<8x20xf32>
    %210 = vector.extract_strided_slice %207 {offsets = [0, 0], sizes = [8, 20], strides = [1, 1]} : vector<8x60xf32> to vector<8x20xf32>
    %211 = vector.extract_strided_slice %207 {offsets = [0, 20], sizes = [8, 20], strides = [1, 1]} : vector<8x60xf32> to vector<8x20xf32>
    %212 = vector.extract_strided_slice %207 {offsets = [0, 40], sizes = [8, 20], strides = [1, 1]} : vector<8x60xf32> to vector<8x20xf32>
    %213 = arith.mulf %211, %196 : vector<8x20xf32>
    %214 = arith.mulf %210, %209 : vector<8x20xf32>
    %215 = arith.addf %213, %214 : vector<8x20xf32>
    %216 = math.tanh %215 : vector<8x20xf32>
    %217 = arith.mulf %212, %216 : vector<8x20xf32>
    %218 = vector.extract_strided_slice %177 {offsets = [16, 0], sizes = [8, 80], strides = [1, 1]} : vector<64x80xf32> to vector<8x80xf32>
    %cst_47 = arith.constant dense<0.000000e+00> : vector<8x80xf32>
    %219 = tpu.matmul %217, %172, %cst_47 {dimension_numbers = #tpu.dot_dimension_numbers<[1], [0], [0], [1], [0, 0, 1, 1], [], []>} : vector<8x20xf32>, vector<20x80xf32>, vector<8x80xf32> -> vector<8x80xf32>
    %220 = arith.addf %218, %219 : vector<8x80xf32>
    %221 = vector.extract_strided_slice %220 {offsets = [0, 0], sizes = [8, 60], strides = [1, 1]} : vector<8x80xf32> to vector<8x60xf32>
    %222 = arith.negf %221 : vector<8x60xf32>
    %223 = math.exp %222 : vector<8x60xf32>
    %cst_48 = arith.constant 1.000000e+00 : f32
    %224 = vector.broadcast %cst_48 : f32 to vector<8x60xf32>
    %225 = arith.addf %224, %223 : vector<8x60xf32>
    %226 = arith.divf %224, %225 : vector<8x60xf32>
    %227 = vector.extract_strided_slice %220 {offsets = [0, 60], sizes = [8, 20], strides = [1, 1]} : vector<8x80xf32> to vector<8x20xf32>
    %228 = math.tanh %227 : vector<8x20xf32>
    %229 = vector.extract_strided_slice %226 {offsets = [0, 0], sizes = [8, 20], strides = [1, 1]} : vector<8x60xf32> to vector<8x20xf32>
    %230 = vector.extract_strided_slice %226 {offsets = [0, 20], sizes = [8, 20], strides = [1, 1]} : vector<8x60xf32> to vector<8x20xf32>
    %231 = vector.extract_strided_slice %226 {offsets = [0, 40], sizes = [8, 20], strides = [1, 1]} : vector<8x60xf32> to vector<8x20xf32>
    %232 = arith.mulf %230, %215 : vector<8x20xf32>
    %233 = arith.mulf %229, %228 : vector<8x20xf32>
    %234 = arith.addf %232, %233 : vector<8x20xf32>
    %235 = math.tanh %234 : vector<8x20xf32>
    %236 = arith.mulf %231, %235 : vector<8x20xf32>
    %237 = vector.extract_strided_slice %177 {offsets = [24, 0], sizes = [8, 80], strides = [1, 1]} : vector<64x80xf32> to vector<8x80xf32>
    %cst_49 = arith.constant dense<0.000000e+00> : vector<8x80xf32>
    %238 = tpu.matmul %236, %172, %cst_49 {dimension_numbers = #tpu.dot_dimension_numbers<[1], [0], [0], [1], [0, 0, 1, 1], [], []>} : vector<8x20xf32>, vector<20x80xf32>, vector<8x80xf32> -> vector<8x80xf32>
    %239 = arith.addf %237, %238 : vector<8x80xf32>
    %240 = vector.extract_strided_slice %239 {offsets = [0, 0], sizes = [8, 60], strides = [1, 1]} : vector<8x80xf32> to vector<8x60xf32>
    %241 = arith.negf %240 : vector<8x60xf32>
    %242 = math.exp %241 : vector<8x60xf32>
    %cst_50 = arith.constant 1.000000e+00 : f32
    %243 = vector.broadcast %cst_50 : f32 to vector<8x60xf32>
    %244 = arith.addf %243, %242 : vector<8x60xf32>
    %245 = arith.divf %243, %244 : vector<8x60xf32>
    %246 = vector.extract_strided_slice %239 {offsets = [0, 60], sizes = [8, 20], strides = [1, 1]} : vector<8x80xf32> to vector<8x20xf32>
    %247 = math.tanh %246 : vector<8x20xf32>
    %248 = vector.extract_strided_slice %245 {offsets = [0, 0], sizes = [8, 20], strides = [1, 1]} : vector<8x60xf32> to vector<8x20xf32>
    %249 = vector.extract_strided_slice %245 {offsets = [0, 20], sizes = [8, 20], strides = [1, 1]} : vector<8x60xf32> to vector<8x20xf32>
    %250 = vector.extract_strided_slice %245 {offsets = [0, 40], sizes = [8, 20], strides = [1, 1]} : vector<8x60xf32> to vector<8x20xf32>
    %251 = arith.mulf %249, %234 : vector<8x20xf32>
    %252 = arith.mulf %248, %247 : vector<8x20xf32>
    %253 = arith.addf %251, %252 : vector<8x20xf32>
    %254 = math.tanh %253 : vector<8x20xf32>
    %255 = arith.mulf %250, %254 : vector<8x20xf32>
    %256 = vector.extract_strided_slice %177 {offsets = [32, 0], sizes = [8, 80], strides = [1, 1]} : vector<64x80xf32> to vector<8x80xf32>
    %cst_51 = arith.constant dense<0.000000e+00> : vector<8x80xf32>
    %257 = tpu.matmul %255, %172, %cst_51 {dimension_numbers = #tpu.dot_dimension_numbers<[1], [0], [0], [1], [0, 0, 1, 1], [], []>} : vector<8x20xf32>, vector<20x80xf32>, vector<8x80xf32> -> vector<8x80xf32>
    %258 = arith.addf %256, %257 : vector<8x80xf32>
    %259 = vector.extract_strided_slice %258 {offsets = [0, 0], sizes = [8, 60], strides = [1, 1]} : vector<8x80xf32> to vector<8x60xf32>
    %260 = arith.negf %259 : vector<8x60xf32>
    %261 = math.exp %260 : vector<8x60xf32>
    %cst_52 = arith.constant 1.000000e+00 : f32
    %262 = vector.broadcast %cst_52 : f32 to vector<8x60xf32>
    %263 = arith.addf %262, %261 : vector<8x60xf32>
    %264 = arith.divf %262, %263 : vector<8x60xf32>
    %265 = vector.extract_strided_slice %258 {offsets = [0, 60], sizes = [8, 20], strides = [1, 1]} : vector<8x80xf32> to vector<8x20xf32>
    %266 = math.tanh %265 : vector<8x20xf32>
    %267 = vector.extract_strided_slice %264 {offsets = [0, 0], sizes = [8, 20], strides = [1, 1]} : vector<8x60xf32> to vector<8x20xf32>
    %268 = vector.extract_strided_slice %264 {offsets = [0, 20], sizes = [8, 20], strides = [1, 1]} : vector<8x60xf32> to vector<8x20xf32>
    %269 = vector.extract_strided_slice %264 {offsets = [0, 40], sizes = [8, 20], strides = [1, 1]} : vector<8x60xf32> to vector<8x20xf32>
    %270 = arith.mulf %268, %253 : vector<8x20xf32>
    %271 = arith.mulf %267, %266 : vector<8x20xf32>
    %272 = arith.addf %270, %271 : vector<8x20xf32>
    %273 = math.tanh %272 : vector<8x20xf32>
    %274 = arith.mulf %269, %273 : vector<8x20xf32>
    %275 = vector.extract_strided_slice %177 {offsets = [40, 0], sizes = [8, 80], strides = [1, 1]} : vector<64x80xf32> to vector<8x80xf32>
    %cst_53 = arith.constant dense<0.000000e+00> : vector<8x80xf32>
    %276 = tpu.matmul %274, %172, %cst_53 {dimension_numbers = #tpu.dot_dimension_numbers<[1], [0], [0], [1], [0, 0, 1, 1], [], []>} : vector<8x20xf32>, vector<20x80xf32>, vector<8x80xf32> -> vector<8x80xf32>
    %277 = arith.addf %275, %276 : vector<8x80xf32>
    %278 = vector.extract_strided_slice %277 {offsets = [0, 0], sizes = [8, 60], strides = [1, 1]} : vector<8x80xf32> to vector<8x60xf32>
    %279 = arith.negf %278 : vector<8x60xf32>
    %280 = math.exp %279 : vector<8x60xf32>
    %cst_54 = arith.constant 1.000000e+00 : f32
    %281 = vector.broadcast %cst_54 : f32 to vector<8x60xf32>
    %282 = arith.addf %281, %280 : vector<8x60xf32>
    %283 = arith.divf %281, %282 : vector<8x60xf32>
    %284 = vector.extract_strided_slice %277 {offsets = [0, 60], sizes = [8, 20], strides = [1, 1]} : vector<8x80xf32> to vector<8x20xf32>
    %285 = math.tanh %284 : vector<8x20xf32>
    %286 = vector.extract_strided_slice %283 {offsets = [0, 0], sizes = [8, 20], strides = [1, 1]} : vector<8x60xf32> to vector<8x20xf32>
    %287 = vector.extract_strided_slice %283 {offsets = [0, 20], sizes = [8, 20], strides = [1, 1]} : vector<8x60xf32> to vector<8x20xf32>
    %288 = vector.extract_strided_slice %283 {offsets = [0, 40], sizes = [8, 20], strides = [1, 1]} : vector<8x60xf32> to vector<8x20xf32>
    %289 = arith.mulf %287, %272 : vector<8x20xf32>
    %290 = arith.mulf %286, %285 : vector<8x20xf32>
    %291 = arith.addf %289, %290 : vector<8x20xf32>
    %292 = math.tanh %291 : vector<8x20xf32>
    %293 = arith.mulf %288, %292 : vector<8x20xf32>
    %294 = vector.extract_strided_slice %177 {offsets = [48, 0], sizes = [8, 80], strides = [1, 1]} : vector<64x80xf32> to vector<8x80xf32>
    %cst_55 = arith.constant dense<0.000000e+00> : vector<8x80xf32>
    %295 = tpu.matmul %293, %172, %cst_55 {dimension_numbers = #tpu.dot_dimension_numbers<[1], [0], [0], [1], [0, 0, 1, 1], [], []>} : vector<8x20xf32>, vector<20x80xf32>, vector<8x80xf32> -> vector<8x80xf32>
    %296 = arith.addf %294, %295 : vector<8x80xf32>
    %297 = vector.extract_strided_slice %296 {offsets = [0, 0], sizes = [8, 60], strides = [1, 1]} : vector<8x80xf32> to vector<8x60xf32>
    %298 = arith.negf %297 : vector<8x60xf32>
    %299 = math.exp %298 : vector<8x60xf32>
    %cst_56 = arith.constant 1.000000e+00 : f32
    %300 = vector.broadcast %cst_56 : f32 to vector<8x60xf32>
    %301 = arith.addf %300, %299 : vector<8x60xf32>
    %302 = arith.divf %300, %301 : vector<8x60xf32>
    %303 = vector.extract_strided_slice %296 {offsets = [0, 60], sizes = [8, 20], strides = [1, 1]} : vector<8x80xf32> to vector<8x20xf32>
    %304 = math.tanh %303 : vector<8x20xf32>
    %305 = vector.extract_strided_slice %302 {offsets = [0, 0], sizes = [8, 20], strides = [1, 1]} : vector<8x60xf32> to vector<8x20xf32>
    %306 = vector.extract_strided_slice %302 {offsets = [0, 20], sizes = [8, 20], strides = [1, 1]} : vector<8x60xf32> to vector<8x20xf32>
    %307 = vector.extract_strided_slice %302 {offsets = [0, 40], sizes = [8, 20], strides = [1, 1]} : vector<8x60xf32> to vector<8x20xf32>
    %308 = arith.mulf %306, %291 : vector<8x20xf32>
    %309 = arith.mulf %305, %304 : vector<8x20xf32>
    %310 = arith.addf %308, %309 : vector<8x20xf32>
    %311 = math.tanh %310 : vector<8x20xf32>
    %312 = arith.mulf %307, %311 : vector<8x20xf32>
    %313 = vector.extract_strided_slice %177 {offsets = [56, 0], sizes = [8, 80], strides = [1, 1]} : vector<64x80xf32> to vector<8x80xf32>
    %cst_57 = arith.constant dense<0.000000e+00> : vector<8x80xf32>
    %314 = tpu.matmul %312, %172, %cst_57 {dimension_numbers = #tpu.dot_dimension_numbers<[1], [0], [0], [1], [0, 0, 1, 1], [], []>} : vector<8x20xf32>, vector<20x80xf32>, vector<8x80xf32> -> vector<8x80xf32>
    %315 = arith.addf %313, %314 : vector<8x80xf32>
    %316 = vector.extract_strided_slice %315 {offsets = [0, 0], sizes = [8, 60], strides = [1, 1]} : vector<8x80xf32> to vector<8x60xf32>
    %317 = arith.negf %316 : vector<8x60xf32>
    %318 = math.exp %317 : vector<8x60xf32>
    %cst_58 = arith.constant 1.000000e+00 : f32
    %319 = vector.broadcast %cst_58 : f32 to vector<8x60xf32>
    %320 = arith.addf %319, %318 : vector<8x60xf32>
    %321 = arith.divf %319, %320 : vector<8x60xf32>
    %322 = vector.extract_strided_slice %315 {offsets = [0, 60], sizes = [8, 20], strides = [1, 1]} : vector<8x80xf32> to vector<8x20xf32>
    %323 = math.tanh %322 : vector<8x20xf32>
    %324 = vector.extract_strided_slice %321 {offsets = [0, 0], sizes = [8, 20], strides = [1, 1]} : vector<8x60xf32> to vector<8x20xf32>
    %325 = vector.extract_strided_slice %321 {offsets = [0, 20], sizes = [8, 20], strides = [1, 1]} : vector<8x60xf32> to vector<8x20xf32>
    %326 = vector.extract_strided_slice %321 {offsets = [0, 40], sizes = [8, 20], strides = [1, 1]} : vector<8x60xf32> to vector<8x20xf32>
    %327 = arith.mulf %325, %310 : vector<8x20xf32>
    %328 = arith.mulf %324, %323 : vector<8x20xf32>
    %329 = arith.addf %327, %328 : vector<8x20xf32>
    %330 = math.tanh %329 : vector<8x20xf32>
    %331 = arith.mulf %326, %330 : vector<8x20xf32>
    %332 = tpu.concatenate %198, %217, %236, %255, %274, %293, %312, %331 in 0 : vector<8x20xf32>, vector<8x20xf32>, vector<8x20xf32>, vector<8x20xf32>, vector<8x20xf32>, vector<8x20xf32>, vector<8x20xf32>, vector<8x20xf32> -> vector<64x20xf32>
    %c2 = arith.constant 2 : index
    %c0_59 = arith.constant 0 : index
    %c0_60 = arith.constant 0 : index
    %333 = vector.load %arg2[%c2, %c0_59, %c0_60] : memref<4x20x80xf32, #tpu.memory_space<vmem>>, vector<1x20x80xf32>
    %334 = vector.shape_cast %333 : vector<1x20x80xf32> to vector<20x80xf32>
    %c2_61 = arith.constant 2 : index
    %c0_62 = arith.constant 0 : index
    %c0_63 = arith.constant 0 : index
    %335 = vector.load %arg3[%c2_61, %c0_62, %c0_63] : memref<4x20x80xf32, #tpu.memory_space<vmem>>, vector<1x20x80xf32>
    %336 = vector.shape_cast %335 : vector<1x20x80xf32> to vector<20x80xf32>
    %c2_64 = arith.constant 2 : index
    %c0_65 = arith.constant 0 : index
    %c0_66 = arith.constant 0 : index
    %337 = vector.load %arg4[%c2_64, %c0_65, %c0_66] : memref<4x1x80xf32, #tpu.memory_space<vmem>>, vector<1x1x80xf32>
    %338 = vector.shape_cast %337 : vector<1x1x80xf32> to vector<1x80xf32>
    %cst_67 = arith.constant dense<0.000000e+00> : vector<64x80xf32>
    %339 = tpu.matmul %332, %334, %cst_67 {dimension_numbers = #tpu.dot_dimension_numbers<[1], [0], [0], [1], [0, 0, 1, 1], [], []>} : vector<64x20xf32>, vector<20x80xf32>, vector<64x80xf32> -> vector<64x80xf32>
    %340 = vector.broadcast %338 : vector<1x80xf32> to vector<64x80xf32>
    %341 = arith.addf %339, %340 : vector<64x80xf32>
    %cst_68 = arith.constant 0.000000e+00 : f32
    %342 = vector.broadcast %cst_68 : f32 to vector<8x20xf32>
    %cst_69 = arith.constant 0.000000e+00 : f32
    %343 = vector.broadcast %cst_69 : f32 to vector<8x20xf32>
    %344 = vector.extract_strided_slice %341 {offsets = [0, 0], sizes = [8, 80], strides = [1, 1]} : vector<64x80xf32> to vector<8x80xf32>
    %cst_70 = arith.constant dense<0.000000e+00> : vector<8x80xf32>
    %345 = tpu.matmul %342, %336, %cst_70 {dimension_numbers = #tpu.dot_dimension_numbers<[1], [0], [0], [1], [0, 0, 1, 1], [], []>} : vector<8x20xf32>, vector<20x80xf32>, vector<8x80xf32> -> vector<8x80xf32>
    %346 = arith.addf %344, %345 : vector<8x80xf32>
    %347 = vector.extract_strided_slice %346 {offsets = [0, 0], sizes = [8, 60], strides = [1, 1]} : vector<8x80xf32> to vector<8x60xf32>
    %348 = arith.negf %347 : vector<8x60xf32>
    %349 = math.exp %348 : vector<8x60xf32>
    %cst_71 = arith.constant 1.000000e+00 : f32
    %350 = vector.broadcast %cst_71 : f32 to vector<8x60xf32>
    %351 = arith.addf %350, %349 : vector<8x60xf32>
    %352 = arith.divf %350, %351 : vector<8x60xf32>
    %353 = vector.extract_strided_slice %346 {offsets = [0, 60], sizes = [8, 20], strides = [1, 1]} : vector<8x80xf32> to vector<8x20xf32>
    %354 = math.tanh %353 : vector<8x20xf32>
    %355 = vector.extract_strided_slice %352 {offsets = [0, 0], sizes = [8, 20], strides = [1, 1]} : vector<8x60xf32> to vector<8x20xf32>
    %356 = vector.extract_strided_slice %352 {offsets = [0, 20], sizes = [8, 20], strides = [1, 1]} : vector<8x60xf32> to vector<8x20xf32>
    %357 = vector.extract_strided_slice %352 {offsets = [0, 40], sizes = [8, 20], strides = [1, 1]} : vector<8x60xf32> to vector<8x20xf32>
    %358 = arith.mulf %356, %343 : vector<8x20xf32>
    %359 = arith.mulf %355, %354 : vector<8x20xf32>
    %360 = arith.addf %358, %359 : vector<8x20xf32>
    %361 = math.tanh %360 : vector<8x20xf32>
    %362 = arith.mulf %357, %361 : vector<8x20xf32>
    %363 = vector.extract_strided_slice %341 {offsets = [8, 0], sizes = [8, 80], strides = [1, 1]} : vector<64x80xf32> to vector<8x80xf32>
    %cst_72 = arith.constant dense<0.000000e+00> : vector<8x80xf32>
    %364 = tpu.matmul %362, %336, %cst_72 {dimension_numbers = #tpu.dot_dimension_numbers<[1], [0], [0], [1], [0, 0, 1, 1], [], []>} : vector<8x20xf32>, vector<20x80xf32>, vector<8x80xf32> -> vector<8x80xf32>
    %365 = arith.addf %363, %364 : vector<8x80xf32>
    %366 = vector.extract_strided_slice %365 {offsets = [0, 0], sizes = [8, 60], strides = [1, 1]} : vector<8x80xf32> to vector<8x60xf32>
    %367 = arith.negf %366 : vector<8x60xf32>
    %368 = math.exp %367 : vector<8x60xf32>
    %cst_73 = arith.constant 1.000000e+00 : f32
    %369 = vector.broadcast %cst_73 : f32 to vector<8x60xf32>
    %370 = arith.addf %369, %368 : vector<8x60xf32>
    %371 = arith.divf %369, %370 : vector<8x60xf32>
    %372 = vector.extract_strided_slice %365 {offsets = [0, 60], sizes = [8, 20], strides = [1, 1]} : vector<8x80xf32> to vector<8x20xf32>
    %373 = math.tanh %372 : vector<8x20xf32>
    %374 = vector.extract_strided_slice %371 {offsets = [0, 0], sizes = [8, 20], strides = [1, 1]} : vector<8x60xf32> to vector<8x20xf32>
    %375 = vector.extract_strided_slice %371 {offsets = [0, 20], sizes = [8, 20], strides = [1, 1]} : vector<8x60xf32> to vector<8x20xf32>
    %376 = vector.extract_strided_slice %371 {offsets = [0, 40], sizes = [8, 20], strides = [1, 1]} : vector<8x60xf32> to vector<8x20xf32>
    %377 = arith.mulf %375, %360 : vector<8x20xf32>
    %378 = arith.mulf %374, %373 : vector<8x20xf32>
    %379 = arith.addf %377, %378 : vector<8x20xf32>
    %380 = math.tanh %379 : vector<8x20xf32>
    %381 = arith.mulf %376, %380 : vector<8x20xf32>
    %382 = vector.extract_strided_slice %341 {offsets = [16, 0], sizes = [8, 80], strides = [1, 1]} : vector<64x80xf32> to vector<8x80xf32>
    %cst_74 = arith.constant dense<0.000000e+00> : vector<8x80xf32>
    %383 = tpu.matmul %381, %336, %cst_74 {dimension_numbers = #tpu.dot_dimension_numbers<[1], [0], [0], [1], [0, 0, 1, 1], [], []>} : vector<8x20xf32>, vector<20x80xf32>, vector<8x80xf32> -> vector<8x80xf32>
    %384 = arith.addf %382, %383 : vector<8x80xf32>
    %385 = vector.extract_strided_slice %384 {offsets = [0, 0], sizes = [8, 60], strides = [1, 1]} : vector<8x80xf32> to vector<8x60xf32>
    %386 = arith.negf %385 : vector<8x60xf32>
    %387 = math.exp %386 : vector<8x60xf32>
    %cst_75 = arith.constant 1.000000e+00 : f32
    %388 = vector.broadcast %cst_75 : f32 to vector<8x60xf32>
    %389 = arith.addf %388, %387 : vector<8x60xf32>
    %390 = arith.divf %388, %389 : vector<8x60xf32>
    %391 = vector.extract_strided_slice %384 {offsets = [0, 60], sizes = [8, 20], strides = [1, 1]} : vector<8x80xf32> to vector<8x20xf32>
    %392 = math.tanh %391 : vector<8x20xf32>
    %393 = vector.extract_strided_slice %390 {offsets = [0, 0], sizes = [8, 20], strides = [1, 1]} : vector<8x60xf32> to vector<8x20xf32>
    %394 = vector.extract_strided_slice %390 {offsets = [0, 20], sizes = [8, 20], strides = [1, 1]} : vector<8x60xf32> to vector<8x20xf32>
    %395 = vector.extract_strided_slice %390 {offsets = [0, 40], sizes = [8, 20], strides = [1, 1]} : vector<8x60xf32> to vector<8x20xf32>
    %396 = arith.mulf %394, %379 : vector<8x20xf32>
    %397 = arith.mulf %393, %392 : vector<8x20xf32>
    %398 = arith.addf %396, %397 : vector<8x20xf32>
    %399 = math.tanh %398 : vector<8x20xf32>
    %400 = arith.mulf %395, %399 : vector<8x20xf32>
    %401 = vector.extract_strided_slice %341 {offsets = [24, 0], sizes = [8, 80], strides = [1, 1]} : vector<64x80xf32> to vector<8x80xf32>
    %cst_76 = arith.constant dense<0.000000e+00> : vector<8x80xf32>
    %402 = tpu.matmul %400, %336, %cst_76 {dimension_numbers = #tpu.dot_dimension_numbers<[1], [0], [0], [1], [0, 0, 1, 1], [], []>} : vector<8x20xf32>, vector<20x80xf32>, vector<8x80xf32> -> vector<8x80xf32>
    %403 = arith.addf %401, %402 : vector<8x80xf32>
    %404 = vector.extract_strided_slice %403 {offsets = [0, 0], sizes = [8, 60], strides = [1, 1]} : vector<8x80xf32> to vector<8x60xf32>
    %405 = arith.negf %404 : vector<8x60xf32>
    %406 = math.exp %405 : vector<8x60xf32>
    %cst_77 = arith.constant 1.000000e+00 : f32
    %407 = vector.broadcast %cst_77 : f32 to vector<8x60xf32>
    %408 = arith.addf %407, %406 : vector<8x60xf32>
    %409 = arith.divf %407, %408 : vector<8x60xf32>
    %410 = vector.extract_strided_slice %403 {offsets = [0, 60], sizes = [8, 20], strides = [1, 1]} : vector<8x80xf32> to vector<8x20xf32>
    %411 = math.tanh %410 : vector<8x20xf32>
    %412 = vector.extract_strided_slice %409 {offsets = [0, 0], sizes = [8, 20], strides = [1, 1]} : vector<8x60xf32> to vector<8x20xf32>
    %413 = vector.extract_strided_slice %409 {offsets = [0, 20], sizes = [8, 20], strides = [1, 1]} : vector<8x60xf32> to vector<8x20xf32>
    %414 = vector.extract_strided_slice %409 {offsets = [0, 40], sizes = [8, 20], strides = [1, 1]} : vector<8x60xf32> to vector<8x20xf32>
    %415 = arith.mulf %413, %398 : vector<8x20xf32>
    %416 = arith.mulf %412, %411 : vector<8x20xf32>
    %417 = arith.addf %415, %416 : vector<8x20xf32>
    %418 = math.tanh %417 : vector<8x20xf32>
    %419 = arith.mulf %414, %418 : vector<8x20xf32>
    %420 = vector.extract_strided_slice %341 {offsets = [32, 0], sizes = [8, 80], strides = [1, 1]} : vector<64x80xf32> to vector<8x80xf32>
    %cst_78 = arith.constant dense<0.000000e+00> : vector<8x80xf32>
    %421 = tpu.matmul %419, %336, %cst_78 {dimension_numbers = #tpu.dot_dimension_numbers<[1], [0], [0], [1], [0, 0, 1, 1], [], []>} : vector<8x20xf32>, vector<20x80xf32>, vector<8x80xf32> -> vector<8x80xf32>
    %422 = arith.addf %420, %421 : vector<8x80xf32>
    %423 = vector.extract_strided_slice %422 {offsets = [0, 0], sizes = [8, 60], strides = [1, 1]} : vector<8x80xf32> to vector<8x60xf32>
    %424 = arith.negf %423 : vector<8x60xf32>
    %425 = math.exp %424 : vector<8x60xf32>
    %cst_79 = arith.constant 1.000000e+00 : f32
    %426 = vector.broadcast %cst_79 : f32 to vector<8x60xf32>
    %427 = arith.addf %426, %425 : vector<8x60xf32>
    %428 = arith.divf %426, %427 : vector<8x60xf32>
    %429 = vector.extract_strided_slice %422 {offsets = [0, 60], sizes = [8, 20], strides = [1, 1]} : vector<8x80xf32> to vector<8x20xf32>
    %430 = math.tanh %429 : vector<8x20xf32>
    %431 = vector.extract_strided_slice %428 {offsets = [0, 0], sizes = [8, 20], strides = [1, 1]} : vector<8x60xf32> to vector<8x20xf32>
    %432 = vector.extract_strided_slice %428 {offsets = [0, 20], sizes = [8, 20], strides = [1, 1]} : vector<8x60xf32> to vector<8x20xf32>
    %433 = vector.extract_strided_slice %428 {offsets = [0, 40], sizes = [8, 20], strides = [1, 1]} : vector<8x60xf32> to vector<8x20xf32>
    %434 = arith.mulf %432, %417 : vector<8x20xf32>
    %435 = arith.mulf %431, %430 : vector<8x20xf32>
    %436 = arith.addf %434, %435 : vector<8x20xf32>
    %437 = math.tanh %436 : vector<8x20xf32>
    %438 = arith.mulf %433, %437 : vector<8x20xf32>
    %439 = vector.extract_strided_slice %341 {offsets = [40, 0], sizes = [8, 80], strides = [1, 1]} : vector<64x80xf32> to vector<8x80xf32>
    %cst_80 = arith.constant dense<0.000000e+00> : vector<8x80xf32>
    %440 = tpu.matmul %438, %336, %cst_80 {dimension_numbers = #tpu.dot_dimension_numbers<[1], [0], [0], [1], [0, 0, 1, 1], [], []>} : vector<8x20xf32>, vector<20x80xf32>, vector<8x80xf32> -> vector<8x80xf32>
    %441 = arith.addf %439, %440 : vector<8x80xf32>
    %442 = vector.extract_strided_slice %441 {offsets = [0, 0], sizes = [8, 60], strides = [1, 1]} : vector<8x80xf32> to vector<8x60xf32>
    %443 = arith.negf %442 : vector<8x60xf32>
    %444 = math.exp %443 : vector<8x60xf32>
    %cst_81 = arith.constant 1.000000e+00 : f32
    %445 = vector.broadcast %cst_81 : f32 to vector<8x60xf32>
    %446 = arith.addf %445, %444 : vector<8x60xf32>
    %447 = arith.divf %445, %446 : vector<8x60xf32>
    %448 = vector.extract_strided_slice %441 {offsets = [0, 60], sizes = [8, 20], strides = [1, 1]} : vector<8x80xf32> to vector<8x20xf32>
    %449 = math.tanh %448 : vector<8x20xf32>
    %450 = vector.extract_strided_slice %447 {offsets = [0, 0], sizes = [8, 20], strides = [1, 1]} : vector<8x60xf32> to vector<8x20xf32>
    %451 = vector.extract_strided_slice %447 {offsets = [0, 20], sizes = [8, 20], strides = [1, 1]} : vector<8x60xf32> to vector<8x20xf32>
    %452 = vector.extract_strided_slice %447 {offsets = [0, 40], sizes = [8, 20], strides = [1, 1]} : vector<8x60xf32> to vector<8x20xf32>
    %453 = arith.mulf %451, %436 : vector<8x20xf32>
    %454 = arith.mulf %450, %449 : vector<8x20xf32>
    %455 = arith.addf %453, %454 : vector<8x20xf32>
    %456 = math.tanh %455 : vector<8x20xf32>
    %457 = arith.mulf %452, %456 : vector<8x20xf32>
    %458 = vector.extract_strided_slice %341 {offsets = [48, 0], sizes = [8, 80], strides = [1, 1]} : vector<64x80xf32> to vector<8x80xf32>
    %cst_82 = arith.constant dense<0.000000e+00> : vector<8x80xf32>
    %459 = tpu.matmul %457, %336, %cst_82 {dimension_numbers = #tpu.dot_dimension_numbers<[1], [0], [0], [1], [0, 0, 1, 1], [], []>} : vector<8x20xf32>, vector<20x80xf32>, vector<8x80xf32> -> vector<8x80xf32>
    %460 = arith.addf %458, %459 : vector<8x80xf32>
    %461 = vector.extract_strided_slice %460 {offsets = [0, 0], sizes = [8, 60], strides = [1, 1]} : vector<8x80xf32> to vector<8x60xf32>
    %462 = arith.negf %461 : vector<8x60xf32>
    %463 = math.exp %462 : vector<8x60xf32>
    %cst_83 = arith.constant 1.000000e+00 : f32
    %464 = vector.broadcast %cst_83 : f32 to vector<8x60xf32>
    %465 = arith.addf %464, %463 : vector<8x60xf32>
    %466 = arith.divf %464, %465 : vector<8x60xf32>
    %467 = vector.extract_strided_slice %460 {offsets = [0, 60], sizes = [8, 20], strides = [1, 1]} : vector<8x80xf32> to vector<8x20xf32>
    %468 = math.tanh %467 : vector<8x20xf32>
    %469 = vector.extract_strided_slice %466 {offsets = [0, 0], sizes = [8, 20], strides = [1, 1]} : vector<8x60xf32> to vector<8x20xf32>
    %470 = vector.extract_strided_slice %466 {offsets = [0, 20], sizes = [8, 20], strides = [1, 1]} : vector<8x60xf32> to vector<8x20xf32>
    %471 = vector.extract_strided_slice %466 {offsets = [0, 40], sizes = [8, 20], strides = [1, 1]} : vector<8x60xf32> to vector<8x20xf32>
    %472 = arith.mulf %470, %455 : vector<8x20xf32>
    %473 = arith.mulf %469, %468 : vector<8x20xf32>
    %474 = arith.addf %472, %473 : vector<8x20xf32>
    %475 = math.tanh %474 : vector<8x20xf32>
    %476 = arith.mulf %471, %475 : vector<8x20xf32>
    %477 = vector.extract_strided_slice %341 {offsets = [56, 0], sizes = [8, 80], strides = [1, 1]} : vector<64x80xf32> to vector<8x80xf32>
    %cst_84 = arith.constant dense<0.000000e+00> : vector<8x80xf32>
    %478 = tpu.matmul %476, %336, %cst_84 {dimension_numbers = #tpu.dot_dimension_numbers<[1], [0], [0], [1], [0, 0, 1, 1], [], []>} : vector<8x20xf32>, vector<20x80xf32>, vector<8x80xf32> -> vector<8x80xf32>
    %479 = arith.addf %477, %478 : vector<8x80xf32>
    %480 = vector.extract_strided_slice %479 {offsets = [0, 0], sizes = [8, 60], strides = [1, 1]} : vector<8x80xf32> to vector<8x60xf32>
    %481 = arith.negf %480 : vector<8x60xf32>
    %482 = math.exp %481 : vector<8x60xf32>
    %cst_85 = arith.constant 1.000000e+00 : f32
    %483 = vector.broadcast %cst_85 : f32 to vector<8x60xf32>
    %484 = arith.addf %483, %482 : vector<8x60xf32>
    %485 = arith.divf %483, %484 : vector<8x60xf32>
    %486 = vector.extract_strided_slice %479 {offsets = [0, 60], sizes = [8, 20], strides = [1, 1]} : vector<8x80xf32> to vector<8x20xf32>
    %487 = math.tanh %486 : vector<8x20xf32>
    %488 = vector.extract_strided_slice %485 {offsets = [0, 0], sizes = [8, 20], strides = [1, 1]} : vector<8x60xf32> to vector<8x20xf32>
    %489 = vector.extract_strided_slice %485 {offsets = [0, 20], sizes = [8, 20], strides = [1, 1]} : vector<8x60xf32> to vector<8x20xf32>
    %490 = vector.extract_strided_slice %485 {offsets = [0, 40], sizes = [8, 20], strides = [1, 1]} : vector<8x60xf32> to vector<8x20xf32>
    %491 = arith.mulf %489, %474 : vector<8x20xf32>
    %492 = arith.mulf %488, %487 : vector<8x20xf32>
    %493 = arith.addf %491, %492 : vector<8x20xf32>
    %494 = math.tanh %493 : vector<8x20xf32>
    %495 = arith.mulf %490, %494 : vector<8x20xf32>
    %496 = tpu.concatenate %362, %381, %400, %419, %438, %457, %476, %495 in 0 : vector<8x20xf32>, vector<8x20xf32>, vector<8x20xf32>, vector<8x20xf32>, vector<8x20xf32>, vector<8x20xf32>, vector<8x20xf32>, vector<8x20xf32> -> vector<64x20xf32>
    %c3 = arith.constant 3 : index
    %c0_86 = arith.constant 0 : index
    %c0_87 = arith.constant 0 : index
    %497 = vector.load %arg2[%c3, %c0_86, %c0_87] : memref<4x20x80xf32, #tpu.memory_space<vmem>>, vector<1x20x80xf32>
    %498 = vector.shape_cast %497 : vector<1x20x80xf32> to vector<20x80xf32>
    %c3_88 = arith.constant 3 : index
    %c0_89 = arith.constant 0 : index
    %c0_90 = arith.constant 0 : index
    %499 = vector.load %arg3[%c3_88, %c0_89, %c0_90] : memref<4x20x80xf32, #tpu.memory_space<vmem>>, vector<1x20x80xf32>
    %500 = vector.shape_cast %499 : vector<1x20x80xf32> to vector<20x80xf32>
    %c3_91 = arith.constant 3 : index
    %c0_92 = arith.constant 0 : index
    %c0_93 = arith.constant 0 : index
    %501 = vector.load %arg4[%c3_91, %c0_92, %c0_93] : memref<4x1x80xf32, #tpu.memory_space<vmem>>, vector<1x1x80xf32>
    %502 = vector.shape_cast %501 : vector<1x1x80xf32> to vector<1x80xf32>
    %cst_94 = arith.constant dense<0.000000e+00> : vector<64x80xf32>
    %503 = tpu.matmul %496, %498, %cst_94 {dimension_numbers = #tpu.dot_dimension_numbers<[1], [0], [0], [1], [0, 0, 1, 1], [], []>} : vector<64x20xf32>, vector<20x80xf32>, vector<64x80xf32> -> vector<64x80xf32>
    %504 = vector.broadcast %502 : vector<1x80xf32> to vector<64x80xf32>
    %505 = arith.addf %503, %504 : vector<64x80xf32>
    %cst_95 = arith.constant 0.000000e+00 : f32
    %506 = vector.broadcast %cst_95 : f32 to vector<8x20xf32>
    %cst_96 = arith.constant 0.000000e+00 : f32
    %507 = vector.broadcast %cst_96 : f32 to vector<8x20xf32>
    %508 = vector.extract_strided_slice %505 {offsets = [0, 0], sizes = [8, 80], strides = [1, 1]} : vector<64x80xf32> to vector<8x80xf32>
    %cst_97 = arith.constant dense<0.000000e+00> : vector<8x80xf32>
    %509 = tpu.matmul %506, %500, %cst_97 {dimension_numbers = #tpu.dot_dimension_numbers<[1], [0], [0], [1], [0, 0, 1, 1], [], []>} : vector<8x20xf32>, vector<20x80xf32>, vector<8x80xf32> -> vector<8x80xf32>
    %510 = arith.addf %508, %509 : vector<8x80xf32>
    %511 = vector.extract_strided_slice %510 {offsets = [0, 0], sizes = [8, 60], strides = [1, 1]} : vector<8x80xf32> to vector<8x60xf32>
    %512 = arith.negf %511 : vector<8x60xf32>
    %513 = math.exp %512 : vector<8x60xf32>
    %cst_98 = arith.constant 1.000000e+00 : f32
    %514 = vector.broadcast %cst_98 : f32 to vector<8x60xf32>
    %515 = arith.addf %514, %513 : vector<8x60xf32>
    %516 = arith.divf %514, %515 : vector<8x60xf32>
    %517 = vector.extract_strided_slice %510 {offsets = [0, 60], sizes = [8, 20], strides = [1, 1]} : vector<8x80xf32> to vector<8x20xf32>
    %518 = math.tanh %517 : vector<8x20xf32>
    %519 = vector.extract_strided_slice %516 {offsets = [0, 0], sizes = [8, 20], strides = [1, 1]} : vector<8x60xf32> to vector<8x20xf32>
    %520 = vector.extract_strided_slice %516 {offsets = [0, 20], sizes = [8, 20], strides = [1, 1]} : vector<8x60xf32> to vector<8x20xf32>
    %521 = vector.extract_strided_slice %516 {offsets = [0, 40], sizes = [8, 20], strides = [1, 1]} : vector<8x60xf32> to vector<8x20xf32>
    %522 = arith.mulf %520, %507 : vector<8x20xf32>
    %523 = arith.mulf %519, %518 : vector<8x20xf32>
    %524 = arith.addf %522, %523 : vector<8x20xf32>
    %525 = math.tanh %524 : vector<8x20xf32>
    %526 = arith.mulf %521, %525 : vector<8x20xf32>
    %527 = vector.extract_strided_slice %505 {offsets = [8, 0], sizes = [8, 80], strides = [1, 1]} : vector<64x80xf32> to vector<8x80xf32>
    %cst_99 = arith.constant dense<0.000000e+00> : vector<8x80xf32>
    %528 = tpu.matmul %526, %500, %cst_99 {dimension_numbers = #tpu.dot_dimension_numbers<[1], [0], [0], [1], [0, 0, 1, 1], [], []>} : vector<8x20xf32>, vector<20x80xf32>, vector<8x80xf32> -> vector<8x80xf32>
    %529 = arith.addf %527, %528 : vector<8x80xf32>
    %530 = vector.extract_strided_slice %529 {offsets = [0, 0], sizes = [8, 60], strides = [1, 1]} : vector<8x80xf32> to vector<8x60xf32>
    %531 = arith.negf %530 : vector<8x60xf32>
    %532 = math.exp %531 : vector<8x60xf32>
    %cst_100 = arith.constant 1.000000e+00 : f32
    %533 = vector.broadcast %cst_100 : f32 to vector<8x60xf32>
    %534 = arith.addf %533, %532 : vector<8x60xf32>
    %535 = arith.divf %533, %534 : vector<8x60xf32>
    %536 = vector.extract_strided_slice %529 {offsets = [0, 60], sizes = [8, 20], strides = [1, 1]} : vector<8x80xf32> to vector<8x20xf32>
    %537 = math.tanh %536 : vector<8x20xf32>
    %538 = vector.extract_strided_slice %535 {offsets = [0, 0], sizes = [8, 20], strides = [1, 1]} : vector<8x60xf32> to vector<8x20xf32>
    %539 = vector.extract_strided_slice %535 {offsets = [0, 20], sizes = [8, 20], strides = [1, 1]} : vector<8x60xf32> to vector<8x20xf32>
    %540 = vector.extract_strided_slice %535 {offsets = [0, 40], sizes = [8, 20], strides = [1, 1]} : vector<8x60xf32> to vector<8x20xf32>
    %541 = arith.mulf %539, %524 : vector<8x20xf32>
    %542 = arith.mulf %538, %537 : vector<8x20xf32>
    %543 = arith.addf %541, %542 : vector<8x20xf32>
    %544 = math.tanh %543 : vector<8x20xf32>
    %545 = arith.mulf %540, %544 : vector<8x20xf32>
    %546 = vector.extract_strided_slice %505 {offsets = [16, 0], sizes = [8, 80], strides = [1, 1]} : vector<64x80xf32> to vector<8x80xf32>
    %cst_101 = arith.constant dense<0.000000e+00> : vector<8x80xf32>
    %547 = tpu.matmul %545, %500, %cst_101 {dimension_numbers = #tpu.dot_dimension_numbers<[1], [0], [0], [1], [0, 0, 1, 1], [], []>} : vector<8x20xf32>, vector<20x80xf32>, vector<8x80xf32> -> vector<8x80xf32>
    %548 = arith.addf %546, %547 : vector<8x80xf32>
    %549 = vector.extract_strided_slice %548 {offsets = [0, 0], sizes = [8, 60], strides = [1, 1]} : vector<8x80xf32> to vector<8x60xf32>
    %550 = arith.negf %549 : vector<8x60xf32>
    %551 = math.exp %550 : vector<8x60xf32>
    %cst_102 = arith.constant 1.000000e+00 : f32
    %552 = vector.broadcast %cst_102 : f32 to vector<8x60xf32>
    %553 = arith.addf %552, %551 : vector<8x60xf32>
    %554 = arith.divf %552, %553 : vector<8x60xf32>
    %555 = vector.extract_strided_slice %548 {offsets = [0, 60], sizes = [8, 20], strides = [1, 1]} : vector<8x80xf32> to vector<8x20xf32>
    %556 = math.tanh %555 : vector<8x20xf32>
    %557 = vector.extract_strided_slice %554 {offsets = [0, 0], sizes = [8, 20], strides = [1, 1]} : vector<8x60xf32> to vector<8x20xf32>
    %558 = vector.extract_strided_slice %554 {offsets = [0, 20], sizes = [8, 20], strides = [1, 1]} : vector<8x60xf32> to vector<8x20xf32>
    %559 = vector.extract_strided_slice %554 {offsets = [0, 40], sizes = [8, 20], strides = [1, 1]} : vector<8x60xf32> to vector<8x20xf32>
    %560 = arith.mulf %558, %543 : vector<8x20xf32>
    %561 = arith.mulf %557, %556 : vector<8x20xf32>
    %562 = arith.addf %560, %561 : vector<8x20xf32>
    %563 = math.tanh %562 : vector<8x20xf32>
    %564 = arith.mulf %559, %563 : vector<8x20xf32>
    %565 = vector.extract_strided_slice %505 {offsets = [24, 0], sizes = [8, 80], strides = [1, 1]} : vector<64x80xf32> to vector<8x80xf32>
    %cst_103 = arith.constant dense<0.000000e+00> : vector<8x80xf32>
    %566 = tpu.matmul %564, %500, %cst_103 {dimension_numbers = #tpu.dot_dimension_numbers<[1], [0], [0], [1], [0, 0, 1, 1], [], []>} : vector<8x20xf32>, vector<20x80xf32>, vector<8x80xf32> -> vector<8x80xf32>
    %567 = arith.addf %565, %566 : vector<8x80xf32>
    %568 = vector.extract_strided_slice %567 {offsets = [0, 0], sizes = [8, 60], strides = [1, 1]} : vector<8x80xf32> to vector<8x60xf32>
    %569 = arith.negf %568 : vector<8x60xf32>
    %570 = math.exp %569 : vector<8x60xf32>
    %cst_104 = arith.constant 1.000000e+00 : f32
    %571 = vector.broadcast %cst_104 : f32 to vector<8x60xf32>
    %572 = arith.addf %571, %570 : vector<8x60xf32>
    %573 = arith.divf %571, %572 : vector<8x60xf32>
    %574 = vector.extract_strided_slice %567 {offsets = [0, 60], sizes = [8, 20], strides = [1, 1]} : vector<8x80xf32> to vector<8x20xf32>
    %575 = math.tanh %574 : vector<8x20xf32>
    %576 = vector.extract_strided_slice %573 {offsets = [0, 0], sizes = [8, 20], strides = [1, 1]} : vector<8x60xf32> to vector<8x20xf32>
    %577 = vector.extract_strided_slice %573 {offsets = [0, 20], sizes = [8, 20], strides = [1, 1]} : vector<8x60xf32> to vector<8x20xf32>
    %578 = vector.extract_strided_slice %573 {offsets = [0, 40], sizes = [8, 20], strides = [1, 1]} : vector<8x60xf32> to vector<8x20xf32>
    %579 = arith.mulf %577, %562 : vector<8x20xf32>
    %580 = arith.mulf %576, %575 : vector<8x20xf32>
    %581 = arith.addf %579, %580 : vector<8x20xf32>
    %582 = math.tanh %581 : vector<8x20xf32>
    %583 = arith.mulf %578, %582 : vector<8x20xf32>
    %584 = vector.extract_strided_slice %505 {offsets = [32, 0], sizes = [8, 80], strides = [1, 1]} : vector<64x80xf32> to vector<8x80xf32>
    %cst_105 = arith.constant dense<0.000000e+00> : vector<8x80xf32>
    %585 = tpu.matmul %583, %500, %cst_105 {dimension_numbers = #tpu.dot_dimension_numbers<[1], [0], [0], [1], [0, 0, 1, 1], [], []>} : vector<8x20xf32>, vector<20x80xf32>, vector<8x80xf32> -> vector<8x80xf32>
    %586 = arith.addf %584, %585 : vector<8x80xf32>
    %587 = vector.extract_strided_slice %586 {offsets = [0, 0], sizes = [8, 60], strides = [1, 1]} : vector<8x80xf32> to vector<8x60xf32>
    %588 = arith.negf %587 : vector<8x60xf32>
    %589 = math.exp %588 : vector<8x60xf32>
    %cst_106 = arith.constant 1.000000e+00 : f32
    %590 = vector.broadcast %cst_106 : f32 to vector<8x60xf32>
    %591 = arith.addf %590, %589 : vector<8x60xf32>
    %592 = arith.divf %590, %591 : vector<8x60xf32>
    %593 = vector.extract_strided_slice %586 {offsets = [0, 60], sizes = [8, 20], strides = [1, 1]} : vector<8x80xf32> to vector<8x20xf32>
    %594 = math.tanh %593 : vector<8x20xf32>
    %595 = vector.extract_strided_slice %592 {offsets = [0, 0], sizes = [8, 20], strides = [1, 1]} : vector<8x60xf32> to vector<8x20xf32>
    %596 = vector.extract_strided_slice %592 {offsets = [0, 20], sizes = [8, 20], strides = [1, 1]} : vector<8x60xf32> to vector<8x20xf32>
    %597 = vector.extract_strided_slice %592 {offsets = [0, 40], sizes = [8, 20], strides = [1, 1]} : vector<8x60xf32> to vector<8x20xf32>
    %598 = arith.mulf %596, %581 : vector<8x20xf32>
    %599 = arith.mulf %595, %594 : vector<8x20xf32>
    %600 = arith.addf %598, %599 : vector<8x20xf32>
    %601 = math.tanh %600 : vector<8x20xf32>
    %602 = arith.mulf %597, %601 : vector<8x20xf32>
    %603 = vector.extract_strided_slice %505 {offsets = [40, 0], sizes = [8, 80], strides = [1, 1]} : vector<64x80xf32> to vector<8x80xf32>
    %cst_107 = arith.constant dense<0.000000e+00> : vector<8x80xf32>
    %604 = tpu.matmul %602, %500, %cst_107 {dimension_numbers = #tpu.dot_dimension_numbers<[1], [0], [0], [1], [0, 0, 1, 1], [], []>} : vector<8x20xf32>, vector<20x80xf32>, vector<8x80xf32> -> vector<8x80xf32>
    %605 = arith.addf %603, %604 : vector<8x80xf32>
    %606 = vector.extract_strided_slice %605 {offsets = [0, 0], sizes = [8, 60], strides = [1, 1]} : vector<8x80xf32> to vector<8x60xf32>
    %607 = arith.negf %606 : vector<8x60xf32>
    %608 = math.exp %607 : vector<8x60xf32>
    %cst_108 = arith.constant 1.000000e+00 : f32
    %609 = vector.broadcast %cst_108 : f32 to vector<8x60xf32>
    %610 = arith.addf %609, %608 : vector<8x60xf32>
    %611 = arith.divf %609, %610 : vector<8x60xf32>
    %612 = vector.extract_strided_slice %605 {offsets = [0, 60], sizes = [8, 20], strides = [1, 1]} : vector<8x80xf32> to vector<8x20xf32>
    %613 = math.tanh %612 : vector<8x20xf32>
    %614 = vector.extract_strided_slice %611 {offsets = [0, 0], sizes = [8, 20], strides = [1, 1]} : vector<8x60xf32> to vector<8x20xf32>
    %615 = vector.extract_strided_slice %611 {offsets = [0, 20], sizes = [8, 20], strides = [1, 1]} : vector<8x60xf32> to vector<8x20xf32>
    %616 = vector.extract_strided_slice %611 {offsets = [0, 40], sizes = [8, 20], strides = [1, 1]} : vector<8x60xf32> to vector<8x20xf32>
    %617 = arith.mulf %615, %600 : vector<8x20xf32>
    %618 = arith.mulf %614, %613 : vector<8x20xf32>
    %619 = arith.addf %617, %618 : vector<8x20xf32>
    %620 = math.tanh %619 : vector<8x20xf32>
    %621 = arith.mulf %616, %620 : vector<8x20xf32>
    %622 = vector.extract_strided_slice %505 {offsets = [48, 0], sizes = [8, 80], strides = [1, 1]} : vector<64x80xf32> to vector<8x80xf32>
    %cst_109 = arith.constant dense<0.000000e+00> : vector<8x80xf32>
    %623 = tpu.matmul %621, %500, %cst_109 {dimension_numbers = #tpu.dot_dimension_numbers<[1], [0], [0], [1], [0, 0, 1, 1], [], []>} : vector<8x20xf32>, vector<20x80xf32>, vector<8x80xf32> -> vector<8x80xf32>
    %624 = arith.addf %622, %623 : vector<8x80xf32>
    %625 = vector.extract_strided_slice %624 {offsets = [0, 0], sizes = [8, 60], strides = [1, 1]} : vector<8x80xf32> to vector<8x60xf32>
    %626 = arith.negf %625 : vector<8x60xf32>
    %627 = math.exp %626 : vector<8x60xf32>
    %cst_110 = arith.constant 1.000000e+00 : f32
    %628 = vector.broadcast %cst_110 : f32 to vector<8x60xf32>
    %629 = arith.addf %628, %627 : vector<8x60xf32>
    %630 = arith.divf %628, %629 : vector<8x60xf32>
    %631 = vector.extract_strided_slice %624 {offsets = [0, 60], sizes = [8, 20], strides = [1, 1]} : vector<8x80xf32> to vector<8x20xf32>
    %632 = math.tanh %631 : vector<8x20xf32>
    %633 = vector.extract_strided_slice %630 {offsets = [0, 0], sizes = [8, 20], strides = [1, 1]} : vector<8x60xf32> to vector<8x20xf32>
    %634 = vector.extract_strided_slice %630 {offsets = [0, 20], sizes = [8, 20], strides = [1, 1]} : vector<8x60xf32> to vector<8x20xf32>
    %635 = vector.extract_strided_slice %630 {offsets = [0, 40], sizes = [8, 20], strides = [1, 1]} : vector<8x60xf32> to vector<8x20xf32>
    %636 = arith.mulf %634, %619 : vector<8x20xf32>
    %637 = arith.mulf %633, %632 : vector<8x20xf32>
    %638 = arith.addf %636, %637 : vector<8x20xf32>
    %639 = math.tanh %638 : vector<8x20xf32>
    %640 = arith.mulf %635, %639 : vector<8x20xf32>
    %641 = vector.extract_strided_slice %505 {offsets = [56, 0], sizes = [8, 80], strides = [1, 1]} : vector<64x80xf32> to vector<8x80xf32>
    %cst_111 = arith.constant dense<0.000000e+00> : vector<8x80xf32>
    %642 = tpu.matmul %640, %500, %cst_111 {dimension_numbers = #tpu.dot_dimension_numbers<[1], [0], [0], [1], [0, 0, 1, 1], [], []>} : vector<8x20xf32>, vector<20x80xf32>, vector<8x80xf32> -> vector<8x80xf32>
    %643 = arith.addf %641, %642 : vector<8x80xf32>
    %644 = vector.extract_strided_slice %643 {offsets = [0, 0], sizes = [8, 60], strides = [1, 1]} : vector<8x80xf32> to vector<8x60xf32>
    %645 = arith.negf %644 : vector<8x60xf32>
    %646 = math.exp %645 : vector<8x60xf32>
    %cst_112 = arith.constant 1.000000e+00 : f32
    %647 = vector.broadcast %cst_112 : f32 to vector<8x60xf32>
    %648 = arith.addf %647, %646 : vector<8x60xf32>
    %649 = arith.divf %647, %648 : vector<8x60xf32>
    %650 = vector.extract_strided_slice %643 {offsets = [0, 60], sizes = [8, 20], strides = [1, 1]} : vector<8x80xf32> to vector<8x20xf32>
    %651 = math.tanh %650 : vector<8x20xf32>
    %652 = vector.extract_strided_slice %649 {offsets = [0, 0], sizes = [8, 20], strides = [1, 1]} : vector<8x60xf32> to vector<8x20xf32>
    %653 = vector.extract_strided_slice %649 {offsets = [0, 20], sizes = [8, 20], strides = [1, 1]} : vector<8x60xf32> to vector<8x20xf32>
    %654 = vector.extract_strided_slice %649 {offsets = [0, 40], sizes = [8, 20], strides = [1, 1]} : vector<8x60xf32> to vector<8x20xf32>
    %655 = arith.mulf %653, %638 : vector<8x20xf32>
    %656 = arith.mulf %652, %651 : vector<8x20xf32>
    %657 = arith.addf %655, %656 : vector<8x20xf32>
    %658 = math.tanh %657 : vector<8x20xf32>
    %659 = arith.mulf %654, %658 : vector<8x20xf32>
    %660 = tpu.concatenate %526, %545, %564, %583, %602, %621, %640, %659 in 0 : vector<8x20xf32>, vector<8x20xf32>, vector<8x20xf32>, vector<8x20xf32>, vector<8x20xf32>, vector<8x20xf32>, vector<8x20xf32>, vector<8x20xf32> -> vector<64x20xf32>
    %c0_113 = arith.constant 0 : index
    %c0_114 = arith.constant 0 : index
    %661 = vector.load %arg5[%c0_113, %c0_114] : memref<20x64xf32, #tpu.memory_space<vmem>>, vector<20x64xf32>
    %cst_115 = arith.constant dense<0.000000e+00> : vector<64x64xf32>
    %662 = tpu.matmul %660, %661, %cst_115 {dimension_numbers = #tpu.dot_dimension_numbers<[1], [0], [0], [1], [0, 0, 1, 1], [], []>} : vector<64x20xf32>, vector<20x64xf32>, vector<64x64xf32> -> vector<64x64xf32>
    %c0_116 = arith.constant 0 : index
    %c0_117 = arith.constant 0 : index
    %663 = vector.load %arg6[%c0_116, %c0_117] : memref<1x64xf32, #tpu.memory_space<vmem>>, vector<1x64xf32>
    %664 = vector.broadcast %663 : vector<1x64xf32> to vector<64x64xf32>
    %665 = arith.addf %662, %664 : vector<64x64xf32>
    %cst_118 = arith.constant 0.000000e+00 : f32
    %666 = vector.broadcast %cst_118 : f32 to vector<64x64xf32>
    %667 = arith.maximumf %665, %666 : vector<64x64xf32>
    %c0_119 = arith.constant 0 : index
    %c0_120 = arith.constant 0 : index
    %668 = vector.load %arg7[%c0_119, %c0_120] : memref<64x1xf32, #tpu.memory_space<vmem>>, vector<64x1xf32>
    %cst_121 = arith.constant dense<0.000000e+00> : vector<64x1xf32>
    %669 = tpu.matmul %667, %668, %cst_121 {dimension_numbers = #tpu.dot_dimension_numbers<[1], [0], [0], [1], [0, 0, 1, 1], [], []>} : vector<64x64xf32>, vector<64x1xf32>, vector<64x1xf32> -> vector<64x1xf32>
    %c0_122 = arith.constant 0 : index
    %c0_123 = arith.constant 0 : index
    %670 = vector.load %arg8[%c0_122, %c0_123] : memref<1x1xf32, #tpu.memory_space<vmem>>, vector<1x1xf32>
    %671 = vector.broadcast %670 : vector<1x1xf32> to vector<64x1xf32>
    %672 = arith.addf %669, %671 : vector<64x1xf32>
    %673 = vector.extract_strided_slice %672 {offsets = [0, 0], sizes = [8, 1], strides = [1, 1]} : vector<64x1xf32> to vector<8x1xf32>
    %674 = vector.extract_strided_slice %672 {offsets = [8, 0], sizes = [8, 1], strides = [1, 1]} : vector<64x1xf32> to vector<8x1xf32>
    %675 = vector.extract_strided_slice %672 {offsets = [16, 0], sizes = [8, 1], strides = [1, 1]} : vector<64x1xf32> to vector<8x1xf32>
    %676 = vector.extract_strided_slice %672 {offsets = [24, 0], sizes = [8, 1], strides = [1, 1]} : vector<64x1xf32> to vector<8x1xf32>
    %677 = vector.extract_strided_slice %672 {offsets = [32, 0], sizes = [8, 1], strides = [1, 1]} : vector<64x1xf32> to vector<8x1xf32>
    %678 = vector.extract_strided_slice %672 {offsets = [40, 0], sizes = [8, 1], strides = [1, 1]} : vector<64x1xf32> to vector<8x1xf32>
    %679 = vector.extract_strided_slice %672 {offsets = [48, 0], sizes = [8, 1], strides = [1, 1]} : vector<64x1xf32> to vector<8x1xf32>
    %680 = vector.extract_strided_slice %672 {offsets = [56, 0], sizes = [8, 1], strides = [1, 1]} : vector<64x1xf32> to vector<8x1xf32>
    %681 = arith.maximumf %673, %674 : vector<8x1xf32>
    %682 = arith.maximumf %681, %675 : vector<8x1xf32>
    %683 = arith.maximumf %682, %676 : vector<8x1xf32>
    %684 = arith.maximumf %683, %677 : vector<8x1xf32>
    %685 = arith.maximumf %684, %678 : vector<8x1xf32>
    %686 = arith.maximumf %685, %679 : vector<8x1xf32>
    %687 = arith.maximumf %686, %680 : vector<8x1xf32>
    %688 = arith.subf %673, %687 : vector<8x1xf32>
    %689 = math.exp %688 : vector<8x1xf32>
    %690 = arith.subf %674, %687 : vector<8x1xf32>
    %691 = math.exp %690 : vector<8x1xf32>
    %692 = arith.subf %675, %687 : vector<8x1xf32>
    %693 = math.exp %692 : vector<8x1xf32>
    %694 = arith.subf %676, %687 : vector<8x1xf32>
    %695 = math.exp %694 : vector<8x1xf32>
    %696 = arith.subf %677, %687 : vector<8x1xf32>
    %697 = math.exp %696 : vector<8x1xf32>
    %698 = arith.subf %678, %687 : vector<8x1xf32>
    %699 = math.exp %698 : vector<8x1xf32>
    %700 = arith.subf %679, %687 : vector<8x1xf32>
    %701 = math.exp %700 : vector<8x1xf32>
    %702 = arith.subf %680, %687 : vector<8x1xf32>
    %703 = math.exp %702 : vector<8x1xf32>
    %704 = arith.addf %689, %691 : vector<8x1xf32>
    %705 = arith.addf %704, %693 : vector<8x1xf32>
    %706 = arith.addf %705, %695 : vector<8x1xf32>
    %707 = arith.addf %706, %697 : vector<8x1xf32>
    %708 = arith.addf %707, %699 : vector<8x1xf32>
    %709 = arith.addf %708, %701 : vector<8x1xf32>
    %710 = arith.addf %709, %703 : vector<8x1xf32>
    %cst_124 = arith.constant 0.000000e+00 : f32
    %711 = vector.broadcast %cst_124 : f32 to vector<8x20xf32>
    %712 = arith.divf %689, %710 : vector<8x1xf32>
    %713 = vector.extract_strided_slice %660 {offsets = [0, 0], sizes = [8, 20], strides = [1, 1]} : vector<64x20xf32> to vector<8x20xf32>
    %714 = vector.broadcast %712 : vector<8x1xf32> to vector<8x20xf32>
    %715 = arith.mulf %713, %714 : vector<8x20xf32>
    %716 = arith.addf %711, %715 : vector<8x20xf32>
    %717 = arith.divf %691, %710 : vector<8x1xf32>
    %718 = vector.extract_strided_slice %660 {offsets = [8, 0], sizes = [8, 20], strides = [1, 1]} : vector<64x20xf32> to vector<8x20xf32>
    %719 = vector.broadcast %717 : vector<8x1xf32> to vector<8x20xf32>
    %720 = arith.mulf %718, %719 : vector<8x20xf32>
    %721 = arith.addf %716, %720 : vector<8x20xf32>
    %722 = arith.divf %693, %710 : vector<8x1xf32>
    %723 = vector.extract_strided_slice %660 {offsets = [16, 0], sizes = [8, 20], strides = [1, 1]} : vector<64x20xf32> to vector<8x20xf32>
    %724 = vector.broadcast %722 : vector<8x1xf32> to vector<8x20xf32>
    %725 = arith.mulf %723, %724 : vector<8x20xf32>
    %726 = arith.addf %721, %725 : vector<8x20xf32>
    %727 = arith.divf %695, %710 : vector<8x1xf32>
    %728 = vector.extract_strided_slice %660 {offsets = [24, 0], sizes = [8, 20], strides = [1, 1]} : vector<64x20xf32> to vector<8x20xf32>
    %729 = vector.broadcast %727 : vector<8x1xf32> to vector<8x20xf32>
    %730 = arith.mulf %728, %729 : vector<8x20xf32>
    %731 = arith.addf %726, %730 : vector<8x20xf32>
    %732 = arith.divf %697, %710 : vector<8x1xf32>
    %733 = vector.extract_strided_slice %660 {offsets = [32, 0], sizes = [8, 20], strides = [1, 1]} : vector<64x20xf32> to vector<8x20xf32>
    %734 = vector.broadcast %732 : vector<8x1xf32> to vector<8x20xf32>
    %735 = arith.mulf %733, %734 : vector<8x20xf32>
    %736 = arith.addf %731, %735 : vector<8x20xf32>
    %737 = arith.divf %699, %710 : vector<8x1xf32>
    %738 = vector.extract_strided_slice %660 {offsets = [40, 0], sizes = [8, 20], strides = [1, 1]} : vector<64x20xf32> to vector<8x20xf32>
    %739 = vector.broadcast %737 : vector<8x1xf32> to vector<8x20xf32>
    %740 = arith.mulf %738, %739 : vector<8x20xf32>
    %741 = arith.addf %736, %740 : vector<8x20xf32>
    %742 = arith.divf %701, %710 : vector<8x1xf32>
    %743 = vector.extract_strided_slice %660 {offsets = [48, 0], sizes = [8, 20], strides = [1, 1]} : vector<64x20xf32> to vector<8x20xf32>
    %744 = vector.broadcast %742 : vector<8x1xf32> to vector<8x20xf32>
    %745 = arith.mulf %743, %744 : vector<8x20xf32>
    %746 = arith.addf %741, %745 : vector<8x20xf32>
    %747 = arith.divf %703, %710 : vector<8x1xf32>
    %748 = vector.extract_strided_slice %660 {offsets = [56, 0], sizes = [8, 20], strides = [1, 1]} : vector<64x20xf32> to vector<8x20xf32>
    %749 = vector.broadcast %747 : vector<8x1xf32> to vector<8x20xf32>
    %750 = arith.mulf %748, %749 : vector<8x20xf32>
    %751 = arith.addf %746, %750 : vector<8x20xf32>
    %c0_125 = arith.constant 0 : index
    %c0_126 = arith.constant 0 : index
    %752 = vector.load %arg19[%c0_125, %c0_126] : memref<8x20xf32, #tpu.memory_space<vmem>>, vector<8x20xf32>
    tpu.vector_store %arg19[%c0_125, %c0_126], %751 {strides = array<i32>} : memref<8x20xf32, #tpu.memory_space<vmem>>, vector<8x20xf32>,
    %c0_127 = arith.constant 0 : index
    %c0_128 = arith.constant 0 : index
    %753 = vector.load %arg9[%c0_127, %c0_128] : memref<8x3xf32, #tpu.memory_space<vmem>>, vector<8x3xf32>
    %cst_129 = arith.constant dense<0.000000e+00> : vector<8x8xf32>
    %754 = tpu.matmul %753, %753, %cst_129 {dimension_numbers = #tpu.dot_dimension_numbers<[1], [1], [0], [0], [0, 0, 1, 0], [], []>} : vector<8x3xf32>, vector<8x3xf32>, vector<8x8xf32> -> vector<8x8xf32>
    %cst_130 = arith.constant 0.000000e+00 : f32
    %755 = vector.broadcast %cst_130 : f32 to vector<8x8xf32>
    %756 = arith.cmpf ogt, %754, %755 : vector<8x8xf32>
    %cst_131 = arith.constant 1.000000e+00 : f32
    %757 = vector.broadcast %cst_131 : f32 to vector<8x8xf32>
    %758 = arith.select %756, %757, %754 : vector<8x8xi1>, vector<8x8xf32>
    %cst_132 = arith.constant dense<0.000000e+00> : vector<8x8xf32>
    %759 = tpu.matmul %751, %751, %cst_132 {dimension_numbers = #tpu.dot_dimension_numbers<[1], [1], [0], [0], [0, 0, 1, 0], [], []>} : vector<8x20xf32>, vector<8x20xf32>, vector<8x8xf32> -> vector<8x8xf32>
    %760 = arith.mulf %751, %751 : vector<8x20xf32>
    %cst_133 = arith.constant dense<0.000000e+00> : vector<8xf32>
    %761 = vector.multi_reduction <add>, %760, %cst_133 [1] : vector<8x20xf32> to vector<8xf32>
    %762 = vector.shape_cast %761 : vector<8xf32> to vector<8x1xf32>
    %763 = math.sqrt %762 : vector<8x1xf32>
    %cst_134 = arith.constant dense<0.000000e+00> : vector<8x8xf32>
    %764 = tpu.matmul %763, %763, %cst_134 {dimension_numbers = #tpu.dot_dimension_numbers<[1], [1], [0], [0], [0, 0, 1, 0], [], []>} : vector<8x1xf32>, vector<8x1xf32>, vector<8x8xf32> -> vector<8x8xf32>
    %cst_135 = arith.constant 9.99999996E-13 : f32
    %765 = vector.broadcast %cst_135 : f32 to vector<8x8xf32>
    %766 = arith.maximumf %764, %765 : vector<8x8xf32>
    %767 = arith.divf %759, %766 : vector<8x8xf32>
    %768 = arith.mulf %767, %758 : vector<8x8xf32>
    %769 = tpu.iota {dimensions = array<i32: 1>} : vector<8x8xi32>
    %770 = arith.sitofp %769 : vector<8x8xi32> to vector<8x8xf32>
    %771 = tpu.iota {dimensions = array<i32: 0>} : vector<8x8xi32>
    %772 = arith.sitofp %771 : vector<8x8xi32> to vector<8x8xf32>
    %cst_136 = arith.constant 0.000000e+00 : f32
    %773 = vector.broadcast %cst_136 : f32 to vector<8x8xf32>
    %cst_137 = arith.constant dense<0xFF800000> : vector<8xf32>
    %774 = vector.multi_reduction <maximumf>, %768, %cst_137 [1] : vector<8x8xf32> to vector<8xf32>
    %775 = vector.shape_cast %774 : vector<8xf32> to vector<8x1xf32>
    %776 = vector.broadcast %775 : vector<8x1xf32> to vector<8x8xf32>
    %777 = arith.cmpf oeq, %768, %776 : vector<8x8xf32>
    %cst_138 = arith.constant 8.000000e+00 : f32
    %778 = vector.broadcast %cst_138 : f32 to vector<8x8xf32>
    %779 = arith.select %777, %770, %778 : vector<8x8xi1>, vector<8x8xf32>
    %cst_139 = arith.constant dense<0x7F800000> : vector<8xf32>
    %780 = vector.multi_reduction <minimumf>, %779, %cst_139 [1] : vector<8x8xf32> to vector<8xf32>
    %781 = vector.shape_cast %780 : vector<8xf32> to vector<8x1xf32>
    %782 = vector.broadcast %781 : vector<8x1xf32> to vector<8x8xf32>
    %783 = arith.cmpf oeq, %770, %782 : vector<8x8xf32>
    %784 = arith.extui %783 : vector<8x8xi1> to vector<8x8xi32>
    %785 = arith.sitofp %784 : vector<8x8xi32> to vector<8x8xf32>
    %cst_140 = arith.constant 0.000000e+00 : f32
    %786 = vector.broadcast %cst_140 : f32 to vector<8x8xf32>
    %787 = arith.cmpf ogt, %785, %786 : vector<8x8xf32>
    %cst_141 = arith.constant -1.000000e+30 : f32
    %788 = vector.broadcast %cst_141 : f32 to vector<8x8xf32>
    %789 = arith.select %787, %788, %768 : vector<8x8xi1>, vector<8x8xf32>
    %cst_142 = arith.constant dense<0xFF800000> : vector<8xf32>
    %790 = vector.multi_reduction <maximumf>, %789, %cst_142 [1] : vector<8x8xf32> to vector<8xf32>
    %791 = vector.shape_cast %790 : vector<8xf32> to vector<8x1xf32>
    %792 = vector.broadcast %791 : vector<8x1xf32> to vector<8x8xf32>
    %793 = arith.cmpf oeq, %789, %792 : vector<8x8xf32>
    %cst_143 = arith.constant 8.000000e+00 : f32
    %794 = vector.broadcast %cst_143 : f32 to vector<8x8xf32>
    %795 = arith.select %793, %770, %794 : vector<8x8xi1>, vector<8x8xf32>
    %cst_144 = arith.constant dense<0x7F800000> : vector<8xf32>
    %796 = vector.multi_reduction <minimumf>, %795, %cst_144 [1] : vector<8x8xf32> to vector<8xf32>
    %797 = vector.shape_cast %796 : vector<8xf32> to vector<8x1xf32>
    %798 = vector.broadcast %797 : vector<8x1xf32> to vector<8x8xf32>
    %799 = arith.cmpf oeq, %770, %798 : vector<8x8xf32>
    %800 = arith.extui %799 : vector<8x8xi1> to vector<8x8xi32>
    %801 = arith.sitofp %800 : vector<8x8xi32> to vector<8x8xf32>
    %802 = arith.addf %773, %801 : vector<8x8xf32>
    %cst_145 = arith.constant 0.000000e+00 : f32
    %803 = vector.broadcast %cst_145 : f32 to vector<8x8xf32>
    %804 = arith.cmpf ogt, %801, %803 : vector<8x8xf32>
    %cst_146 = arith.constant -1.000000e+30 : f32
    %805 = vector.broadcast %cst_146 : f32 to vector<8x8xf32>
    %806 = arith.select %804, %805, %789 : vector<8x8xi1>, vector<8x8xf32>
    %cst_147 = arith.constant dense<0xFF800000> : vector<8xf32>
    %807 = vector.multi_reduction <maximumf>, %806, %cst_147 [1] : vector<8x8xf32> to vector<8xf32>
    %808 = vector.shape_cast %807 : vector<8xf32> to vector<8x1xf32>
    %809 = vector.broadcast %808 : vector<8x1xf32> to vector<8x8xf32>
    %810 = arith.cmpf oeq, %806, %809 : vector<8x8xf32>
    %cst_148 = arith.constant 8.000000e+00 : f32
    %811 = vector.broadcast %cst_148 : f32 to vector<8x8xf32>
    %812 = arith.select %810, %770, %811 : vector<8x8xi1>, vector<8x8xf32>
    %cst_149 = arith.constant dense<0x7F800000> : vector<8xf32>
    %813 = vector.multi_reduction <minimumf>, %812, %cst_149 [1] : vector<8x8xf32> to vector<8xf32>
    %814 = vector.shape_cast %813 : vector<8xf32> to vector<8x1xf32>
    %815 = vector.broadcast %814 : vector<8x1xf32> to vector<8x8xf32>
    %816 = arith.cmpf oeq, %770, %815 : vector<8x8xf32>
    %817 = arith.extui %816 : vector<8x8xi1> to vector<8x8xi32>
    %818 = arith.sitofp %817 : vector<8x8xi32> to vector<8x8xf32>
    %819 = arith.addf %802, %818 : vector<8x8xf32>
    %cst_150 = arith.constant 0.000000e+00 : f32
    %820 = vector.broadcast %cst_150 : f32 to vector<8x8xf32>
    %821 = arith.cmpf ogt, %818, %820 : vector<8x8xf32>
    %cst_151 = arith.constant -1.000000e+30 : f32
    %822 = vector.broadcast %cst_151 : f32 to vector<8x8xf32>
    %823 = arith.select %821, %822, %806 : vector<8x8xi1>, vector<8x8xf32>
    %cst_152 = arith.constant dense<0xFF800000> : vector<8xf32>
    %824 = vector.multi_reduction <maximumf>, %823, %cst_152 [1] : vector<8x8xf32> to vector<8xf32>
    %825 = vector.shape_cast %824 : vector<8xf32> to vector<8x1xf32>
    %826 = vector.broadcast %825 : vector<8x1xf32> to vector<8x8xf32>
    %827 = arith.cmpf oeq, %823, %826 : vector<8x8xf32>
    %cst_153 = arith.constant 8.000000e+00 : f32
    %828 = vector.broadcast %cst_153 : f32 to vector<8x8xf32>
    %829 = arith.select %827, %770, %828 : vector<8x8xi1>, vector<8x8xf32>
    %cst_154 = arith.constant dense<0x7F800000> : vector<8xf32>
    %830 = vector.multi_reduction <minimumf>, %829, %cst_154 [1] : vector<8x8xf32> to vector<8xf32>
    %831 = vector.shape_cast %830 : vector<8xf32> to vector<8x1xf32>
    %832 = vector.broadcast %831 : vector<8x1xf32> to vector<8x8xf32>
    %833 = arith.cmpf oeq, %770, %832 : vector<8x8xf32>
    %834 = arith.extui %833 : vector<8x8xi1> to vector<8x8xi32>
    %835 = arith.sitofp %834 : vector<8x8xi32> to vector<8x8xf32>
    %836 = arith.addf %819, %835 : vector<8x8xf32>
    %cst_155 = arith.constant 0.000000e+00 : f32
    %837 = vector.broadcast %cst_155 : f32 to vector<8x8xf32>
    %838 = arith.cmpf ogt, %835, %837 : vector<8x8xf32>
    %cst_156 = arith.constant -1.000000e+30 : f32
    %839 = vector.broadcast %cst_156 : f32 to vector<8x8xf32>
    %840 = arith.select %838, %839, %823 : vector<8x8xi1>, vector<8x8xf32>
    %cst_157 = arith.constant dense<0xFF800000> : vector<8xf32>
    %841 = vector.multi_reduction <maximumf>, %840, %cst_157 [1] : vector<8x8xf32> to vector<8xf32>
    %842 = vector.shape_cast %841 : vector<8xf32> to vector<8x1xf32>
    %843 = vector.broadcast %842 : vector<8x1xf32> to vector<8x8xf32>
    %844 = arith.cmpf oeq, %840, %843 : vector<8x8xf32>
    %cst_158 = arith.constant 8.000000e+00 : f32
    %845 = vector.broadcast %cst_158 : f32 to vector<8x8xf32>
    %846 = arith.select %844, %770, %845 : vector<8x8xi1>, vector<8x8xf32>
    %cst_159 = arith.constant dense<0x7F800000> : vector<8xf32>
    %847 = vector.multi_reduction <minimumf>, %846, %cst_159 [1] : vector<8x8xf32> to vector<8xf32>
    %848 = vector.shape_cast %847 : vector<8xf32> to vector<8x1xf32>
    %849 = vector.broadcast %848 : vector<8x1xf32> to vector<8x8xf32>
    %850 = arith.cmpf oeq, %770, %849 : vector<8x8xf32>
    %851 = arith.extui %850 : vector<8x8xi1> to vector<8x8xi32>
    %852 = arith.sitofp %851 : vector<8x8xi32> to vector<8x8xf32>
    %853 = arith.addf %836, %852 : vector<8x8xf32>
    %cst_160 = arith.constant 0.000000e+00 : f32
    %854 = vector.broadcast %cst_160 : f32 to vector<8x8xf32>
    %855 = arith.cmpf ogt, %852, %854 : vector<8x8xf32>
    %cst_161 = arith.constant -1.000000e+30 : f32
    %856 = vector.broadcast %cst_161 : f32 to vector<8x8xf32>
    %857 = arith.select %855, %856, %840 : vector<8x8xi1>, vector<8x8xf32>
    %cst_162 = arith.constant dense<0xFF800000> : vector<8xf32>
    %858 = vector.multi_reduction <maximumf>, %857, %cst_162 [1] : vector<8x8xf32> to vector<8xf32>
    %859 = vector.shape_cast %858 : vector<8xf32> to vector<8x1xf32>
    %860 = vector.broadcast %859 : vector<8x1xf32> to vector<8x8xf32>
    %861 = arith.cmpf oeq, %857, %860 : vector<8x8xf32>
    %cst_163 = arith.constant 8.000000e+00 : f32
    %862 = vector.broadcast %cst_163 : f32 to vector<8x8xf32>
    %863 = arith.select %861, %770, %862 : vector<8x8xi1>, vector<8x8xf32>
    %cst_164 = arith.constant dense<0x7F800000> : vector<8xf32>
    %864 = vector.multi_reduction <minimumf>, %863, %cst_164 [1] : vector<8x8xf32> to vector<8xf32>
    %865 = vector.shape_cast %864 : vector<8xf32> to vector<8x1xf32>
    %866 = vector.broadcast %865 : vector<8x1xf32> to vector<8x8xf32>
    %867 = arith.cmpf oeq, %770, %866 : vector<8x8xf32>
    %868 = arith.extui %867 : vector<8x8xi1> to vector<8x8xi32>
    %869 = arith.sitofp %868 : vector<8x8xi32> to vector<8x8xf32>
    %870 = arith.addf %853, %869 : vector<8x8xf32>
    %871 = arith.cmpf oeq, %772, %770 : vector<8x8xf32>
    %872 = arith.extui %871 : vector<8x8xi1> to vector<8x8xi32>
    %873 = arith.sitofp %872 : vector<8x8xi32> to vector<8x8xf32>
    %cst_165 = arith.constant dense<0.000000e+00> : vector<8x8xf32>
    %874 = tpu.matmul %870, %873, %cst_165 {dimension_numbers = #tpu.dot_dimension_numbers<[0], [0], [1], [1], [0, 1, 1, 1], [], []>} : vector<8x8xf32>, vector<8x8xf32>, vector<8x8xf32> -> vector<8x8xf32>
    %875 = arith.addf %870, %874 : vector<8x8xf32>
    %c0_166 = arith.constant 0 : index
    %c0_167 = arith.constant 0 : index
    %876 = vector.load %arg21[%c0_166, %c0_167] : memref<8x8xf32, #tpu.memory_space<vmem>>, vector<8x8xf32>
    tpu.vector_store %arg21[%c0_166, %c0_167], %875 {strides = array<i32>} : memref<8x8xf32, #tpu.memory_space<vmem>>, vector<8x8xf32>,
    %cst_168 = arith.constant 0.000000e+00 : f32
    %877 = vector.broadcast %cst_168 : f32 to vector<8x8xf32>
    %878 = arith.cmpf ogt, %875, %877 : vector<8x8xf32>
    %879 = arith.extui %878 : vector<8x8xi1> to vector<8x8xi32>
    %880 = arith.sitofp %879 : vector<8x8xi32> to vector<8x8xf32>
    %cst_169 = arith.constant dense<0.000000e+00> : vector<8xf32>
    %881 = vector.multi_reduction <add>, %880, %cst_169 [1] : vector<8x8xf32> to vector<8xf32>
    %882 = vector.shape_cast %881 : vector<8xf32> to vector<8x1xf32>
    %cst_170 = arith.constant 1.000000e+00 : f32
    %883 = vector.broadcast %cst_170 : f32 to vector<8x1xf32>
    %884 = arith.maximumf %882, %883 : vector<8x1xf32>
    %cst_171 = arith.constant dense<0.000000e+00> : vector<8x20xf32>
    %885 = tpu.matmul %880, %751, %cst_171 {dimension_numbers = #tpu.dot_dimension_numbers<[1], [0], [0], [1], [0, 0, 1, 1], [], []>} : vector<8x8xf32>, vector<8x20xf32>, vector<8x20xf32> -> vector<8x20xf32>
    %886 = vector.broadcast %884 : vector<8x1xf32> to vector<8x20xf32>
    %887 = arith.divf %885, %886 : vector<8x20xf32>
    %c0_172 = arith.constant 0 : index
    %c0_173 = arith.constant 0 : index
    %888 = vector.load %arg10[%c0_172, %c0_173] : memref<20x15xf32, #tpu.memory_space<vmem>>, vector<20x15xf32>
    %cst_174 = arith.constant dense<0.000000e+00> : vector<8x15xf32>
    %889 = tpu.matmul %887, %888, %cst_174 {dimension_numbers = #tpu.dot_dimension_numbers<[1], [0], [0], [1], [0, 0, 1, 1], [], []>} : vector<8x20xf32>, vector<20x15xf32>, vector<8x15xf32> -> vector<8x15xf32>
    %c0_175 = arith.constant 0 : index
    %c0_176 = arith.constant 0 : index
    %890 = vector.load %arg11[%c0_175, %c0_176] : memref<1x15xf32, #tpu.memory_space<vmem>>, vector<1x15xf32>
    %891 = vector.broadcast %890 : vector<1x15xf32> to vector<8x15xf32>
    %892 = arith.addf %889, %891 : vector<8x15xf32>
    %c0_177 = arith.constant 0 : index
    %c0_178 = arith.constant 0 : index
    %893 = vector.load %arg12[%c0_177, %c0_178] : memref<20x15xf32, #tpu.memory_space<vmem>>, vector<20x15xf32>
    %cst_179 = arith.constant dense<0.000000e+00> : vector<8x15xf32>
    %894 = tpu.matmul %751, %893, %cst_179 {dimension_numbers = #tpu.dot_dimension_numbers<[1], [0], [0], [1], [0, 0, 1, 1], [], []>} : vector<8x20xf32>, vector<20x15xf32>, vector<8x15xf32> -> vector<8x15xf32>
    %895 = arith.addf %892, %894 : vector<8x15xf32>
    %cst_180 = arith.constant 0.000000e+00 : f32
    %896 = vector.broadcast %cst_180 : f32 to vector<8x15xf32>
    %897 = arith.maximumf %895, %896 : vector<8x15xf32>
    %cst_181 = arith.constant dense<0.000000e+00> : vector<8x15xf32>
    %898 = tpu.matmul %880, %897, %cst_181 {dimension_numbers = #tpu.dot_dimension_numbers<[1], [0], [0], [1], [0, 0, 1, 1], [], []>} : vector<8x8xf32>, vector<8x15xf32>, vector<8x15xf32> -> vector<8x15xf32>
    %899 = vector.broadcast %884 : vector<8x1xf32> to vector<8x15xf32>
    %900 = arith.divf %898, %899 : vector<8x15xf32>
    %c0_182 = arith.constant 0 : index
    %c0_183 = arith.constant 0 : index
    %901 = vector.load %arg13[%c0_182, %c0_183] : memref<15x20xf32, #tpu.memory_space<vmem>>, vector<15x20xf32>
    %cst_184 = arith.constant dense<0.000000e+00> : vector<8x20xf32>
    %902 = tpu.matmul %900, %901, %cst_184 {dimension_numbers = #tpu.dot_dimension_numbers<[1], [0], [0], [1], [0, 0, 1, 1], [], []>} : vector<8x15xf32>, vector<15x20xf32>, vector<8x20xf32> -> vector<8x20xf32>
    %c0_185 = arith.constant 0 : index
    %c0_186 = arith.constant 0 : index
    %903 = vector.load %arg14[%c0_185, %c0_186] : memref<1x20xf32, #tpu.memory_space<vmem>>, vector<1x20xf32>
    %904 = vector.broadcast %903 : vector<1x20xf32> to vector<8x20xf32>
    %905 = arith.addf %902, %904 : vector<8x20xf32>
    %c0_187 = arith.constant 0 : index
    %c0_188 = arith.constant 0 : index
    %906 = vector.load %arg15[%c0_187, %c0_188] : memref<15x20xf32, #tpu.memory_space<vmem>>, vector<15x20xf32>
    %cst_189 = arith.constant dense<0.000000e+00> : vector<8x20xf32>
    %907 = tpu.matmul %897, %906, %cst_189 {dimension_numbers = #tpu.dot_dimension_numbers<[1], [0], [0], [1], [0, 0, 1, 1], [], []>} : vector<8x15xf32>, vector<15x20xf32>, vector<8x20xf32> -> vector<8x20xf32>
    %908 = arith.addf %905, %907 : vector<8x20xf32>
    %c0_190 = arith.constant 0 : index
    %c0_191 = arith.constant 0 : index
    %909 = vector.load %arg20[%c0_190, %c0_191] : memref<8x20xf32, #tpu.memory_space<vmem>>, vector<8x20xf32>
    tpu.vector_store %arg20[%c0_190, %c0_191], %908 {strides = array<i32>} : memref<8x20xf32, #tpu.memory_space<vmem>>, vector<8x20xf32>,
    %c0_192 = arith.constant 0 : index
    %c0_193 = arith.constant 0 : index
    %910 = vector.load %arg16[%c0_192, %c0_193] : memref<20x3xf32, #tpu.memory_space<vmem>>, vector<20x3xf32>
    %cst_194 = arith.constant dense<0.000000e+00> : vector<8x3xf32>
    %911 = tpu.matmul %908, %910, %cst_194 {dimension_numbers = #tpu.dot_dimension_numbers<[1], [0], [0], [1], [0, 0, 1, 1], [], []>} : vector<8x20xf32>, vector<20x3xf32>, vector<8x3xf32> -> vector<8x3xf32>
    %c0_195 = arith.constant 0 : index
    %c0_196 = arith.constant 0 : index
    %912 = vector.load %arg17[%c0_195, %c0_196] : memref<1x3xf32, #tpu.memory_space<vmem>>, vector<1x3xf32>
    %913 = vector.broadcast %912 : vector<1x3xf32> to vector<8x3xf32>
    %914 = arith.addf %911, %913 : vector<8x3xf32>
    %cst_197 = arith.constant dense<0xFF800000> : vector<8xf32>
    %915 = vector.multi_reduction <maximumf>, %914, %cst_197 [1] : vector<8x3xf32> to vector<8xf32>
    %916 = vector.shape_cast %915 : vector<8xf32> to vector<8x1xf32>
    %917 = vector.broadcast %916 : vector<8x1xf32> to vector<8x3xf32>
    %918 = arith.subf %914, %917 : vector<8x3xf32>
    %919 = math.exp %918 : vector<8x3xf32>
    %cst_198 = arith.constant dense<0.000000e+00> : vector<8xf32>
    %920 = vector.multi_reduction <add>, %919, %cst_198 [1] : vector<8x3xf32> to vector<8xf32>
    %921 = vector.shape_cast %920 : vector<8xf32> to vector<8x1xf32>
    %922 = vector.broadcast %921 : vector<8x1xf32> to vector<8x3xf32>
    %923 = arith.divf %919, %922 : vector<8x3xf32>
    %c0_199 = arith.constant 0 : index
    %c0_200 = arith.constant 0 : index
    %924 = vector.load %arg18[%c0_199, %c0_200] : memref<8x3xf32, #tpu.memory_space<vmem>>, vector<8x3xf32>
    tpu.vector_store %arg18[%c0_199, %c0_200], %923 {strides = array<i32>} : memref<8x3xf32, #tpu.memory_space<vmem>>, vector<8x3xf32>,
    return
  }
}

</mosaic_0001>

<llo_original>
// kernel: gnn_lstm_forward.1
$region0: #{gnn_lstm_forward.1}
  #allocation0 [shape = 'u32[]', space=smem, size = 0x4, offset = 0x4, fixed_abs, tag = 'smem constant byte address 0x4 - core index']
  #allocation1 [shape = 'u32[72,128]{1,0:T(1,128)}', space=vmem, size = 0x9000, scoped, tag = 'internal scratch']
  #allocation2 [shape = 'f32[1,1]{1,0:T(1,128)S(1)}', space=vmem, size = 0x200, scoped, tag = 'scoped memory for gnn_lstm_forward.1']
  %s0 = inlined_call_operand.vmem [shape: f32[64,5], index: 0, kind: input, shape index: {}]
  %s1 = inlined_call_operand.vmem [shape: f32[5,20], index: 1, kind: input, shape index: {}]
  %s2 = inlined_call_operand.vmem [shape: f32[4,20,80], index: 2, kind: input, shape index: {}]
  %s3 = inlined_call_operand.vmem [shape: f32[4,20,80], index: 3, kind: input, shape index: {}]
  %s4 = inlined_call_operand.vmem [shape: f32[4,1,80], index: 4, kind: input, shape index: {}]
  %s5 = inlined_call_operand.vmem [shape: f32[20,64], index: 5, kind: input, shape index: {}]
  %s6 = inlined_call_operand.vmem [shape: f32[1,64], index: 6, kind: input, shape index: {}]
  %s7 = inlined_call_operand.vmem [shape: f32[64,1], index: 7, kind: input, shape index: {}]
  %s8 = inlined_call_operand.<no memory space> [shape: f32[1,1], index: 8, kind: input, shape index: {}]
  %s9 = inlined_call_operand.vmem [shape: f32[8,3], index: 9, kind: input, shape index: {}]
  %s10 = inlined_call_operand.vmem [shape: f32[20,15], index: 10, kind: input, shape index: {}]
  %s11 = inlined_call_operand.vmem [shape: f32[1,15], index: 11, kind: input, shape index: {}]
  %s12 = inlined_call_operand.vmem [shape: f32[20,15], index: 12, kind: input, shape index: {}]
  %s13 = inlined_call_operand.vmem [shape: f32[15,20], index: 13, kind: input, shape index: {}]
  %s14 = inlined_call_operand.vmem [shape: f32[1,20], index: 14, kind: input, shape index: {}]
  %s15 = inlined_call_operand.vmem [shape: f32[15,20], index: 15, kind: input, shape index: {}]
  %s16 = inlined_call_operand.vmem [shape: f32[20,3], index: 16, kind: input, shape index: {}]
  %s17 = inlined_call_operand.vmem [shape: f32[1,3], index: 17, kind: input, shape index: {}]
  %s18 = inlined_call_operand.vmem [shape: f32[8,3], index: 18, kind: output, shape index: {0}]
  %s19 = inlined_call_operand.hbm [shape: f32[8,20], index: 19, kind: output, shape index: {1}]
  %s20 = inlined_call_operand.hbm [shape: f32[8,20], index: 20, kind: output, shape index: {2}]
  %s21 = inlined_call_operand.hbm [shape: f32[8,8], index: 21, kind: output, shape index: {3}]
  %22 = xla_tuple %s18, %s19, %s20, %s21
  %s23 = sld [smem:[#allocation0]]
  $region106: #{gnn_lstm_forward.1} parent=0
    _
  %s25 = ssub.s32 1, %s23
  %s26 = scalar_select 0, %s25, %s23
  %v27 = vstv %s8
  %28 = vst [vmem:[#allocation2] sm:$0x1] %v27
  $region1: #{gnn_lstm_forward.1} parent=0
    #allocation3 [shape = 'u8[4096]{0}', space=vmem, size = 0x1000, scoped, tag = 'output window, operand 1, single buffered']
    #allocation4 [shape = 's32[1]{0}', space=sflag, size = 0x4, scoped, tag = 'scoped memory for gnn_lstm_forward.1']
    #allocation5 [shape = 'u8[4096]{0}', space=vmem, size = 0x1000, scoped, tag = 'output window, operand 2, single buffered']
    #allocation6 [shape = 's32[1]{0}', space=sflag, size = 0x4, scoped, tag = 'scoped memory for gnn_lstm_forward.1']
    #allocation7 [shape = 'u8[4096]{0}', space=vmem, size = 0x1000, scoped, tag = 'output window, operand 3, single buffered']
    %29 = vsyncpa [#allocation4], 0
    %30 = vsyncpa [#allocation6], 0
    // Predicated region
    $region2: #{gnn_lstm_forward.1} parent=1 // pred_check
      _
    $region3: #{gnn_lstm_forward.1} parent=1 // pred_check_branch
      %32 = sbr.rel (0) target = $region5
    $region4: #{gnn_lstm_forward.1} parent=1 // pred_region
      _
    $region5: #{gnn_lstm_forward.1} parent=1 // pred_fallthru
      _
    // Predicated region
    $region6: #{gnn_lstm_forward.1} parent=1 // pred_check
      _
    $region7: #{gnn_lstm_forward.1} parent=1 // pred_check_branch
      %34 = sbr.rel (0) target = $region9
    $region8: #{gnn_lstm_forward.1} parent=1 // pred_region
      _
    $region9: #{gnn_lstm_forward.1} parent=1 // pred_fallthru
      _
    // Predicated region
    $region10: #{gnn_lstm_forward.1} parent=1 // pred_check
      _
    $region11: #{gnn_lstm_forward.1} parent=1 // pred_check_branch
      %36 = sbr.rel (0) target = $region13
    $region12: #{gnn_lstm_forward.1} parent=1 // pred_region
      _
    $region13: #{gnn_lstm_forward.1} parent=1 // pred_fallthru
      _
    // Predicated region
    $region14: #{gnn_lstm_forward.1} parent=1 // pred_check
      _
    $region15: #{gnn_lstm_forward.1} parent=1 // pred_check_branch
      %38 = sbr.rel (0) target = $region17
    $region16: #{gnn_lstm_forward.1} parent=1 // pred_region
      _
    $region17: #{gnn_lstm_forward.1} parent=1 // pred_fallthru
      _
    // Predicated region
    $region18: #{gnn_lstm_forward.1} parent=1 // pred_check
      _
    $region19: #{gnn_lstm_forward.1} parent=1 // pred_check_branch
      %40 = sbr.rel (0) target = $region21
    $region20: #{gnn_lstm_forward.1} parent=1 // pred_region
      _
    $region21: #{gnn_lstm_forward.1} parent=1 // pred_fallthru
      _
    // Predicated region
    $region22: #{gnn_lstm_forward.1} parent=1 // pred_check
      _
    $region23: #{gnn_lstm_forward.1} parent=1 // pred_check_branch
      %42 = sbr.rel (0) target = $region25
    $region24: #{gnn_lstm_forward.1} parent=1 // pred_region
      _
    $region25: #{gnn_lstm_forward.1} parent=1 // pred_fallthru
      _
    // Predicated region
    $region26: #{gnn_lstm_forward.1} parent=1 // pred_check
      _
    $region27: #{gnn_lstm_forward.1} parent=1 // pred_check_branch
      %44 = sbr.rel (0) target = $region29
    $region28: #{gnn_lstm_forward.1} parent=1 // pred_region
      _
    $region29: #{gnn_lstm_forward.1} parent=1 // pred_fallthru
      _
    // Predicated region
    $region30: #{gnn_lstm_forward.1} parent=1 // pred_check
      _
    $region31: #{gnn_lstm_forward.1} parent=1 // pred_check_branch
      %46 = sbr.rel (0) target = $region33
    $region32: #{gnn_lstm_forward.1} parent=1 // pred_region
      _
    $region33: #{gnn_lstm_forward.1} parent=1 // pred_fallthru
      _
    // Predicated region
    $region34: #{gnn_lstm_forward.1} parent=1 // pred_check
      _
    $region35: #{gnn_lstm_forward.1} parent=1 // pred_check_branch
      %48 = sbr.rel (0) target = $region37
    $region36: #{gnn_lstm_forward.1} parent=1 // pred_region
      _
    $region37: #{gnn_lstm_forward.1} parent=1 // pred_fallthru
      _
    // Predicated region
    $region38: #{gnn_lstm_forward.1} parent=1 // pred_check
      _
    $region39: #{gnn_lstm_forward.1} parent=1 // pred_check_branch
      %50 = sbr.rel (0) target = $region41
    $region40: #{gnn_lstm_forward.1} parent=1 // pred_region
      _
    $region41: #{gnn_lstm_forward.1} parent=1 // pred_fallthru
      _
    // Predicated region
    $region42: #{gnn_lstm_forward.1} parent=1 // pred_check
      _
    $region43: #{gnn_lstm_forward.1} parent=1 // pred_check_branch
      %52 = sbr.rel (0) target = $region45
    $region44: #{gnn_lstm_forward.1} parent=1 // pred_region
      _
    $region45: #{gnn_lstm_forward.1} parent=1 // pred_fallthru
      _
    // Predicated region
    $region46: #{gnn_lstm_forward.1} parent=1 // pred_check
      _
    $region47: #{gnn_lstm_forward.1} parent=1 // pred_check_branch
      %54 = sbr.rel (0) target = $region49
    $region48: #{gnn_lstm_forward.1} parent=1 // pred_region
      _
    $region49: #{gnn_lstm_forward.1} parent=1 // pred_fallthru
      _
    // Predicated region
    $region50: #{gnn_lstm_forward.1} parent=1 // pred_check
      _
    $region51: #{gnn_lstm_forward.1} parent=1 // pred_check_branch
      %56 = sbr.rel (0) target = $region53
    $region52: #{gnn_lstm_forward.1} parent=1 // pred_region
      _
    $region53: #{gnn_lstm_forward.1} parent=1 // pred_fallthru
      _
    // Predicated region
    $region54: #{gnn_lstm_forward.1} parent=1 // pred_check
      _
    $region55: #{gnn_lstm_forward.1} parent=1 // pred_check_branch
      %58 = sbr.rel (0) target = $region57
    $region56: #{gnn_lstm_forward.1} parent=1 // pred_region
      _
    $region57: #{gnn_lstm_forward.1} parent=1 // pred_fallthru
      _
    // Predicated region
    $region58: #{gnn_lstm_forward.1} parent=1 // pred_check
      _
    $region59: #{gnn_lstm_forward.1} parent=1 // pred_check_branch
      %60 = sbr.rel (0) target = $region61
    $region60: #{gnn_lstm_forward.1} parent=1 // pred_region
      _
    $region61: #{gnn_lstm_forward.1} parent=1 // pred_fallthru
      _
    // Predicated region
    $region62: #{gnn_lstm_forward.1} parent=1 // pred_check
      _
    $region63: #{gnn_lstm_forward.1} parent=1 // pred_check_branch
      %62 = sbr.rel (0) target = $region65
    $region64: #{gnn_lstm_forward.1} parent=1 // pred_region
      _
    $region65: #{gnn_lstm_forward.1} parent=1 // pred_fallthru
      _
    // Predicated region
    $region66: #{gnn_lstm_forward.1} parent=1 // pred_check
      _
    $region67: #{gnn_lstm_forward.1} parent=1 // pred_check_branch
      %64 = sbr.rel (0) target = $region69
    $region68: #{gnn_lstm_forward.1} parent=1 // pred_region
      _
    $region69: #{gnn_lstm_forward.1} parent=1 // pred_fallthru
      _
    // Predicated region
    $region70: #{gnn_lstm_forward.1} parent=1 // pred_check
      _
    $region71: #{gnn_lstm_forward.1} parent=1 // pred_check_branch
      %66 = sbr.rel (0) target = $region73
    $region72: #{gnn_lstm_forward.1} parent=1 // pred_region
      _
    $region73: #{gnn_lstm_forward.1} parent=1 // pred_fallthru
      _
    %v67 = vld [vmem:[%s0] sm:$0xff]
    %v68 = vld [vmem:[%s0 + $0x8] sm:$0xff]
    %v69 = vld [vmem:[%s0 + $0x10] sm:$0xff]
    %v70 = vld [vmem:[%s0 + $0x18] sm:$0xff]
    %v71 = vld [vmem:[%s0 + $0x20] sm:$0xff]
    %v72 = vld [vmem:[%s0 + $0x28] sm:$0xff]
    %v73 = vld [vmem:[%s0 + $0x30] sm:$0xff]
    %v74 = vld [vmem:[%s0 + $0x38] sm:$0xff]
    %v75 = vld [vmem:[%s1] sm:$0x1f]
    %vm76 = vcmask 39936
    %v78 = vsel %vm76, %v67, 0
    %v81 = vsel %vm76, %v68, 0
    %v84 = vsel %vm76, %v69, 0
    %v87 = vsel %vm76, %v70, 0
    %v90 = vsel %vm76, %v71, 0
    %v93 = vsel %vm76, %v72, 0
    %v96 = vsel %vm76, %v73, 0
    %v99 = vsel %vm76, %v74, 0
    %vm101 = vcmask 1044480
    %v103 = vsel %vm101, %v75, 0
    %105 = vmatpush.msra.mxu0 0.0
    %106 = vmatpush.msra.mxu0 0.0
    %107 = vmatpush.msra.mxu0 0.0
    %108 = vmatpush.msra.mxu0 0.0
    %109 = vmatpush.msra.mxu0 0.0
    %110 = vmatpush.msra.mxu0 0.0
    %111 = vmatpush.msra.mxu0 0.0
    %112 = vmatpush.msra.mxu0 0.0
    %113 = vmatpush.msra.mxu0 0.0
    %114 = vmatpush.msra.mxu0 0.0
    %115 = vmatpush.msra.mxu0 0.0
    %116 = vmatpush.msra.mxu0 0.0
    %117 = vmatpush.msra.mxu0 0.0
    %118 = vmatpush.msra.mxu0 0.0
    %119 = vmatpush.msra.mxu0 0.0
    %120 = vmatpush.msra.mxu0 %v103
    %121 = vmatmul.f32.gmra.mxu0 %v78
    %v122 = vpop.f32.mrf.mxu0
    %v123 = vadd.f32 0.0, %v122
    %124 = vmatmul.f32.gmra.mxu0 %v81
    %v125 = vpop.f32.mrf.mxu0
    %v126 = vadd.f32 0.0, %v125
    %127 = vmatmul.f32.gmra.mxu0 %v84
    %v128 = vpop.f32.mrf.mxu0
    %v129 = vadd.f32 0.0, %v128
    %130 = vmatmul.f32.gmra.mxu0 %v87
    %v131 = vpop.f32.mrf.mxu0
    %v132 = vadd.f32 0.0, %v131
    %133 = vmatmul.f32.gmra.mxu0 %v90
    %v134 = vpop.f32.mrf.mxu0
    %v135 = vadd.f32 0.0, %v134
    %136 = vmatmul.f32.gmra.mxu0 %v93
    %v137 = vpop.f32.mrf.mxu0
    %v138 = vadd.f32 0.0, %v137
    %139 = vmatmul.f32.gmra.mxu0 %v96
    %v140 = vpop.f32.mrf.mxu0
    %v141 = vadd.f32 0.0, %v140
    %142 = vmatmul.f32.gmra.mxu0 %v99
    %v143 = vpop.f32.mrf.mxu0
    %v144 = vadd.f32 0.0, %v143
    %145 = vdwg.mxu0
    %v146 = vmax.f32 %v123, 0.0
    %v147 = vmax.f32 %v126, 0.0
    %v148 = vmax.f32 %v129, 0.0
    %v149 = vmax.f32 %v132, 0.0
    %v150 = vmax.f32 %v135, 0.0
    %v151 = vmax.f32 %v138, 0.0
    %v152 = vmax.f32 %v141, 0.0
    %v153 = vmax.f32 %v144, 0.0
    %v154 = vld [vmem:[%s2] sm:$0xff]
    %v155 = vld [vmem:[%s2 + $0x8] sm:$0xff]
    %v156 = vld [vmem:[%s2 + $0x10] sm:$0xf]
    %v157 = vld [vmem:[%s3] sm:$0xff]
    %v158 = vld [vmem:[%s3 + $0x8] sm:$0xff]
    %v159 = vld [vmem:[%s3 + $0x10] sm:$0xf]
    %v160 = vld [vmem:[%s4] sm:$0x1]
    %v162 = vperm.slane %v160, 0
    %vm164 = vcmask 162816
    %v166 = vsel %vm164, %v146, 0
    %v169 = vsel %vm164, %v147, 0
    %v172 = vsel %vm164, %v148, 0
    %v175 = vsel %vm164, %v149, 0
    %v178 = vsel %vm164, %v150, 0
    %v181 = vsel %vm164, %v151, 0
    %v184 = vsel %vm164, %v152, 0
    %v187 = vsel %vm164, %v153, 0
    %vm189 = vcmask 1043456
    %v191 = vsel %vm189, %v156, 0
    %193 = vmatpush.msra.mxu0 0.0
    %194 = vmatpush.msra.mxu0 0.0
    %195 = vmatpush.msra.mxu0 0.0
    %196 = vmatpush.msra.mxu0 0.0
    %197 = vmatpush.msra.mxu0 0.0
    %198 = vmatpush.msra.mxu0 0.0
    %199 = vmatpush.msra.mxu0 0.0
    %200 = vmatpush.msra.mxu0 0.0
    %201 = vmatpush.msra.mxu0 0.0
    %202 = vmatpush.msra.mxu0 0.0
    %203 = vmatpush.msra.mxu0 0.0
    %204 = vmatpush.msra.mxu0 0.0
    %205 = vmatpush.msra.mxu0 0.0
    %206 = vmatpush.msra.mxu0 %v191
    %207 = vmatpush.msra.mxu0 %v155
    %208 = vmatpush.msra.mxu0 %v154
    %209 = vmatmul.f32.gmra.mxu0 %v166
    %v210 = vpop.f32.mrf.mxu0
    %v211 = vadd.f32 %v162, %v210
    %212 = vmatmul.f32.gmra.mxu0 %v169
    %v213 = vpop.f32.mrf.mxu0
    %v214 = vadd.f32 %v162, %v213
    %215 = vmatmul.f32.gmra.mxu0 %v172
    %v216 = vpop.f32.mrf.mxu0
    %v217 = vadd.f32 %v162, %v216
    %218 = vmatmul.f32.gmra.mxu0 %v175
    %v219 = vpop.f32.mrf.mxu0
    %v220 = vadd.f32 %v162, %v219
    %221 = vmatmul.f32.gmra.mxu0 %v178
    %v222 = vpop.f32.mrf.mxu0
    %v223 = vadd.f32 %v162, %v222
    %224 = vmatmul.f32.gmra.mxu0 %v181
    %v225 = vpop.f32.mrf.mxu0
    %v226 = vadd.f32 %v162, %v225
    %227 = vmatmul.f32.gmra.mxu0 %v184
    %v228 = vpop.f32.mrf.mxu0
    %v229 = vadd.f32 %v162, %v228
    %230 = vmatmul.f32.gmra.mxu0 %v187
    %v231 = vpop.f32.mrf.mxu0
    %v232 = vadd.f32 %v162, %v231
    %233 = vdwg.mxu0
    %v235 = vsel %vm164, 0.0, 0
    %v238 = vsel %vm189, %v159, 0
    %240 = vmatpush.msra.mxu0 0.0
    %241 = vmatpush.msra.mxu0 0.0
    %242 = vmatpush.msra.mxu0 0.0
    %243 = vmatpush.msra.mxu0 0.0
    %244 = vmatpush.msra.mxu0 0.0
    %245 = vmatpush.msra.mxu0 0.0
    %246 = vmatpush.msra.mxu0 0.0
    %247 = vmatpush.msra.mxu0 0.0
    %248 = vmatpush.msra.mxu0 0.0
    %249 = vmatpush.msra.mxu0 0.0
    %250 = vmatpush.msra.mxu0 0.0
    %251 = vmatpush.msra.mxu0 0.0
    %252 = vmatpush.msra.mxu0 0.0
    %253 = vmatpush.msra.mxu0 %v238
    %254 = vmatpush.msra.mxu0 %v158
    %255 = vmatpush.msra.mxu0 %v157
    %256 = vmatmul.f32.gmra.mxu0 %v235
    %v257 = vpop.f32.mrf.mxu0
    %v258 = vadd.f32 0.0, %v257
    %259 = vdwg.mxu0
    %v260 = vadd.f32 %v211, %v258
    %v261 = vxor.u32 %v260, 2147483648
    %v262 = vmul.f32 %v261, 1.442695
    %v263 = vpow.pop %v262
    %v264 = vadd.f32 %v263, 1.0
    %v265 = vrcp.pop %v264
    %v266 = vmul.f32 %v264, %v265
    %v267 = vsub.f32 1.0, %v266
    %v268 = vmul.f32 %v265, %v267
    %v269 = vadd.f32 %v265, %v268
    %vm270 = vweird.f32 %v264
    %vm271 = vweird.f32 %v265
    %vm272 = vmor %vm270, %vm271
    %v273 = vsel %vm272, %v265, %v269
    %v274 = vand.u32 2147483647, %v264
    %vm275 = vcmp.eq.f32.partialorder %v274, 8.507059e+37
    %v276 = vand.u32 %v264, 2147483648
    %v277 = vor.u32 1.1754944e-38, %v276
    %v278 = vsel %vm275, %v277, %v273
    %v279 = vmul.f32 1.0, %v278
    %v280 = vtanh.pop %v260
    %v281 = vmul.f32 %v279, 0.0
    %283 = vrot.lane.b32.xlu0 %v280, 68
    %v284 = vpop.permute.xlu0 %283
    %v286 = vmul.f32 %v279, %v284
    %288 = vrot.lane.b32.xlu0 %v286, 20
    %v289 = vpop.permute.xlu0 %288
    %v291 = vadd.f32 %v281, %v289
    %v292 = vtanh.pop %v291
    %294 = vrot.lane.b32.xlu0 %v292, 20
    %v295 = vpop.permute.xlu0 %294
    %v297 = vmul.f32 %v279, %v295
    %299 = vrot.lane.b32.xlu0 %v297, 88
    %v300 = vpop.permute.xlu0 %299
    %v301 = vsel %vm164, %v300, 0
    %303 = vmatpush.msra.mxu0 0.0
    %304 = vmatpush.msra.mxu0 0.0
    %305 = vmatpush.msra.mxu0 0.0
    %306 = vmatpush.msra.mxu0 0.0
    %307 = vmatpush.msra.mxu0 0.0
    %308 = vmatpush.msra.mxu0 0.0
    %309 = vmatpush.msra.mxu0 0.0
    %310 = vmatpush.msra.mxu0 0.0
    %311 = vmatpush.msra.mxu0 0.0
    %312 = vmatpush.msra.mxu0 0.0
    %313 = vmatpush.msra.mxu0 0.0
    %314 = vmatpush.msra.mxu0 0.0
    %315 = vmatpush.msra.mxu0 0.0
    %316 = vmatpush.msra.mxu0 %v238
    %317 = vmatpush.msra.mxu0 %v158
    %318 = vmatpush.msra.mxu0 %v157
    %319 = vmatmul.f32.gmra.mxu0 %v301
    %v320 = vpop.f32.mrf.mxu0
    %v321 = vadd.f32 0.0, %v320
    %322 = vdwg.mxu0
    %v323 = vadd.f32 %v214, %v321
    %v324 = vxor.u32 %v323, 2147483648
    %v325 = vmul.f32 %v324, 1.442695
    %v326 = vpow.pop %v325
    %v327 = vadd.f32 %v326, 1.0
    %v328 = vrcp.pop %v327
    %v329 = vmul.f32 %v327, %v328
    %v330 = vsub.f32 1.0, %v329
    %v331 = vmul.f32 %v328, %v330
    %v332 = vadd.f32 %v328, %v331
    %vm333 = vweird.f32 %v327
    %vm334 = vweird.f32 %v328
    %vm335 = vmor %vm333, %vm334
    %v336 = vsel %vm335, %v328, %v332
    %v337 = vand.u32 2147483647, %v327
    %vm338 = vcmp.eq.f32.partialorder %v337, 8.507059e+37
    %v339 = vand.u32 %v327, 2147483648
    %v340 = vor.u32 1.1754944e-38, %v339
    %v341 = vsel %vm338, %v340, %v336
    %v342 = vmul.f32 1.0, %v341
    %v343 = vtanh.pop %v323
    %v344 = vmul.f32 %v342, %v291
    %346 = vrot.lane.b32.xlu0 %v343, 68
    %v347 = vpop.permute.xlu0 %346
    %v349 = vmul.f32 %v342, %v347
    %351 = vrot.lane.b32.xlu0 %v349, 20
    %v352 = vpop.permute.xlu0 %351
    %v354 = vadd.f32 %v344, %v352
    %v355 = vtanh.pop %v354
    %357 = vrot.lane.b32.xlu0 %v355, 20
    %v358 = vpop.permute.xlu0 %357
    %v360 = vmul.f32 %v342, %v358
    %362 = vrot.lane.b32.xlu0 %v360, 88
    %v363 = vpop.permute.xlu0 %362
    %v364 = vsel %vm164, %v363, 0
    %366 = vmatpush.msra.mxu0 0.0
    %367 = vmatpush.msra.mxu0 0.0
    %368 = vmatpush.msra.mxu0 0.0
    %369 = vmatpush.msra.mxu0 0.0
    %370 = vmatpush.msra.mxu0 0.0
    %371 = vmatpush.msra.mxu0 0.0
    %372 = vmatpush.msra.mxu0 0.0
    %373 = vmatpush.msra.mxu0 0.0
    %374 = vmatpush.msra.mxu0 0.0
    %375 = vmatpush.msra.mxu0 0.0
    %376 = vmatpush.msra.mxu0 0.0
    %377 = vmatpush.msra.mxu0 0.0
    %378 = vmatpush.msra.mxu0 0.0
    %379 = vmatpush.msra.mxu0 %v238
    %380 = vmatpush.msra.mxu0 %v158
    %381 = vmatpush.msra.mxu0 %v157
    %382 = vmatmul.f32.gmra.mxu0 %v364
    %v383 = vpop.f32.mrf.mxu0
    %v384 = vadd.f32 0.0, %v383
    %385 = vdwg.mxu0
    %v386 = vadd.f32 %v217, %v384
    %v387 = vxor.u32 %v386, 2147483648
    %v388 = vmul.f32 %v387, 1.442695
    %v389 = vpow.pop %v388
    %v390 = vadd.f32 %v389, 1.0
    %v391 = vrcp.pop %v390
    %v392 = vmul.f32 %v390, %v391
    %v393 = vsub.f32 1.0, %v392
    %v394 = vmul.f32 %v391, %v393
    %v395 = vadd.f32 %v391, %v394
    %vm396 = vweird.f32 %v390
    %vm397 = vweird.f32 %v391
    %vm398 = vmor %vm396, %vm397
    %v399 = vsel %vm398, %v391, %v395
    %v400 = vand.u32 2147483647, %v390
    %vm401 = vcmp.eq.f32.partialorder %v400, 8.507059e+37
    %v402 = vand.u32 %v390, 2147483648
    %v403 = vor.u32 1.1754944e-38, %v402
    %v404 = vsel %vm401, %v403, %v399
    %v405 = vmul.f32 1.0, %v404
    %v406 = vtanh.pop %v386
    %v407 = vmul.f32 %v405, %v354
    %409 = vrot.lane.b32.xlu0 %v406, 68
    %v410 = vpop.permute.xlu0 %409
    %v412 = vmul.f32 %v405, %v410
    %414 = vrot.lane.b32.xlu0 %v412, 20
    %v415 = vpop.permute.xlu0 %414
    %v417 = vadd.f32 %v407, %v415
    %v418 = vtanh.pop %v417
    %420 = vrot.lane.b32.xlu0 %v418, 20
    %v421 = vpop.permute.xlu0 %420
    %v423 = vmul.f32 %v405, %v421
    %425 = vrot.lane.b32.xlu0 %v423, 88
    %v426 = vpop.permute.xlu0 %425
    %v427 = vsel %vm164, %v426, 0
    %429 = vmatpush.msra.mxu0 0.0
    %430 = vmatpush.msra.mxu0 0.0
    %431 = vmatpush.msra.mxu0 0.0
    %432 = vmatpush.msra.mxu0 0.0
    %433 = vmatpush.msra.mxu0 0.0
    %434 = vmatpush.msra.mxu0 0.0
    %435 = vmatpush.msra.mxu0 0.0
    %436 = vmatpush.msra.mxu0 0.0
    %437 = vmatpush.msra.mxu0 0.0
    %438 = vmatpush.msra.mxu0 0.0
    %439 = vmatpush.msra.mxu0 0.0
    %440 = vmatpush.msra.mxu0 0.0
    %441 = vmatpush.msra.mxu0 0.0
    %442 = vmatpush.msra.mxu0 %v238
    %443 = vmatpush.msra.mxu0 %v158
    %444 = vmatpush.msra.mxu0 %v157
    %445 = vmatmul.f32.gmra.mxu0 %v427
    %v446 = vpop.f32.mrf.mxu0
    %v447 = vadd.f32 0.0, %v446
    %448 = vdwg.mxu0
    %v449 = vadd.f32 %v220, %v447
    %v450 = vxor.u32 %v449, 2147483648
    %v451 = vmul.f32 %v450, 1.442695
    %v452 = vpow.pop %v451
    %v453 = vadd.f32 %v452, 1.0
    %v454 = vrcp.pop %v453
    %v455 = vmul.f32 %v453, %v454
    %v456 = vsub.f32 1.0, %v455
    %v457 = vmul.f32 %v454, %v456
    %v458 = vadd.f32 %v454, %v457
    %vm459 = vweird.f32 %v453
    %vm460 = vweird.f32 %v454
    %vm461 = vmor %vm459, %vm460
    %v462 = vsel %vm461, %v454, %v458
    %v463 = vand.u32 2147483647, %v453
    %vm464 = vcmp.eq.f32.partialorder %v463, 8.507059e+37
    %v465 = vand.u32 %v453, 2147483648
    %v466 = vor.u32 1.1754944e-38, %v465
    %v467 = vsel %vm464, %v466, %v462
    %v468 = vmul.f32 1.0, %v467
    %v469 = vtanh.pop %v449
    %v470 = vmul.f32 %v468, %v417
    %472 = vrot.lane.b32.xlu0 %v469, 68
    %v473 = vpop.permute.xlu0 %472
    %v475 = vmul.f32 %v468, %v473
    %477 = vrot.lane.b32.xlu0 %v475, 20
    %v478 = vpop.permute.xlu0 %477
    %v480 = vadd.f32 %v470, %v478
    %v481 = vtanh.pop %v480
    %483 = vrot.lane.b32.xlu0 %v481, 20
    %v484 = vpop.permute.xlu0 %483
    %v486 = vmul.f32 %v468, %v484
    %488 = vrot.lane.b32.xlu0 %v486, 88
    %v489 = vpop.permute.xlu0 %488
    %v490 = vsel %vm164, %v489, 0
    %492 = vmatpush.msra.mxu0 0.0
    %493 = vmatpush.msra.mxu0 0.0
    %494 = vmatpush.msra.mxu0 0.0
    %495 = vmatpush.msra.mxu0 0.0
    %496 = vmatpush.msra.mxu0 0.0
    %497 = vmatpush.msra.mxu0 0.0
    %498 = vmatpush.msra.mxu0 0.0
    %499 = vmatpush.msra.mxu0 0.0
    %500 = vmatpush.msra.mxu0 0.0
    %501 = vmatpush.msra.mxu0 0.0
    %502 = vmatpush.msra.mxu0 0.0
    %503 = vmatpush.msra.mxu0 0.0
    %504 = vmatpush.msra.mxu0 0.0
    %505 = vmatpush.msra.mxu0 %v238
    %506 = vmatpush.msra.mxu0 %v158
    %507 = vmatpush.msra.mxu0 %v157
    %508 = vmatmul.f32.gmra.mxu0 %v490
    %v509 = vpop.f32.mrf.mxu0
    %v510 = vadd.f32 0.0, %v509
    %511 = vdwg.mxu0
    %v512 = vadd.f32 %v223, %v510
    %v513 = vxor.u32 %v512, 2147483648
    %v514 = vmul.f32 %v513, 1.442695
    %v515 = vpow.pop %v514
    %v516 = vadd.f32 %v515, 1.0
    %v517 = vrcp.pop %v516
    %v518 = vmul.f32 %v516, %v517
    %v519 = vsub.f32 1.0, %v518
    %v520 = vmul.f32 %v517, %v519
    %v521 = vadd.f32 %v517, %v520
    %vm522 = vweird.f32 %v516
    %vm523 = vweird.f32 %v517
    %vm524 = vmor %vm522, %vm523
    %v525 = vsel %vm524, %v517, %v521
    %v526 = vand.u32 2147483647, %v516
    %vm527 = vcmp.eq.f32.partialorder %v526, 8.507059e+37
    %v528 = vand.u32 %v516, 2147483648
    %v529 = vor.u32 1.1754944e-38, %v528
    %v530 = vsel %vm527, %v529, %v525
    %v531 = vmul.f32 1.0, %v530
    %v532 = vtanh.pop %v512
    %v533 = vmul.f32 %v531, %v480
    %535 = vrot.lane.b32.xlu0 %v532, 68
    %v536 = vpop.permute.xlu0 %535
    %v538 = vmul.f32 %v531, %v536
    %540 = vrot.lane.b32.xlu0 %v538, 20
    %v541 = vpop.permute.xlu0 %540
    %v543 = vadd.f32 %v533, %v541
    %v544 = vtanh.pop %v543
    %546 = vrot.lane.b32.xlu0 %v544, 20
    %v547 = vpop.permute.xlu0 %546
    %v549 = vmul.f32 %v531, %v547
    %551 = vrot.lane.b32.xlu0 %v549, 88
    %v552 = vpop.permute.xlu0 %551
    %v553 = vsel %vm164, %v552, 0
    %555 = vmatpush.msra.mxu0 0.0
    %556 = vmatpush.msra.mxu0 0.0
    %557 = vmatpush.msra.mxu0 0.0
    %558 = vmatpush.msra.mxu0 0.0
    %559 = vmatpush.msra.mxu0 0.0
    %560 = vmatpush.msra.mxu0 0.0
    %561 = vmatpush.msra.mxu0 0.0
    %562 = vmatpush.msra.mxu0 0.0
    %563 = vmatpush.msra.mxu0 0.0
    %564 = vmatpush.msra.mxu0 0.0
    %565 = vmatpush.msra.mxu0 0.0
    %566 = vmatpush.msra.mxu0 0.0
    %567 = vmatpush.msra.mxu0 0.0
    %568 = vmatpush.msra.mxu0 %v238
    %569 = vmatpush.msra.mxu0 %v158
    %570 = vmatpush.msra.mxu0 %v157
    %571 = vmatmul.f32.gmra.mxu0 %v553
    %v572 = vpop.f32.mrf.mxu0
    %v573 = vadd.f32 0.0, %v572
    %574 = vdwg.mxu0
    %v575 = vadd.f32 %v226, %v573
    %v576 = vxor.u32 %v575, 2147483648
    %v577 = vmul.f32 %v576, 1.442695
    %v578 = vpow.pop %v577
    %v579 = vadd.f32 %v578, 1.0
    %v580 = vrcp.pop %v579
    %v581 = vmul.f32 %v579, %v580
    %v582 = vsub.f32 1.0, %v581
    %v583 = vmul.f32 %v580, %v582
    %v584 = vadd.f32 %v580, %v583
    %vm585 = vweird.f32 %v579
    %vm586 = vweird.f32 %v580
    %vm587 = vmor %vm585, %vm586
    %v588 = vsel %vm587, %v580, %v584
    %v589 = vand.u32 2147483647, %v579
    %vm590 = vcmp.eq.f32.partialorder %v589, 8.507059e+37
    %v591 = vand.u32 %v579, 2147483648
    %v592 = vor.u32 1.1754944e-38, %v591
    %v593 = vsel %vm590, %v592, %v588
    %v594 = vmul.f32 1.0, %v593
    %v595 = vtanh.pop %v575
    %v596 = vmul.f32 %v594, %v543
    %598 = vrot.lane.b32.xlu0 %v595, 68
    %v599 = vpop.permute.xlu0 %598
    %v601 = vmul.f32 %v594, %v599
    %603 = vrot.lane.b32.xlu0 %v601, 20
    %v604 = vpop.permute.xlu0 %603
    %v606 = vadd.f32 %v596, %v604
    %v607 = vtanh.pop %v606
    %609 = vrot.lane.b32.xlu0 %v607, 20
    %v610 = vpop.permute.xlu0 %609
    %v612 = vmul.f32 %v594, %v610
    %614 = vrot.lane.b32.xlu0 %v612, 88
    %v615 = vpop.permute.xlu0 %614
    %v616 = vsel %vm164, %v615, 0
    %618 = vmatpush.msra.mxu0 0.0
    %619 = vmatpush.msra.mxu0 0.0
    %620 = vmatpush.msra.mxu0 0.0
    %621 = vmatpush.msra.mxu0 0.0
    %622 = vmatpush.msra.mxu0 0.0
    %623 = vmatpush.msra.mxu0 0.0
    %624 = vmatpush.msra.mxu0 0.0
    %625 = vmatpush.msra.mxu0 0.0
    %626 = vmatpush.msra.mxu0 0.0
    %627 = vmatpush.msra.mxu0 0.0
    %628 = vmatpush.msra.mxu0 0.0
    %629 = vmatpush.msra.mxu0 0.0
    %630 = vmatpush.msra.mxu0 0.0
    %631 = vmatpush.msra.mxu0 %v238
    %632 = vmatpush.msra.mxu0 %v158
    %633 = vmatpush.msra.mxu0 %v157
    %634 = vmatmul.f32.gmra.mxu0 %v616
    %v635 = vpop.f32.mrf.mxu0
    %v636 = vadd.f32 0.0, %v635
    %637 = vdwg.mxu0
    %v638 = vadd.f32 %v229, %v636
    %v639 = vxor.u32 %v638, 2147483648
    %v640 = vmul.f32 %v639, 1.442695
    %v641 = vpow.pop %v640
    %v642 = vadd.f32 %v641, 1.0
    %v643 = vrcp.pop %v642
    %v644 = vmul.f32 %v642, %v643
    %v645 = vsub.f32 1.0, %v644
    %v646 = vmul.f32 %v643, %v645
    %v647 = vadd.f32 %v643, %v646
    %vm648 = vweird.f32 %v642
    %vm649 = vweird.f32 %v643
    %vm650 = vmor %vm648, %vm649
    %v651 = vsel %vm650, %v643, %v647
    %v652 = vand.u32 2147483647, %v642
    %vm653 = vcmp.eq.f32.partialorder %v652, 8.507059e+37
    %v654 = vand.u32 %v642, 2147483648
    %v655 = vor.u32 1.1754944e-38, %v654
    %v656 = vsel %vm653, %v655, %v651
    %v657 = vmul.f32 1.0, %v656
    %v658 = vtanh.pop %v638
    %v659 = vmul.f32 %v657, %v606
    %661 = vrot.lane.b32.xlu0 %v658, 68
    %v662 = vpop.permute.xlu0 %661
    %v664 = vmul.f32 %v657, %v662
    %666 = vrot.lane.b32.xlu0 %v664, 20
    %v667 = vpop.permute.xlu0 %666
    %v669 = vadd.f32 %v659, %v667
    %v670 = vtanh.pop %v669
    %672 = vrot.lane.b32.xlu0 %v670, 20
    %v673 = vpop.permute.xlu0 %672
    %v675 = vmul.f32 %v657, %v673
    %677 = vrot.lane.b32.xlu0 %v675, 88
    %v678 = vpop.permute.xlu0 %677
    %v679 = vsel %vm164, %v678, 0
    %681 = vmatpush.msra.mxu0 0.0
    %682 = vmatpush.msra.mxu0 0.0
    %683 = vmatpush.msra.mxu0 0.0
    %684 = vmatpush.msra.mxu0 0.0
    %685 = vmatpush.msra.mxu0 0.0
    %686 = vmatpush.msra.mxu0 0.0
    %687 = vmatpush.msra.mxu0 0.0
    %688 = vmatpush.msra.mxu0 0.0
    %689 = vmatpush.msra.mxu0 0.0
    %690 = vmatpush.msra.mxu0 0.0
    %691 = vmatpush.msra.mxu0 0.0
    %692 = vmatpush.msra.mxu0 0.0
    %693 = vmatpush.msra.mxu0 0.0
    %694 = vmatpush.msra.mxu0 %v238
    %695 = vmatpush.msra.mxu0 %v158
    %696 = vmatpush.msra.mxu0 %v157
    %697 = vmatmul.f32.gmra.mxu0 %v679
    %v698 = vpop.f32.mrf.mxu0
    %v699 = vadd.f32 0.0, %v698
    %700 = vdwg.mxu0
    %v701 = vadd.f32 %v232, %v699
    %v702 = vxor.u32 %v701, 2147483648
    %v703 = vmul.f32 %v702, 1.442695
    %v704 = vpow.pop %v703
    %v705 = vadd.f32 %v704, 1.0
    %v706 = vrcp.pop %v705
    %v707 = vmul.f32 %v705, %v706
    %v708 = vsub.f32 1.0, %v707
    %v709 = vmul.f32 %v706, %v708
    %v710 = vadd.f32 %v706, %v709
    %vm711 = vweird.f32 %v705
    %vm712 = vweird.f32 %v706
    %vm713 = vmor %vm711, %vm712
    %v714 = vsel %vm713, %v706, %v710
    %v715 = vand.u32 2147483647, %v705
    %vm716 = vcmp.eq.f32.partialorder %v715, 8.507059e+37
    %v717 = vand.u32 %v705, 2147483648
    %v718 = vor.u32 1.1754944e-38, %v717
    %v719 = vsel %vm716, %v718, %v714
    %v720 = vmul.f32 1.0, %v719
    %v721 = vtanh.pop %v701
    %v722 = vmul.f32 %v720, %v669
    %724 = vrot.lane.b32.xlu0 %v721, 68
    %v725 = vpop.permute.xlu0 %724
    %v727 = vmul.f32 %v720, %v725
    %729 = vrot.lane.b32.xlu0 %v727, 20
    %v730 = vpop.permute.xlu0 %729
    %v732 = vadd.f32 %v722, %v730
    %v733 = vtanh.pop %v732
    %735 = vrot.lane.b32.xlu0 %v733, 20
    %v736 = vpop.permute.xlu0 %735
    %v738 = vmul.f32 %v720, %v736
    %s739 = scalar_lea.vmem %s2, 24
    %v740 = vld [vmem:[%s739] sm:$0xff]
    %v741 = vld [vmem:[%s739 + $0x8] sm:$0xff]
    %v742 = vld [vmem:[%s739 + $0x10] sm:$0xf]
    %s743 = scalar_lea.vmem %s3, 24
    %v744 = vld [vmem:[%s743] sm:$0xff]
    %v745 = vld [vmem:[%s743 + $0x8] sm:$0xff]
    %v746 = vld [vmem:[%s743 + $0x10] sm:$0xf]
    %s747 = scalar_lea.vmem %s4, 1
    %v748 = vld [vmem:[%s747] sm:$0x1]
    %v750 = vperm.slane %v748, 0
    %753 = vrot.lane.b32.xlu0 %v738, 88
    %v754 = vpop.permute.xlu0 %753
    %v755 = vsel %vm164, %v754, 0
    %v758 = vsel %vm189, %v742, 0
    %760 = vmatpush.msra.mxu0 0.0
    %761 = vmatpush.msra.mxu0 0.0
    %762 = vmatpush.msra.mxu0 0.0
    %763 = vmatpush.msra.mxu0 0.0
    %764 = vmatpush.msra.mxu0 0.0
    %765 = vmatpush.msra.mxu0 0.0
    %766 = vmatpush.msra.mxu0 0.0
    %767 = vmatpush.msra.mxu0 0.0
    %768 = vmatpush.msra.mxu0 0.0
    %769 = vmatpush.msra.mxu0 0.0
    %770 = vmatpush.msra.mxu0 0.0
    %771 = vmatpush.msra.mxu0 0.0
    %772 = vmatpush.msra.mxu0 0.0
    %773 = vmatpush.msra.mxu0 %v758
    %774 = vmatpush.msra.mxu0 %v741
    %775 = vmatpush.msra.mxu0 %v740
    %776 = vmatmul.f32.gmra.mxu0 %v301
    %v777 = vpop.f32.mrf.mxu0
    %v778 = vadd.f32 %v750, %v777
    %779 = vmatmul.f32.gmra.mxu0 %v364
    %v780 = vpop.f32.mrf.mxu0
    %v781 = vadd.f32 %v750, %v780
    %782 = vmatmul.f32.gmra.mxu0 %v427
    %v783 = vpop.f32.mrf.mxu0
    %v784 = vadd.f32 %v750, %v783
    %785 = vmatmul.f32.gmra.mxu0 %v490
    %v786 = vpop.f32.mrf.mxu0
    %v787 = vadd.f32 %v750, %v786
    %788 = vmatmul.f32.gmra.mxu0 %v553
    %v789 = vpop.f32.mrf.mxu0
    %v790 = vadd.f32 %v750, %v789
    %791 = vmatmul.f32.gmra.mxu0 %v616
    %v792 = vpop.f32.mrf.mxu0
    %v793 = vadd.f32 %v750, %v792
    %794 = vmatmul.f32.gmra.mxu0 %v679
    %v795 = vpop.f32.mrf.mxu0
    %v796 = vadd.f32 %v750, %v795
    %797 = vmatmul.f32.gmra.mxu0 %v755
    %v798 = vpop.f32.mrf.mxu0
    %v799 = vadd.f32 %v750, %v798
    %800 = vdwg.mxu0
    %v802 = vsel %vm189, %v746, 0
    %804 = vmatpush.msra.mxu0 0.0
    %805 = vmatpush.msra.mxu0 0.0
    %806 = vmatpush.msra.mxu0 0.0
    %807 = vmatpush.msra.mxu0 0.0
    %808 = vmatpush.msra.mxu0 0.0
    %809 = vmatpush.msra.mxu0 0.0
    %810 = vmatpush.msra.mxu0 0.0
    %811 = vmatpush.msra.mxu0 0.0
    %812 = vmatpush.msra.mxu0 0.0
    %813 = vmatpush.msra.mxu0 0.0
    %814 = vmatpush.msra.mxu0 0.0
    %815 = vmatpush.msra.mxu0 0.0
    %816 = vmatpush.msra.mxu0 0.0
    %817 = vmatpush.msra.mxu0 %v802
    %818 = vmatpush.msra.mxu0 %v745
    %819 = vmatpush.msra.mxu0 %v744
    %820 = vmatmul.f32.gmra.mxu0 %v235
    %v821 = vpop.f32.mrf.mxu0
    %v822 = vadd.f32 0.0, %v821
    %823 = vdwg.mxu0
    %v824 = vadd.f32 %v778, %v822
    %v825 = vxor.u32 %v824, 2147483648
    %v826 = vmul.f32 %v825, 1.442695
    %v827 = vpow.pop %v826
    %v828 = vadd.f32 %v827, 1.0
    %v829 = vrcp.pop %v828
    %v830 = vmul.f32 %v828, %v829
    %v831 = vsub.f32 1.0, %v830
    %v832 = vmul.f32 %v829, %v831
    %v833 = vadd.f32 %v829, %v832
    %vm834 = vweird.f32 %v828
    %vm835 = vweird.f32 %v829
    %vm836 = vmor %vm834, %vm835
    %v837 = vsel %vm836, %v829, %v833
    %v838 = vand.u32 2147483647, %v828
    %vm839 = vcmp.eq.f32.partialorder %v838, 8.507059e+37
    %v840 = vand.u32 %v828, 2147483648
    %v841 = vor.u32 1.1754944e-38, %v840
    %v842 = vsel %vm839, %v841, %v837
    %v843 = vmul.f32 1.0, %v842
    %v844 = vtanh.pop %v824
    %v845 = vmul.f32 %v843, 0.0
    %847 = vrot.lane.b32.xlu0 %v844, 68
    %v848 = vpop.permute.xlu0 %847
    %v850 = vmul.f32 %v843, %v848
    %852 = vrot.lane.b32.xlu0 %v850, 20
    %v853 = vpop.permute.xlu0 %852
    %v855 = vadd.f32 %v845, %v853
    %v856 = vtanh.pop %v855
    %858 = vrot.lane.b32.xlu0 %v856, 20
    %v859 = vpop.permute.xlu0 %858
    %v861 = vmul.f32 %v843, %v859
    %863 = vrot.lane.b32.xlu0 %v861, 88
    %v864 = vpop.permute.xlu0 %863
    %v865 = vsel %vm164, %v864, 0
    %867 = vmatpush.msra.mxu0 0.0
    %868 = vmatpush.msra.mxu0 0.0
    %869 = vmatpush.msra.mxu0 0.0
    %870 = vmatpush.msra.mxu0 0.0
    %871 = vmatpush.msra.mxu0 0.0
    %872 = vmatpush.msra.mxu0 0.0
    %873 = vmatpush.msra.mxu0 0.0
    %874 = vmatpush.msra.mxu0 0.0
    %875 = vmatpush.msra.mxu0 0.0
    %876 = vmatpush.msra.mxu0 0.0
    %877 = vmatpush.msra.mxu0 0.0
    %878 = vmatpush.msra.mxu0 0.0
    %879 = vmatpush.msra.mxu0 0.0
    %880 = vmatpush.msra.mxu0 %v802
    %881 = vmatpush.msra.mxu0 %v745
    %882 = vmatpush.msra.mxu0 %v744
    %883 = vmatmul.f32.gmra.mxu0 %v865
    %v884 = vpop.f32.mrf.mxu0
    %v885 = vadd.f32 0.0, %v884
    %886 = vdwg.mxu0
    %v887 = vadd.f32 %v781, %v885
    %v888 = vxor.u32 %v887, 2147483648
    %v889 = vmul.f32 %v888, 1.442695
    %v890 = vpow.pop %v889
    %v891 = vadd.f32 %v890, 1.0
    %v892 = vrcp.pop %v891
    %v893 = vmul.f32 %v891, %v892
    %v894 = vsub.f32 1.0, %v893
    %v895 = vmul.f32 %v892, %v894
    %v896 = vadd.f32 %v892, %v895
    %vm897 = vweird.f32 %v891
    %vm898 = vweird.f32 %v892
    %vm899 = vmor %vm897, %vm898
    %v900 = vsel %vm899, %v892, %v896
    %v901 = vand.u32 2147483647, %v891
    %vm902 = vcmp.eq.f32.partialorder %v901, 8.507059e+37
    %v903 = vand.u32 %v891, 2147483648
    %v904 = vor.u32 1.1754944e-38, %v903
    %v905 = vsel %vm902, %v904, %v900
    %v906 = vmul.f32 1.0, %v905
    %v907 = vtanh.pop %v887
    %v908 = vmul.f32 %v906, %v855
    %910 = vrot.lane.b32.xlu0 %v907, 68
    %v911 = vpop.permute.xlu0 %910
    %v913 = vmul.f32 %v906, %v911
    %915 = vrot.lane.b32.xlu0 %v913, 20
    %v916 = vpop.permute.xlu0 %915
    %v918 = vadd.f32 %v908, %v916
    %v919 = vtanh.pop %v918
    %921 = vrot.lane.b32.xlu0 %v919, 20
    %v922 = vpop.permute.xlu0 %921
    %v924 = vmul.f32 %v906, %v922
    %926 = vrot.lane.b32.xlu0 %v924, 88
    %v927 = vpop.permute.xlu0 %926
    %v928 = vsel %vm164, %v927, 0
    %930 = vmatpush.msra.mxu0 0.0
    %931 = vmatpush.msra.mxu0 0.0
    %932 = vmatpush.msra.mxu0 0.0
    %933 = vmatpush.msra.mxu0 0.0
    %934 = vmatpush.msra.mxu0 0.0
    %935 = vmatpush.msra.mxu0 0.0
    %936 = vmatpush.msra.mxu0 0.0
    %937 = vmatpush.msra.mxu0 0.0
    %938 = vmatpush.msra.mxu0 0.0
    %939 = vmatpush.msra.mxu0 0.0
    %940 = vmatpush.msra.mxu0 0.0
    %941 = vmatpush.msra.mxu0 0.0
    %942 = vmatpush.msra.mxu0 0.0
    %943 = vmatpush.msra.mxu0 %v802
    %944 = vmatpush.msra.mxu0 %v745
    %945 = vmatpush.msra.mxu0 %v744
    %946 = vmatmul.f32.gmra.mxu0 %v928
    %v947 = vpop.f32.mrf.mxu0
    %v948 = vadd.f32 0.0, %v947
    %949 = vdwg.mxu0
    %v950 = vadd.f32 %v784, %v948
    %v951 = vxor.u32 %v950, 2147483648
    %v952 = vmul.f32 %v951, 1.442695
    %v953 = vpow.pop %v952
    %v954 = vadd.f32 %v953, 1.0
    %v955 = vrcp.pop %v954
    %v956 = vmul.f32 %v954, %v955
    %v957 = vsub.f32 1.0, %v956
    %v958 = vmul.f32 %v955, %v957
    %v959 = vadd.f32 %v955, %v958
    %vm960 = vweird.f32 %v954
    %vm961 = vweird.f32 %v955
    %vm962 = vmor %vm960, %vm961
    %v963 = vsel %vm962, %v955, %v959
    %v964 = vand.u32 2147483647, %v954
    %vm965 = vcmp.eq.f32.partialorder %v964, 8.507059e+37
    %v966 = vand.u32 %v954, 2147483648
    %v967 = vor.u32 1.1754944e-38, %v966
    %v968 = vsel %vm965, %v967, %v963
    %v969 = vmul.f32 1.0, %v968
    %v970 = vtanh.pop %v950
    %v971 = vmul.f32 %v969, %v918
    %973 = vrot.lane.b32.xlu0 %v970, 68
    %v974 = vpop.permute.xlu0 %973
    %v976 = vmul.f32 %v969, %v974
    %978 = vrot.lane.b32.xlu0 %v976, 20
    %v979 = vpop.permute.xlu0 %978
    %v981 = vadd.f32 %v971, %v979
    %v982 = vtanh.pop %v981
    %984 = vrot.lane.b32.xlu0 %v982, 20
    %v985 = vpop.permute.xlu0 %984
    %v987 = vmul.f32 %v969, %v985
    %989 = vrot.lane.b32.xlu0 %v987, 88
    %v990 = vpop.permute.xlu0 %989
    %v991 = vsel %vm164, %v990, 0
    %993 = vmatpush.msra.mxu0 0.0
    %994 = vmatpush.msra.mxu0 0.0
    %995 = vmatpush.msra.mxu0 0.0
    %996 = vmatpush.msra.mxu0 0.0
    %997 = vmatpush.msra.mxu0 0.0
    %998 = vmatpush.msra.mxu0 0.0
    %999 = vmatpush.msra.mxu0 0.0
    %1000 = vmatpush.msra.mxu0 0.0
    %1001 = vmatpush.msra.mxu0 0.0
    %1002 = vmatpush.msra.mxu0 0.0
    %1003 = vmatpush.msra.mxu0 0.0
    %1004 = vmatpush.msra.mxu0 0.0
    %1005 = vmatpush.msra.mxu0 0.0
    %1006 = vmatpush.msra.mxu0 %v802
    %1007 = vmatpush.msra.mxu0 %v745
    %1008 = vmatpush.msra.mxu0 %v744
    %1009 = vmatmul.f32.gmra.mxu0 %v991
    %v1010 = vpop.f32.mrf.mxu0
    %v1011 = vadd.f32 0.0, %v1010
    %1012 = vdwg.mxu0
    %v1013 = vadd.f32 %v787, %v1011
    %v1014 = vxor.u32 %v1013, 2147483648
    %v1015 = vmul.f32 %v1014, 1.442695
    %v1016 = vpow.pop %v1015
    %v1017 = vadd.f32 %v1016, 1.0
    %v1018 = vrcp.pop %v1017
    %v1019 = vmul.f32 %v1017, %v1018
    %v1020 = vsub.f32 1.0, %v1019
    %v1021 = vmul.f32 %v1018, %v1020
    %v1022 = vadd.f32 %v1018, %v1021
    %vm1023 = vweird.f32 %v1017
    %vm1024 = vweird.f32 %v1018
    %vm1025 = vmor %vm1023, %vm1024
    %v1026 = vsel %vm1025, %v1018, %v1022
    %v1027 = vand.u32 2147483647, %v1017
    %vm1028 = vcmp.eq.f32.partialorder %v1027, 8.507059e+37
    %v1029 = vand.u32 %v1017, 2147483648
    %v1030 = vor.u32 1.1754944e-38, %v1029
    %v1031 = vsel %vm1028, %v1030, %v1026
    %v1032 = vmul.f32 1.0, %v1031
    %v1033 = vtanh.pop %v1013
    %v1034 = vmul.f32 %v1032, %v981
    %1036 = vrot.lane.b32.xlu0 %v1033, 68
    %v1037 = vpop.permute.xlu0 %1036
    %v1039 = vmul.f32 %v1032, %v1037
    %1041 = vrot.lane.b32.xlu0 %v1039, 20
    %v1042 = vpop.permute.xlu0 %1041
    %v1044 = vadd.f32 %v1034, %v1042
    %v1045 = vtanh.pop %v1044
    %1047 = vrot.lane.b32.xlu0 %v1045, 20
    %v1048 = vpop.permute.xlu0 %1047
    %v1050 = vmul.f32 %v1032, %v1048
    %1052 = vrot.lane.b32.xlu0 %v1050, 88
    %v1053 = vpop.permute.xlu0 %1052
    %v1054 = vsel %vm164, %v1053, 0
    %1056 = vmatpush.msra.mxu0 0.0
    %1057 = vmatpush.msra.mxu0 0.0
    %1058 = vmatpush.msra.mxu0 0.0
    %1059 = vmatpush.msra.mxu0 0.0
    %1060 = vmatpush.msra.mxu0 0.0
    %1061 = vmatpush.msra.mxu0 0.0
    %1062 = vmatpush.msra.mxu0 0.0
    %1063 = vmatpush.msra.mxu0 0.0
    %1064 = vmatpush.msra.mxu0 0.0
    %1065 = vmatpush.msra.mxu0 0.0
    %1066 = vmatpush.msra.mxu0 0.0
    %1067 = vmatpush.msra.mxu0 0.0
    %1068 = vmatpush.msra.mxu0 0.0
    %1069 = vmatpush.msra.mxu0 %v802
    %1070 = vmatpush.msra.mxu0 %v745
    %1071 = vmatpush.msra.mxu0 %v744
    %1072 = vmatmul.f32.gmra.mxu0 %v1054
    %v1073 = vpop.f32.mrf.mxu0
    %v1074 = vadd.f32 0.0, %v1073
    %1075 = vdwg.mxu0
    %v1076 = vadd.f32 %v790, %v1074
    %v1077 = vxor.u32 %v1076, 2147483648
    %v1078 = vmul.f32 %v1077, 1.442695
    %v1079 = vpow.pop %v1078
    %v1080 = vadd.f32 %v1079, 1.0
    %v1081 = vrcp.pop %v1080
    %v1082 = vmul.f32 %v1080, %v1081
    %v1083 = vsub.f32 1.0, %v1082
    %v1084 = vmul.f32 %v1081, %v1083
    %v1085 = vadd.f32 %v1081, %v1084
    %vm1086 = vweird.f32 %v1080
    %vm1087 = vweird.f32 %v1081
    %vm1088 = vmor %vm1086, %vm1087
    %v1089 = vsel %vm1088, %v1081, %v1085
    %v1090 = vand.u32 2147483647, %v1080
    %vm1091 = vcmp.eq.f32.partialorder %v1090, 8.507059e+37
    %v1092 = vand.u32 %v1080, 2147483648
    %v1093 = vor.u32 1.1754944e-38, %v1092
    %v1094 = vsel %vm1091, %v1093, %v1089
    %v1095 = vmul.f32 1.0, %v1094
    %v1096 = vtanh.pop %v1076
    %v1097 = vmul.f32 %v1095, %v1044
    %1099 = vrot.lane.b32.xlu0 %v1096, 68
    %v1100 = vpop.permute.xlu0 %1099
    %v1102 = vmul.f32 %v1095, %v1100
    %1104 = vrot.lane.b32.xlu0 %v1102, 20
    %v1105 = vpop.permute.xlu0 %1104
    %v1107 = vadd.f32 %v1097, %v1105
    %v1108 = vtanh.pop %v1107
    %1110 = vrot.lane.b32.xlu0 %v1108, 20
    %v1111 = vpop.permute.xlu0 %1110
    %v1113 = vmul.f32 %v1095, %v1111
    %1115 = vrot.lane.b32.xlu0 %v1113, 88
    %v1116 = vpop.permute.xlu0 %1115
    %v1117 = vsel %vm164, %v1116, 0
    %1119 = vmatpush.msra.mxu0 0.0
    %1120 = vmatpush.msra.mxu0 0.0
    %1121 = vmatpush.msra.mxu0 0.0
    %1122 = vmatpush.msra.mxu0 0.0
    %1123 = vmatpush.msra.mxu0 0.0
    %1124 = vmatpush.msra.mxu0 0.0
    %1125 = vmatpush.msra.mxu0 0.0
    %1126 = vmatpush.msra.mxu0 0.0
    %1127 = vmatpush.msra.mxu0 0.0
    %1128 = vmatpush.msra.mxu0 0.0
    %1129 = vmatpush.msra.mxu0 0.0
    %1130 = vmatpush.msra.mxu0 0.0
    %1131 = vmatpush.msra.mxu0 0.0
    %1132 = vmatpush.msra.mxu0 %v802
    %1133 = vmatpush.msra.mxu0 %v745
    %1134 = vmatpush.msra.mxu0 %v744
    %1135 = vmatmul.f32.gmra.mxu0 %v1117
    %v1136 = vpop.f32.mrf.mxu0
    %v1137 = vadd.f32 0.0, %v1136
    %1138 = vdwg.mxu0
    %v1139 = vadd.f32 %v793, %v1137
    %v1140 = vxor.u32 %v1139, 2147483648
    %v1141 = vmul.f32 %v1140, 1.442695
    %v1142 = vpow.pop %v1141
    %v1143 = vadd.f32 %v1142, 1.0
    %v1144 = vrcp.pop %v1143
    %v1145 = vmul.f32 %v1143, %v1144
    %v1146 = vsub.f32 1.0, %v1145
    %v1147 = vmul.f32 %v1144, %v1146
    %v1148 = vadd.f32 %v1144, %v1147
    %vm1149 = vweird.f32 %v1143
    %vm1150 = vweird.f32 %v1144
    %vm1151 = vmor %vm1149, %vm1150
    %v1152 = vsel %vm1151, %v1144, %v1148
    %v1153 = vand.u32 2147483647, %v1143
    %vm1154 = vcmp.eq.f32.partialorder %v1153, 8.507059e+37
    %v1155 = vand.u32 %v1143, 2147483648
    %v1156 = vor.u32 1.1754944e-38, %v1155
    %v1157 = vsel %vm1154, %v1156, %v1152
    %v1158 = vmul.f32 1.0, %v1157
    %v1159 = vtanh.pop %v1139
    %v1160 = vmul.f32 %v1158, %v1107
    %1162 = vrot.lane.b32.xlu0 %v1159, 68
    %v1163 = vpop.permute.xlu0 %1162
    %v1165 = vmul.f32 %v1158, %v1163
    %1167 = vrot.lane.b32.xlu0 %v1165, 20
    %v1168 = vpop.permute.xlu0 %1167
    %v1170 = vadd.f32 %v1160, %v1168
    %v1171 = vtanh.pop %v1170
    %1173 = vrot.lane.b32.xlu0 %v1171, 20
    %v1174 = vpop.permute.xlu0 %1173
    %v1176 = vmul.f32 %v1158, %v1174
    %1178 = vrot.lane.b32.xlu0 %v1176, 88
    %v1179 = vpop.permute.xlu0 %1178
    %v1180 = vsel %vm164, %v1179, 0
    %1182 = vmatpush.msra.mxu0 0.0
    %1183 = vmatpush.msra.mxu0 0.0
    %1184 = vmatpush.msra.mxu0 0.0
    %1185 = vmatpush.msra.mxu0 0.0
    %1186 = vmatpush.msra.mxu0 0.0
    %1187 = vmatpush.msra.mxu0 0.0
    %1188 = vmatpush.msra.mxu0 0.0
    %1189 = vmatpush.msra.mxu0 0.0
    %1190 = vmatpush.msra.mxu0 0.0
    %1191 = vmatpush.msra.mxu0 0.0
    %1192 = vmatpush.msra.mxu0 0.0
    %1193 = vmatpush.msra.mxu0 0.0
    %1194 = vmatpush.msra.mxu0 0.0
    %1195 = vmatpush.msra.mxu0 %v802
    %1196 = vmatpush.msra.mxu0 %v745
    %1197 = vmatpush.msra.mxu0 %v744
    %1198 = vmatmul.f32.gmra.mxu0 %v1180
    %v1199 = vpop.f32.mrf.mxu0
    %v1200 = vadd.f32 0.0, %v1199
    %1201 = vdwg.mxu0
    %v1202 = vadd.f32 %v796, %v1200
    %v1203 = vxor.u32 %v1202, 2147483648
    %v1204 = vmul.f32 %v1203, 1.442695
    %v1205 = vpow.pop %v1204
    %v1206 = vadd.f32 %v1205, 1.0
    %v1207 = vrcp.pop %v1206
    %v1208 = vmul.f32 %v1206, %v1207
    %v1209 = vsub.f32 1.0, %v1208
    %v1210 = vmul.f32 %v1207, %v1209
    %v1211 = vadd.f32 %v1207, %v1210
    %vm1212 = vweird.f32 %v1206
    %vm1213 = vweird.f32 %v1207
    %vm1214 = vmor %vm1212, %vm1213
    %v1215 = vsel %vm1214, %v1207, %v1211
    %v1216 = vand.u32 2147483647, %v1206
    %vm1217 = vcmp.eq.f32.partialorder %v1216, 8.507059e+37
    %v1218 = vand.u32 %v1206, 2147483648
    %v1219 = vor.u32 1.1754944e-38, %v1218
    %v1220 = vsel %vm1217, %v1219, %v1215
    %v1221 = vmul.f32 1.0, %v1220
    %v1222 = vtanh.pop %v1202
    %v1223 = vmul.f32 %v1221, %v1170
    %1225 = vrot.lane.b32.xlu0 %v1222, 68
    %v1226 = vpop.permute.xlu0 %1225
    %v1228 = vmul.f32 %v1221, %v1226
    %1230 = vrot.lane.b32.xlu0 %v1228, 20
    %v1231 = vpop.permute.xlu0 %1230
    %v1233 = vadd.f32 %v1223, %v1231
    %v1234 = vtanh.pop %v1233
    %1236 = vrot.lane.b32.xlu0 %v1234, 20
    %v1237 = vpop.permute.xlu0 %1236
    %v1239 = vmul.f32 %v1221, %v1237
    %1241 = vrot.lane.b32.xlu0 %v1239, 88
    %v1242 = vpop.permute.xlu0 %1241
    %v1243 = vsel %vm164, %v1242, 0
    %1245 = vmatpush.msra.mxu0 0.0
    %1246 = vmatpush.msra.mxu0 0.0
    %1247 = vmatpush.msra.mxu0 0.0
    %1248 = vmatpush.msra.mxu0 0.0
    %1249 = vmatpush.msra.mxu0 0.0
    %1250 = vmatpush.msra.mxu0 0.0
    %1251 = vmatpush.msra.mxu0 0.0
    %1252 = vmatpush.msra.mxu0 0.0
    %1253 = vmatpush.msra.mxu0 0.0
    %1254 = vmatpush.msra.mxu0 0.0
    %1255 = vmatpush.msra.mxu0 0.0
    %1256 = vmatpush.msra.mxu0 0.0
    %1257 = vmatpush.msra.mxu0 0.0
    %1258 = vmatpush.msra.mxu0 %v802
    %1259 = vmatpush.msra.mxu0 %v745
    %1260 = vmatpush.msra.mxu0 %v744
    %1261 = vmatmul.f32.gmra.mxu0 %v1243
    %v1262 = vpop.f32.mrf.mxu0
    %v1263 = vadd.f32 0.0, %v1262
    %1264 = vdwg.mxu0
    %v1265 = vadd.f32 %v799, %v1263
    %v1266 = vxor.u32 %v1265, 2147483648
    %v1267 = vmul.f32 %v1266, 1.442695
    %v1268 = vpow.pop %v1267
    %v1269 = vadd.f32 %v1268, 1.0
    %v1270 = vrcp.pop %v1269
    %v1271 = vmul.f32 %v1269, %v1270
    %v1272 = vsub.f32 1.0, %v1271
    %v1273 = vmul.f32 %v1270, %v1272
    %v1274 = vadd.f32 %v1270, %v1273
    %vm1275 = vweird.f32 %v1269
    %vm1276 = vweird.f32 %v1270
    %vm1277 = vmor %vm1275, %vm1276
    %v1278 = vsel %vm1277, %v1270, %v1274
    %v1279 = vand.u32 2147483647, %v1269
    %vm1280 = vcmp.eq.f32.partialorder %v1279, 8.507059e+37
    %v1281 = vand.u32 %v1269, 2147483648
    %v1282 = vor.u32 1.1754944e-38, %v1281
    %v1283 = vsel %vm1280, %v1282, %v1278
    %v1284 = vmul.f32 1.0, %v1283
    %v1285 = vtanh.pop %v1265
    %v1286 = vmul.f32 %v1284, %v1233
    %1288 = vrot.lane.b32.xlu0 %v1285, 68
    %v1289 = vpop.permute.xlu0 %1288
    %v1291 = vmul.f32 %v1284, %v1289
    %1293 = vrot.lane.b32.xlu0 %v1291, 20
    %v1294 = vpop.permute.xlu0 %1293
    %v1296 = vadd.f32 %v1286, %v1294
    %v1297 = vtanh.pop %v1296
    %1299 = vrot.lane.b32.xlu0 %v1297, 20
    %v1300 = vpop.permute.xlu0 %1299
    %v1302 = vmul.f32 %v1284, %v1300
    %s1303 = scalar_lea.vmem %s2, 48
    %v1304 = vld [vmem:[%s1303] sm:$0xff]
    %v1305 = vld [vmem:[%s1303 + $0x8] sm:$0xff]
    %v1306 = vld [vmem:[%s1303 + $0x10] sm:$0xf]
    %s1307 = scalar_lea.vmem %s3, 48
    %v1308 = vld [vmem:[%s1307] sm:$0xff]
    %v1309 = vld [vmem:[%s1307 + $0x8] sm:$0xff]
    %v1310 = vld [vmem:[%s1307 + $0x10] sm:$0xf]
    %s1311 = scalar_lea.vmem %s4, 2
    %v1312 = vld [vmem:[%s1311] sm:$0x1]
    %v1314 = vperm.slane %v1312, 0
    %1317 = vrot.lane.b32.xlu0 %v1302, 88
    %v1318 = vpop.permute.xlu0 %1317
    %v1319 = vsel %vm164, %v1318, 0
    %v1322 = vsel %vm189, %v1306, 0
    %1324 = vmatpush.msra.mxu0 0.0
    %1325 = vmatpush.msra.mxu0 0.0
    %1326 = vmatpush.msra.mxu0 0.0
    %1327 = vmatpush.msra.mxu0 0.0
    %1328 = vmatpush.msra.mxu0 0.0
    %1329 = vmatpush.msra.mxu0 0.0
    %1330 = vmatpush.msra.mxu0 0.0
    %1331 = vmatpush.msra.mxu0 0.0
    %1332 = vmatpush.msra.mxu0 0.0
    %1333 = vmatpush.msra.mxu0 0.0
    %1334 = vmatpush.msra.mxu0 0.0
    %1335 = vmatpush.msra.mxu0 0.0
    %1336 = vmatpush.msra.mxu0 0.0
    %1337 = vmatpush.msra.mxu0 %v1322
    %1338 = vmatpush.msra.mxu0 %v1305
    %1339 = vmatpush.msra.mxu0 %v1304
    %1340 = vmatmul.f32.gmra.mxu0 %v865
    %v1341 = vpop.f32.mrf.mxu0
    %v1342 = vadd.f32 %v1314, %v1341
    %1343 = vmatmul.f32.gmra.mxu0 %v928
    %v1344 = vpop.f32.mrf.mxu0
    %v1345 = vadd.f32 %v1314, %v1344
    %1346 = vmatmul.f32.gmra.mxu0 %v991
    %v1347 = vpop.f32.mrf.mxu0
    %v1348 = vadd.f32 %v1314, %v1347
    %1349 = vmatmul.f32.gmra.mxu0 %v1054
    %v1350 = vpop.f32.mrf.mxu0
    %v1351 = vadd.f32 %v1314, %v1350
    %1352 = vmatmul.f32.gmra.mxu0 %v1117
    %v1353 = vpop.f32.mrf.mxu0
    %v1354 = vadd.f32 %v1314, %v1353
    %1355 = vmatmul.f32.gmra.mxu0 %v1180
    %v1356 = vpop.f32.mrf.mxu0
    %v1357 = vadd.f32 %v1314, %v1356
    %1358 = vmatmul.f32.gmra.mxu0 %v1243
    %v1359 = vpop.f32.mrf.mxu0
    %v1360 = vadd.f32 %v1314, %v1359
    %1361 = vmatmul.f32.gmra.mxu0 %v1319
    %v1362 = vpop.f32.mrf.mxu0
    %v1363 = vadd.f32 %v1314, %v1362
    %1364 = vdwg.mxu0
    %v1366 = vsel %vm189, %v1310, 0
    %1368 = vmatpush.msra.mxu0 0.0
    %1369 = vmatpush.msra.mxu0 0.0
    %1370 = vmatpush.msra.mxu0 0.0
    %1371 = vmatpush.msra.mxu0 0.0
    %1372 = vmatpush.msra.mxu0 0.0
    %1373 = vmatpush.msra.mxu0 0.0
    %1374 = vmatpush.msra.mxu0 0.0
    %1375 = vmatpush.msra.mxu0 0.0
    %1376 = vmatpush.msra.mxu0 0.0
    %1377 = vmatpush.msra.mxu0 0.0
    %1378 = vmatpush.msra.mxu0 0.0
    %1379 = vmatpush.msra.mxu0 0.0
    %1380 = vmatpush.msra.mxu0 0.0
    %1381 = vmatpush.msra.mxu0 %v1366
    %1382 = vmatpush.msra.mxu0 %v1309
    %1383 = vmatpush.msra.mxu0 %v1308
    %1384 = vmatmul.f32.gmra.mxu0 %v235
    %v1385 = vpop.f32.mrf.mxu0
    %v1386 = vadd.f32 0.0, %v1385
    %1387 = vdwg.mxu0
    %v1388 = vadd.f32 %v1342, %v1386
    %v1389 = vxor.u32 %v1388, 2147483648
    %v1390 = vmul.f32 %v1389, 1.442695
    %v1391 = vpow.pop %v1390
    %v1392 = vadd.f32 %v1391, 1.0
    %v1393 = vrcp.pop %v1392
    %v1394 = vmul.f32 %v1392, %v1393
    %v1395 = vsub.f32 1.0, %v1394
    %v1396 = vmul.f32 %v1393, %v1395
    %v1397 = vadd.f32 %v1393, %v1396
    %vm1398 = vweird.f32 %v1392
    %vm1399 = vweird.f32 %v1393
    %vm1400 = vmor %vm1398, %vm1399
    %v1401 = vsel %vm1400, %v1393, %v1397
    %v1402 = vand.u32 2147483647, %v1392
    %vm1403 = vcmp.eq.f32.partialorder %v1402, 8.507059e+37
    %v1404 = vand.u32 %v1392, 2147483648
    %v1405 = vor.u32 1.1754944e-38, %v1404
    %v1406 = vsel %vm1403, %v1405, %v1401
    %v1407 = vmul.f32 1.0, %v1406
    %v1408 = vtanh.pop %v1388
    %v1409 = vmul.f32 %v1407, 0.0
    %1411 = vrot.lane.b32.xlu0 %v1408, 68
    %v1412 = vpop.permute.xlu0 %1411
    %v1414 = vmul.f32 %v1407, %v1412
    %1416 = vrot.lane.b32.xlu0 %v1414, 20
    %v1417 = vpop.permute.xlu0 %1416
    %v1419 = vadd.f32 %v1409, %v1417
    %v1420 = vtanh.pop %v1419
    %1422 = vrot.lane.b32.xlu0 %v1420, 20
    %v1423 = vpop.permute.xlu0 %1422
    %v1425 = vmul.f32 %v1407, %v1423
    %1427 = vrot.lane.b32.xlu0 %v1425, 88
    %v1428 = vpop.permute.xlu0 %1427
    %v1429 = vsel %vm164, %v1428, 0
    %1431 = vmatpush.msra.mxu0 0.0
    %1432 = vmatpush.msra.mxu0 0.0
    %1433 = vmatpush.msra.mxu0 0.0
    %1434 = vmatpush.msra.mxu0 0.0
    %1435 = vmatpush.msra.mxu0 0.0
    %1436 = vmatpush.msra.mxu0 0.0
    %1437 = vmatpush.msra.mxu0 0.0
    %1438 = vmatpush.msra.mxu0 0.0
    %1439 = vmatpush.msra.mxu0 0.0
    %1440 = vmatpush.msra.mxu0 0.0
    %1441 = vmatpush.msra.mxu0 0.0
    %1442 = vmatpush.msra.mxu0 0.0
    %1443 = vmatpush.msra.mxu0 0.0
    %1444 = vmatpush.msra.mxu0 %v1366
    %1445 = vmatpush.msra.mxu0 %v1309
    %1446 = vmatpush.msra.mxu0 %v1308
    %1447 = vmatmul.f32.gmra.mxu0 %v1429
    %v1448 = vpop.f32.mrf.mxu0
    %v1449 = vadd.f32 0.0, %v1448
    %1450 = vdwg.mxu0
    %v1451 = vadd.f32 %v1345, %v1449
    %v1452 = vxor.u32 %v1451, 2147483648
    %v1453 = vmul.f32 %v1452, 1.442695
    %v1454 = vpow.pop %v1453
    %v1455 = vadd.f32 %v1454, 1.0
    %v1456 = vrcp.pop %v1455
    %v1457 = vmul.f32 %v1455, %v1456
    %v1458 = vsub.f32 1.0, %v1457
    %v1459 = vmul.f32 %v1456, %v1458
    %v1460 = vadd.f32 %v1456, %v1459
    %vm1461 = vweird.f32 %v1455
    %vm1462 = vweird.f32 %v1456
    %vm1463 = vmor %vm1461, %vm1462
    %v1464 = vsel %vm1463, %v1456, %v1460
    %v1465 = vand.u32 2147483647, %v1455
    %vm1466 = vcmp.eq.f32.partialorder %v1465, 8.507059e+37
    %v1467 = vand.u32 %v1455, 2147483648
    %v1468 = vor.u32 1.1754944e-38, %v1467
    %v1469 = vsel %vm1466, %v1468, %v1464
    %v1470 = vmul.f32 1.0, %v1469
    %v1471 = vtanh.pop %v1451
    %v1472 = vmul.f32 %v1470, %v1419
    %1474 = vrot.lane.b32.xlu0 %v1471, 68
    %v1475 = vpop.permute.xlu0 %1474
    %v1477 = vmul.f32 %v1470, %v1475
    %1479 = vrot.lane.b32.xlu0 %v1477, 20
    %v1480 = vpop.permute.xlu0 %1479
    %v1482 = vadd.f32 %v1472, %v1480
    %v1483 = vtanh.pop %v1482
    %1485 = vrot.lane.b32.xlu0 %v1483, 20
    %v1486 = vpop.permute.xlu0 %1485
    %v1488 = vmul.f32 %v1470, %v1486
    %1490 = vrot.lane.b32.xlu0 %v1488, 88
    %v1491 = vpop.permute.xlu0 %1490
    %v1492 = vsel %vm164, %v1491, 0
    %1494 = vmatpush.msra.mxu0 0.0
    %1495 = vmatpush.msra.mxu0 0.0
    %1496 = vmatpush.msra.mxu0 0.0
    %1497 = vmatpush.msra.mxu0 0.0
    %1498 = vmatpush.msra.mxu0 0.0
    %1499 = vmatpush.msra.mxu0 0.0
    %1500 = vmatpush.msra.mxu0 0.0
    %1501 = vmatpush.msra.mxu0 0.0
    %1502 = vmatpush.msra.mxu0 0.0
    %1503 = vmatpush.msra.mxu0 0.0
    %1504 = vmatpush.msra.mxu0 0.0
    %1505 = vmatpush.msra.mxu0 0.0
    %1506 = vmatpush.msra.mxu0 0.0
    %1507 = vmatpush.msra.mxu0 %v1366
    %1508 = vmatpush.msra.mxu0 %v1309
    %1509 = vmatpush.msra.mxu0 %v1308
    %1510 = vmatmul.f32.gmra.mxu0 %v1492
    %v1511 = vpop.f32.mrf.mxu0
    %v1512 = vadd.f32 0.0, %v1511
    %1513 = vdwg.mxu0
    %v1514 = vadd.f32 %v1348, %v1512
    %v1515 = vxor.u32 %v1514, 2147483648
    %v1516 = vmul.f32 %v1515, 1.442695
    %v1517 = vpow.pop %v1516
    %v1518 = vadd.f32 %v1517, 1.0
    %v1519 = vrcp.pop %v1518
    %v1520 = vmul.f32 %v1518, %v1519
    %v1521 = vsub.f32 1.0, %v1520
    %v1522 = vmul.f32 %v1519, %v1521
    %v1523 = vadd.f32 %v1519, %v1522
    %vm1524 = vweird.f32 %v1518
    %vm1525 = vweird.f32 %v1519
    %vm1526 = vmor %vm1524, %vm1525
    %v1527 = vsel %vm1526, %v1519, %v1523
    %v1528 = vand.u32 2147483647, %v1518
    %vm1529 = vcmp.eq.f32.partialorder %v1528, 8.507059e+37
    %v1530 = vand.u32 %v1518, 2147483648
    %v1531 = vor.u32 1.1754944e-38, %v1530
    %v1532 = vsel %vm1529, %v1531, %v1527
    %v1533 = vmul.f32 1.0, %v1532
    %v1534 = vtanh.pop %v1514
    %v1535 = vmul.f32 %v1533, %v1482
    %1537 = vrot.lane.b32.xlu0 %v1534, 68
    %v1538 = vpop.permute.xlu0 %1537
    %v1540 = vmul.f32 %v1533, %v1538
    %1542 = vrot.lane.b32.xlu0 %v1540, 20
    %v1543 = vpop.permute.xlu0 %1542
    %v1545 = vadd.f32 %v1535, %v1543
    %v1546 = vtanh.pop %v1545
    %1548 = vrot.lane.b32.xlu0 %v1546, 20
    %v1549 = vpop.permute.xlu0 %1548
    %v1551 = vmul.f32 %v1533, %v1549
    %1553 = vrot.lane.b32.xlu0 %v1551, 88
    %v1554 = vpop.permute.xlu0 %1553
    %v1555 = vsel %vm164, %v1554, 0
    %1557 = vmatpush.msra.mxu0 0.0
    %1558 = vmatpush.msra.mxu0 0.0
    %1559 = vmatpush.msra.mxu0 0.0
    %1560 = vmatpush.msra.mxu0 0.0
    %1561 = vmatpush.msra.mxu0 0.0
    %1562 = vmatpush.msra.mxu0 0.0
    %1563 = vmatpush.msra.mxu0 0.0
    %1564 = vmatpush.msra.mxu0 0.0
    %1565 = vmatpush.msra.mxu0 0.0
    %1566 = vmatpush.msra.mxu0 0.0
    %1567 = vmatpush.msra.mxu0 0.0
    %1568 = vmatpush.msra.mxu0 0.0
    %1569 = vmatpush.msra.mxu0 0.0
    %1570 = vmatpush.msra.mxu0 %v1366
    %1571 = vmatpush.msra.mxu0 %v1309
    %1572 = vmatpush.msra.mxu0 %v1308
    %1573 = vmatmul.f32.gmra.mxu0 %v1555
    %v1574 = vpop.f32.mrf.mxu0
    %v1575 = vadd.f32 0.0, %v1574
    %1576 = vdwg.mxu0
    %v1577 = vadd.f32 %v1351, %v1575
    %v1578 = vxor.u32 %v1577, 2147483648
    %v1579 = vmul.f32 %v1578, 1.442695
    %v1580 = vpow.pop %v1579
    %v1581 = vadd.f32 %v1580, 1.0
    %v1582 = vrcp.pop %v1581
    %v1583 = vmul.f32 %v1581, %v1582
    %v1584 = vsub.f32 1.0, %v1583
    %v1585 = vmul.f32 %v1582, %v1584
    %v1586 = vadd.f32 %v1582, %v1585
    %vm1587 = vweird.f32 %v1581
    %vm1588 = vweird.f32 %v1582
    %vm1589 = vmor %vm1587, %vm1588
    %v1590 = vsel %vm1589, %v1582, %v1586
    %v1591 = vand.u32 2147483647, %v1581
    %vm1592 = vcmp.eq.f32.partialorder %v1591, 8.507059e+37
    %v1593 = vand.u32 %v1581, 2147483648
    %v1594 = vor.u32 1.1754944e-38, %v1593
    %v1595 = vsel %vm1592, %v1594, %v1590
    %v1596 = vmul.f32 1.0, %v1595
    %v1597 = vtanh.pop %v1577
    %v1598 = vmul.f32 %v1596, %v1545
    %1600 = vrot.lane.b32.xlu0 %v1597, 68
    %v1601 = vpop.permute.xlu0 %1600
    %v1603 = vmul.f32 %v1596, %v1601
    %1605 = vrot.lane.b32.xlu0 %v1603, 20
    %v1606 = vpop.permute.xlu0 %1605
    %v1608 = vadd.f32 %v1598, %v1606
    %v1609 = vtanh.pop %v1608
    %1611 = vrot.lane.b32.xlu0 %v1609, 20
    %v1612 = vpop.permute.xlu0 %1611
    %v1614 = vmul.f32 %v1596, %v1612
    %1616 = vrot.lane.b32.xlu0 %v1614, 88
    %v1617 = vpop.permute.xlu0 %1616
    %v1618 = vsel %vm164, %v1617, 0
    %1620 = vmatpush.msra.mxu0 0.0
    %1621 = vmatpush.msra.mxu0 0.0
    %1622 = vmatpush.msra.mxu0 0.0
    %1623 = vmatpush.msra.mxu0 0.0
    %1624 = vmatpush.msra.mxu0 0.0
    %1625 = vmatpush.msra.mxu0 0.0
    %1626 = vmatpush.msra.mxu0 0.0
    %1627 = vmatpush.msra.mxu0 0.0
    %1628 = vmatpush.msra.mxu0 0.0
    %1629 = vmatpush.msra.mxu0 0.0
    %1630 = vmatpush.msra.mxu0 0.0
    %1631 = vmatpush.msra.mxu0 0.0
    %1632 = vmatpush.msra.mxu0 0.0
    %1633 = vmatpush.msra.mxu0 %v1366
    %1634 = vmatpush.msra.mxu0 %v1309
    %1635 = vmatpush.msra.mxu0 %v1308
    %1636 = vmatmul.f32.gmra.mxu0 %v1618
    %v1637 = vpop.f32.mrf.mxu0
    %v1638 = vadd.f32 0.0, %v1637
    %1639 = vdwg.mxu0
    %v1640 = vadd.f32 %v1354, %v1638
    %v1641 = vxor.u32 %v1640, 2147483648
    %v1642 = vmul.f32 %v1641, 1.442695
    %v1643 = vpow.pop %v1642
    %v1644 = vadd.f32 %v1643, 1.0
    %v1645 = vrcp.pop %v1644
    %v1646 = vmul.f32 %v1644, %v1645
    %v1647 = vsub.f32 1.0, %v1646
    %v1648 = vmul.f32 %v1645, %v1647
    %v1649 = vadd.f32 %v1645, %v1648
    %vm1650 = vweird.f32 %v1644
    %vm1651 = vweird.f32 %v1645
    %vm1652 = vmor %vm1650, %vm1651
    %v1653 = vsel %vm1652, %v1645, %v1649
    %v1654 = vand.u32 2147483647, %v1644
    %vm1655 = vcmp.eq.f32.partialorder %v1654, 8.507059e+37
    %v1656 = vand.u32 %v1644, 2147483648
    %v1657 = vor.u32 1.1754944e-38, %v1656
    %v1658 = vsel %vm1655, %v1657, %v1653
    %v1659 = vmul.f32 1.0, %v1658
    %v1660 = vtanh.pop %v1640
    %v1661 = vmul.f32 %v1659, %v1608
    %1663 = vrot.lane.b32.xlu0 %v1660, 68
    %v1664 = vpop.permute.xlu0 %1663
    %v1666 = vmul.f32 %v1659, %v1664
    %1668 = vrot.lane.b32.xlu0 %v1666, 20
    %v1669 = vpop.permute.xlu0 %1668
    %v1671 = vadd.f32 %v1661, %v1669
    %v1672 = vtanh.pop %v1671
    %1674 = vrot.lane.b32.xlu0 %v1672, 20
    %v1675 = vpop.permute.xlu0 %1674
    %v1677 = vmul.f32 %v1659, %v1675
    %1679 = vrot.lane.b32.xlu0 %v1677, 88
    %v1680 = vpop.permute.xlu0 %1679
    %v1681 = vsel %vm164, %v1680, 0
    %1683 = vmatpush.msra.mxu0 0.0
    %1684 = vmatpush.msra.mxu0 0.0
    %1685 = vmatpush.msra.mxu0 0.0
    %1686 = vmatpush.msra.mxu0 0.0
    %1687 = vmatpush.msra.mxu0 0.0
    %1688 = vmatpush.msra.mxu0 0.0
    %1689 = vmatpush.msra.mxu0 0.0
    %1690 = vmatpush.msra.mxu0 0.0
    %1691 = vmatpush.msra.mxu0 0.0
    %1692 = vmatpush.msra.mxu0 0.0
    %1693 = vmatpush.msra.mxu0 0.0
    %1694 = vmatpush.msra.mxu0 0.0
    %1695 = vmatpush.msra.mxu0 0.0
    %1696 = vmatpush.msra.mxu0 %v1366
    %1697 = vmatpush.msra.mxu0 %v1309
    %1698 = vmatpush.msra.mxu0 %v1308
    %1699 = vmatmul.f32.gmra.mxu0 %v1681
    %v1700 = vpop.f32.mrf.mxu0
    %v1701 = vadd.f32 0.0, %v1700
    %1702 = vdwg.mxu0
    %v1703 = vadd.f32 %v1357, %v1701
    %v1704 = vxor.u32 %v1703, 2147483648
    %v1705 = vmul.f32 %v1704, 1.442695
    %v1706 = vpow.pop %v1705
    %v1707 = vadd.f32 %v1706, 1.0
    %v1708 = vrcp.pop %v1707
    %v1709 = vmul.f32 %v1707, %v1708
    %v1710 = vsub.f32 1.0, %v1709
    %v1711 = vmul.f32 %v1708, %v1710
    %v1712 = vadd.f32 %v1708, %v1711
    %vm1713 = vweird.f32 %v1707
    %vm1714 = vweird.f32 %v1708
    %vm1715 = vmor %vm1713, %vm1714
    %v1716 = vsel %vm1715, %v1708, %v1712
    %v1717 = vand.u32 2147483647, %v1707
    %vm1718 = vcmp.eq.f32.partialorder %v1717, 8.507059e+37
    %v1719 = vand.u32 %v1707, 2147483648
    %v1720 = vor.u32 1.1754944e-38, %v1719
    %v1721 = vsel %vm1718, %v1720, %v1716
    %v1722 = vmul.f32 1.0, %v1721
    %v1723 = vtanh.pop %v1703
    %v1724 = vmul.f32 %v1722, %v1671
    %1726 = vrot.lane.b32.xlu0 %v1723, 68
    %v1727 = vpop.permute.xlu0 %1726
    %v1729 = vmul.f32 %v1722, %v1727
    %1731 = vrot.lane.b32.xlu0 %v1729, 20
    %v1732 = vpop.permute.xlu0 %1731
    %v1734 = vadd.f32 %v1724, %v1732
    %v1735 = vtanh.pop %v1734
    %1737 = vrot.lane.b32.xlu0 %v1735, 20
    %v1738 = vpop.permute.xlu0 %1737
    %v1740 = vmul.f32 %v1722, %v1738
    %1742 = vrot.lane.b32.xlu0 %v1740, 88
    %v1743 = vpop.permute.xlu0 %1742
    %v1744 = vsel %vm164, %v1743, 0
    %1746 = vmatpush.msra.mxu0 0.0
    %1747 = vmatpush.msra.mxu0 0.0
    %1748 = vmatpush.msra.mxu0 0.0
    %1749 = vmatpush.msra.mxu0 0.0
    %1750 = vmatpush.msra.mxu0 0.0
    %1751 = vmatpush.msra.mxu0 0.0
    %1752 = vmatpush.msra.mxu0 0.0
    %1753 = vmatpush.msra.mxu0 0.0
    %1754 = vmatpush.msra.mxu0 0.0
    %1755 = vmatpush.msra.mxu0 0.0
    %1756 = vmatpush.msra.mxu0 0.0
    %1757 = vmatpush.msra.mxu0 0.0
    %1758 = vmatpush.msra.mxu0 0.0
    %1759 = vmatpush.msra.mxu0 %v1366
    %1760 = vmatpush.msra.mxu0 %v1309
    %1761 = vmatpush.msra.mxu0 %v1308
    %1762 = vmatmul.f32.gmra.mxu0 %v1744
    %v1763 = vpop.f32.mrf.mxu0
    %v1764 = vadd.f32 0.0, %v1763
    %1765 = vdwg.mxu0
    %v1766 = vadd.f32 %v1360, %v1764
    %v1767 = vxor.u32 %v1766, 2147483648
    %v1768 = vmul.f32 %v1767, 1.442695
    %v1769 = vpow.pop %v1768
    %v1770 = vadd.f32 %v1769, 1.0
    %v1771 = vrcp.pop %v1770
    %v1772 = vmul.f32 %v1770, %v1771
    %v1773 = vsub.f32 1.0, %v1772
    %v1774 = vmul.f32 %v1771, %v1773
    %v1775 = vadd.f32 %v1771, %v1774
    %vm1776 = vweird.f32 %v1770
    %vm1777 = vweird.f32 %v1771
    %vm1778 = vmor %vm1776, %vm1777
    %v1779 = vsel %vm1778, %v1771, %v1775
    %v1780 = vand.u32 2147483647, %v1770
    %vm1781 = vcmp.eq.f32.partialorder %v1780, 8.507059e+37
    %v1782 = vand.u32 %v1770, 2147483648
    %v1783 = vor.u32 1.1754944e-38, %v1782
    %v1784 = vsel %vm1781, %v1783, %v1779
    %v1785 = vmul.f32 1.0, %v1784
    %v1786 = vtanh.pop %v1766
    %v1787 = vmul.f32 %v1785, %v1734
    %1789 = vrot.lane.b32.xlu0 %v1786, 68
    %v1790 = vpop.permute.xlu0 %1789
    %v1792 = vmul.f32 %v1785, %v1790
    %1794 = vrot.lane.b32.xlu0 %v1792, 20
    %v1795 = vpop.permute.xlu0 %1794
    %v1797 = vadd.f32 %v1787, %v1795
    %v1798 = vtanh.pop %v1797
    %1800 = vrot.lane.b32.xlu0 %v1798, 20
    %v1801 = vpop.permute.xlu0 %1800
    %v1803 = vmul.f32 %v1785, %v1801
    %1805 = vrot.lane.b32.xlu0 %v1803, 88
    %v1806 = vpop.permute.xlu0 %1805
    %v1807 = vsel %vm164, %v1806, 0
    %1809 = vmatpush.msra.mxu0 0.0
    %1810 = vmatpush.msra.mxu0 0.0
    %1811 = vmatpush.msra.mxu0 0.0
    %1812 = vmatpush.msra.mxu0 0.0
    %1813 = vmatpush.msra.mxu0 0.0
    %1814 = vmatpush.msra.mxu0 0.0
    %1815 = vmatpush.msra.mxu0 0.0
    %1816 = vmatpush.msra.mxu0 0.0
    %1817 = vmatpush.msra.mxu0 0.0
    %1818 = vmatpush.msra.mxu0 0.0
    %1819 = vmatpush.msra.mxu0 0.0
    %1820 = vmatpush.msra.mxu0 0.0
    %1821 = vmatpush.msra.mxu0 0.0
    %1822 = vmatpush.msra.mxu0 %v1366
    %1823 = vmatpush.msra.mxu0 %v1309
    %1824 = vmatpush.msra.mxu0 %v1308
    %1825 = vmatmul.f32.gmra.mxu0 %v1807
    %v1826 = vpop.f32.mrf.mxu0
    %v1827 = vadd.f32 0.0, %v1826
    %1828 = vdwg.mxu0
    %v1829 = vadd.f32 %v1363, %v1827
    %v1830 = vxor.u32 %v1829, 2147483648
    %v1831 = vmul.f32 %v1830, 1.442695
    %v1832 = vpow.pop %v1831
    %v1833 = vadd.f32 %v1832, 1.0
    %v1834 = vrcp.pop %v1833
    %v1835 = vmul.f32 %v1833, %v1834
    %v1836 = vsub.f32 1.0, %v1835
    %v1837 = vmul.f32 %v1834, %v1836
    %v1838 = vadd.f32 %v1834, %v1837
    %vm1839 = vweird.f32 %v1833
    %vm1840 = vweird.f32 %v1834
    %vm1841 = vmor %vm1839, %vm1840
    %v1842 = vsel %vm1841, %v1834, %v1838
    %v1843 = vand.u32 2147483647, %v1833
    %vm1844 = vcmp.eq.f32.partialorder %v1843, 8.507059e+37
    %v1845 = vand.u32 %v1833, 2147483648
    %v1846 = vor.u32 1.1754944e-38, %v1845
    %v1847 = vsel %vm1844, %v1846, %v1842
    %v1848 = vmul.f32 1.0, %v1847
    %v1849 = vtanh.pop %v1829
    %v1850 = vmul.f32 %v1848, %v1797
    %1852 = vrot.lane.b32.xlu0 %v1849, 68
    %v1853 = vpop.permute.xlu0 %1852
    %v1855 = vmul.f32 %v1848, %v1853
    %1857 = vrot.lane.b32.xlu0 %v1855, 20
    %v1858 = vpop.permute.xlu0 %1857
    %v1860 = vadd.f32 %v1850, %v1858
    %v1861 = vtanh.pop %v1860
    %1863 = vrot.lane.b32.xlu0 %v1861, 20
    %v1864 = vpop.permute.xlu0 %1863
    %v1866 = vmul.f32 %v1848, %v1864
    %s1867 = scalar_lea.vmem %s2, 72
    %v1868 = vld [vmem:[%s1867] sm:$0xff]
    %v1869 = vld [vmem:[%s1867 + $0x8] sm:$0xff]
    %v1870 = vld [vmem:[%s1867 + $0x10] sm:$0xf]
    %s1871 = scalar_lea.vmem %s3, 72
    %v1872 = vld [vmem:[%s1871] sm:$0xff]
    %v1873 = vld [vmem:[%s1871 + $0x8] sm:$0xff]
    %v1874 = vld [vmem:[%s1871 + $0x10] sm:$0xf]
    %s1875 = scalar_lea.vmem %s4, 3
    %v1876 = vld [vmem:[%s1875] sm:$0x1]
    %v1878 = vperm.slane %v1876, 0
    %1881 = vrot.lane.b32.xlu0 %v1866, 88
    %v1882 = vpop.permute.xlu0 %1881
    %v1883 = vsel %vm164, %v1882, 0
    %v1886 = vsel %vm189, %v1870, 0
    %1888 = vmatpush.msra.mxu0 0.0
    %1889 = vmatpush.msra.mxu0 0.0
    %1890 = vmatpush.msra.mxu0 0.0
    %1891 = vmatpush.msra.mxu0 0.0
    %1892 = vmatpush.msra.mxu0 0.0
    %1893 = vmatpush.msra.mxu0 0.0
    %1894 = vmatpush.msra.mxu0 0.0
    %1895 = vmatpush.msra.mxu0 0.0
    %1896 = vmatpush.msra.mxu0 0.0
    %1897 = vmatpush.msra.mxu0 0.0
    %1898 = vmatpush.msra.mxu0 0.0
    %1899 = vmatpush.msra.mxu0 0.0
    %1900 = vmatpush.msra.mxu0 0.0
    %1901 = vmatpush.msra.mxu0 %v1886
    %1902 = vmatpush.msra.mxu0 %v1869
    %1903 = vmatpush.msra.mxu0 %v1868
    %1904 = vmatmul.f32.gmra.mxu0 %v1429
    %v1905 = vpop.f32.mrf.mxu0
    %v1906 = vadd.f32 %v1878, %v1905
    %1907 = vmatmul.f32.gmra.mxu0 %v1492
    %v1908 = vpop.f32.mrf.mxu0
    %v1909 = vadd.f32 %v1878, %v1908
    %1910 = vmatmul.f32.gmra.mxu0 %v1555
    %v1911 = vpop.f32.mrf.mxu0
    %v1912 = vadd.f32 %v1878, %v1911
    %1913 = vmatmul.f32.gmra.mxu0 %v1618
    %v1914 = vpop.f32.mrf.mxu0
    %v1915 = vadd.f32 %v1878, %v1914
    %1916 = vmatmul.f32.gmra.mxu0 %v1681
    %v1917 = vpop.f32.mrf.mxu0
    %v1918 = vadd.f32 %v1878, %v1917
    %1919 = vmatmul.f32.gmra.mxu0 %v1744
    %v1920 = vpop.f32.mrf.mxu0
    %v1921 = vadd.f32 %v1878, %v1920
    %1922 = vmatmul.f32.gmra.mxu0 %v1807
    %v1923 = vpop.f32.mrf.mxu0
    %v1924 = vadd.f32 %v1878, %v1923
    %1925 = vmatmul.f32.gmra.mxu0 %v1883
    %v1926 = vpop.f32.mrf.mxu0
    %v1927 = vadd.f32 %v1878, %v1926
    %1928 = vdwg.mxu0
    %v1930 = vsel %vm189, %v1874, 0
    %1932 = vmatpush.msra.mxu0 0.0
    %1933 = vmatpush.msra.mxu0 0.0
    %1934 = vmatpush.msra.mxu0 0.0
    %1935 = vmatpush.msra.mxu0 0.0
    %1936 = vmatpush.msra.mxu0 0.0
    %1937 = vmatpush.msra.mxu0 0.0
    %1938 = vmatpush.msra.mxu0 0.0
    %1939 = vmatpush.msra.mxu0 0.0
    %1940 = vmatpush.msra.mxu0 0.0
    %1941 = vmatpush.msra.mxu0 0.0
    %1942 = vmatpush.msra.mxu0 0.0
    %1943 = vmatpush.msra.mxu0 0.0
    %1944 = vmatpush.msra.mxu0 0.0
    %1945 = vmatpush.msra.mxu0 %v1930
    %1946 = vmatpush.msra.mxu0 %v1873
    %1947 = vmatpush.msra.mxu0 %v1872
    %1948 = vmatmul.f32.gmra.mxu0 %v235
    %v1949 = vpop.f32.mrf.mxu0
    %v1950 = vadd.f32 0.0, %v1949
    %1951 = vdwg.mxu0
    %v1952 = vadd.f32 %v1906, %v1950
    %v1953 = vxor.u32 %v1952, 2147483648
    %v1954 = vmul.f32 %v1953, 1.442695
    %v1955 = vpow.pop %v1954
    %v1956 = vadd.f32 %v1955, 1.0
    %v1957 = vrcp.pop %v1956
    %v1958 = vmul.f32 %v1956, %v1957
    %v1959 = vsub.f32 1.0, %v1958
    %v1960 = vmul.f32 %v1957, %v1959
    %v1961 = vadd.f32 %v1957, %v1960
    %vm1962 = vweird.f32 %v1956
    %vm1963 = vweird.f32 %v1957
    %vm1964 = vmor %vm1962, %vm1963
    %v1965 = vsel %vm1964, %v1957, %v1961
    %v1966 = vand.u32 2147483647, %v1956
    %vm1967 = vcmp.eq.f32.partialorder %v1966, 8.507059e+37
    %v1968 = vand.u32 %v1956, 2147483648
    %v1969 = vor.u32 1.1754944e-38, %v1968
    %v1970 = vsel %vm1967, %v1969, %v1965
    %v1971 = vmul.f32 1.0, %v1970
    %v1972 = vtanh.pop %v1952
    %v1973 = vmul.f32 %v1971, 0.0
    %1975 = vrot.lane.b32.xlu0 %v1972, 68
    %v1976 = vpop.permute.xlu0 %1975
    %v1978 = vmul.f32 %v1971, %v1976
    %1980 = vrot.lane.b32.xlu0 %v1978, 20
    %v1981 = vpop.permute.xlu0 %1980
    %v1983 = vadd.f32 %v1973, %v1981
    %v1984 = vtanh.pop %v1983
    %1986 = vrot.lane.b32.xlu0 %v1984, 20
    %v1987 = vpop.permute.xlu0 %1986
    %v1989 = vmul.f32 %v1971, %v1987
    %1991 = vrot.lane.b32.xlu0 %v1989, 88
    %v1992 = vpop.permute.xlu0 %1991
    %v1993 = vsel %vm164, %v1992, 0
    %1995 = vmatpush.msra.mxu0 0.0
    %1996 = vmatpush.msra.mxu0 0.0
    %1997 = vmatpush.msra.mxu0 0.0
    %1998 = vmatpush.msra.mxu0 0.0
    %1999 = vmatpush.msra.mxu0 0.0
    %2000 = vmatpush.msra.mxu0 0.0
    %2001 = vmatpush.msra.mxu0 0.0
    %2002 = vmatpush.msra.mxu0 0.0
    %2003 = vmatpush.msra.mxu0 0.0
    %2004 = vmatpush.msra.mxu0 0.0
    %2005 = vmatpush.msra.mxu0 0.0
    %2006 = vmatpush.msra.mxu0 0.0
    %2007 = vmatpush.msra.mxu0 0.0
    %2008 = vmatpush.msra.mxu0 %v1930
    %2009 = vmatpush.msra.mxu0 %v1873
    %2010 = vmatpush.msra.mxu0 %v1872
    %2011 = vmatmul.f32.gmra.mxu0 %v1993
    %v2012 = vpop.f32.mrf.mxu0
    %v2013 = vadd.f32 0.0, %v2012
    %2014 = vdwg.mxu0
    %v2015 = vadd.f32 %v1909, %v2013
    %v2016 = vxor.u32 %v2015, 2147483648
    %v2017 = vmul.f32 %v2016, 1.442695
    %v2018 = vpow.pop %v2017
    %v2019 = vadd.f32 %v2018, 1.0
    %v2020 = vrcp.pop %v2019
    %v2021 = vmul.f32 %v2019, %v2020
    %v2022 = vsub.f32 1.0, %v2021
    %v2023 = vmul.f32 %v2020, %v2022
    %v2024 = vadd.f32 %v2020, %v2023
    %vm2025 = vweird.f32 %v2019
    %vm2026 = vweird.f32 %v2020
    %vm2027 = vmor %vm2025, %vm2026
    %v2028 = vsel %vm2027, %v2020, %v2024
    %v2029 = vand.u32 2147483647, %v2019
    %vm2030 = vcmp.eq.f32.partialorder %v2029, 8.507059e+37
    %v2031 = vand.u32 %v2019, 2147483648
    %v2032 = vor.u32 1.1754944e-38, %v2031
    %v2033 = vsel %vm2030, %v2032, %v2028
    %v2034 = vmul.f32 1.0, %v2033
    %v2035 = vtanh.pop %v2015
    %v2036 = vmul.f32 %v2034, %v1983
    %2038 = vrot.lane.b32.xlu0 %v2035, 68
    %v2039 = vpop.permute.xlu0 %2038
    %v2041 = vmul.f32 %v2034, %v2039
    %2043 = vrot.lane.b32.xlu0 %v2041, 20
    %v2044 = vpop.permute.xlu0 %2043
    %v2046 = vadd.f32 %v2036, %v2044
    %v2047 = vtanh.pop %v2046
    %2049 = vrot.lane.b32.xlu0 %v2047, 20
    %v2050 = vpop.permute.xlu0 %2049
    %v2052 = vmul.f32 %v2034, %v2050
    %2054 = vrot.lane.b32.xlu0 %v2052, 88
    %v2055 = vpop.permute.xlu0 %2054
    %v2056 = vsel %vm164, %v2055, 0
    %2058 = vmatpush.msra.mxu0 0.0
    %2059 = vmatpush.msra.mxu0 0.0
    %2060 = vmatpush.msra.mxu0 0.0
    %2061 = vmatpush.msra.mxu0 0.0
    %2062 = vmatpush.msra.mxu0 0.0
    %2063 = vmatpush.msra.mxu0 0.0
    %2064 = vmatpush.msra.mxu0 0.0
    %2065 = vmatpush.msra.mxu0 0.0
    %2066 = vmatpush.msra.mxu0 0.0
    %2067 = vmatpush.msra.mxu0 0.0
    %2068 = vmatpush.msra.mxu0 0.0
    %2069 = vmatpush.msra.mxu0 0.0
    %2070 = vmatpush.msra.mxu0 0.0
    %2071 = vmatpush.msra.mxu0 %v1930
    %2072 = vmatpush.msra.mxu0 %v1873
    %2073 = vmatpush.msra.mxu0 %v1872
    %2074 = vmatmul.f32.gmra.mxu0 %v2056
    %v2075 = vpop.f32.mrf.mxu0
    %v2076 = vadd.f32 0.0, %v2075
    %2077 = vdwg.mxu0
    %v2078 = vadd.f32 %v1912, %v2076
    %v2079 = vxor.u32 %v2078, 2147483648
    %v2080 = vmul.f32 %v2079, 1.442695
    %v2081 = vpow.pop %v2080
    %v2082 = vadd.f32 %v2081, 1.0
    %v2083 = vrcp.pop %v2082
    %v2084 = vmul.f32 %v2082, %v2083
    %v2085 = vsub.f32 1.0, %v2084
    %v2086 = vmul.f32 %v2083, %v2085
    %v2087 = vadd.f32 %v2083, %v2086
    %vm2088 = vweird.f32 %v2082
    %vm2089 = vweird.f32 %v2083
    %vm2090 = vmor %vm2088, %vm2089
    %v2091 = vsel %vm2090, %v2083, %v2087
    %v2092 = vand.u32 2147483647, %v2082
    %vm2093 = vcmp.eq.f32.partialorder %v2092, 8.507059e+37
    %v2094 = vand.u32 %v2082, 2147483648
    %v2095 = vor.u32 1.1754944e-38, %v2094
    %v2096 = vsel %vm2093, %v2095, %v2091
    %v2097 = vmul.f32 1.0, %v2096
    %v2098 = vtanh.pop %v2078
    %v2099 = vmul.f32 %v2097, %v2046
    %2101 = vrot.lane.b32.xlu0 %v2098, 68
    %v2102 = vpop.permute.xlu0 %2101
    %v2104 = vmul.f32 %v2097, %v2102
    %2106 = vrot.lane.b32.xlu0 %v2104, 20
    %v2107 = vpop.permute.xlu0 %2106
    %v2109 = vadd.f32 %v2099, %v2107
    %v2110 = vtanh.pop %v2109
    %2112 = vrot.lane.b32.xlu0 %v2110, 20
    %v2113 = vpop.permute.xlu0 %2112
    %v2115 = vmul.f32 %v2097, %v2113
    %2117 = vrot.lane.b32.xlu0 %v2115, 88
    %v2118 = vpop.permute.xlu0 %2117
    %v2119 = vsel %vm164, %v2118, 0
    %2121 = vmatpush.msra.mxu0 0.0
    %2122 = vmatpush.msra.mxu0 0.0
    %2123 = vmatpush.msra.mxu0 0.0
    %2124 = vmatpush.msra.mxu0 0.0
    %2125 = vmatpush.msra.mxu0 0.0
    %2126 = vmatpush.msra.mxu0 0.0
    %2127 = vmatpush.msra.mxu0 0.0
    %2128 = vmatpush.msra.mxu0 0.0
    %2129 = vmatpush.msra.mxu0 0.0
    %2130 = vmatpush.msra.mxu0 0.0
    %2131 = vmatpush.msra.mxu0 0.0
    %2132 = vmatpush.msra.mxu0 0.0
    %2133 = vmatpush.msra.mxu0 0.0
    %2134 = vmatpush.msra.mxu0 %v1930
    %2135 = vmatpush.msra.mxu0 %v1873
    %2136 = vmatpush.msra.mxu0 %v1872
    %2137 = vmatmul.f32.gmra.mxu0 %v2119
    %v2138 = vpop.f32.mrf.mxu0
    %v2139 = vadd.f32 0.0, %v2138
    %2140 = vdwg.mxu0
    %v2141 = vadd.f32 %v1915, %v2139
    %v2142 = vxor.u32 %v2141, 2147483648
    %v2143 = vmul.f32 %v2142, 1.442695
    %v2144 = vpow.pop %v2143
    %v2145 = vadd.f32 %v2144, 1.0
    %v2146 = vrcp.pop %v2145
    %v2147 = vmul.f32 %v2145, %v2146
    %v2148 = vsub.f32 1.0, %v2147
    %v2149 = vmul.f32 %v2146, %v2148
    %v2150 = vadd.f32 %v2146, %v2149
    %vm2151 = vweird.f32 %v2145
    %vm2152 = vweird.f32 %v2146
    %vm2153 = vmor %vm2151, %vm2152
    %v2154 = vsel %vm2153, %v2146, %v2150
    %v2155 = vand.u32 2147483647, %v2145
    %vm2156 = vcmp.eq.f32.partialorder %v2155, 8.507059e+37
    %v2157 = vand.u32 %v2145, 2147483648
    %v2158 = vor.u32 1.1754944e-38, %v2157
    %v2159 = vsel %vm2156, %v2158, %v2154
    %v2160 = vmul.f32 1.0, %v2159
    %v2161 = vtanh.pop %v2141
    %v2162 = vmul.f32 %v2160, %v2109
    %2164 = vrot.lane.b32.xlu0 %v2161, 68
    %v2165 = vpop.permute.xlu0 %2164
    %v2167 = vmul.f32 %v2160, %v2165
    %2169 = vrot.lane.b32.xlu0 %v2167, 20
    %v2170 = vpop.permute.xlu0 %2169
    %v2172 = vadd.f32 %v2162, %v2170
    %v2173 = vtanh.pop %v2172
    %2175 = vrot.lane.b32.xlu0 %v2173, 20
    %v2176 = vpop.permute.xlu0 %2175
    %v2178 = vmul.f32 %v2160, %v2176
    %2180 = vrot.lane.b32.xlu0 %v2178, 88
    %v2181 = vpop.permute.xlu0 %2180
    %v2182 = vsel %vm164, %v2181, 0
    %2184 = vmatpush.msra.mxu0 0.0
    %2185 = vmatpush.msra.mxu0 0.0
    %2186 = vmatpush.msra.mxu0 0.0
    %2187 = vmatpush.msra.mxu0 0.0
    %2188 = vmatpush.msra.mxu0 0.0
    %2189 = vmatpush.msra.mxu0 0.0
    %2190 = vmatpush.msra.mxu0 0.0
    %2191 = vmatpush.msra.mxu0 0.0
    %2192 = vmatpush.msra.mxu0 0.0
    %2193 = vmatpush.msra.mxu0 0.0
    %2194 = vmatpush.msra.mxu0 0.0
    %2195 = vmatpush.msra.mxu0 0.0
    %2196 = vmatpush.msra.mxu0 0.0
    %2197 = vmatpush.msra.mxu0 %v1930
    %2198 = vmatpush.msra.mxu0 %v1873
    %2199 = vmatpush.msra.mxu0 %v1872
    %2200 = vmatmul.f32.gmra.mxu0 %v2182
    %v2201 = vpop.f32.mrf.mxu0
    %v2202 = vadd.f32 0.0, %v2201
    %2203 = vdwg.mxu0
    %v2204 = vadd.f32 %v1918, %v2202
    %v2205 = vxor.u32 %v2204, 2147483648
    %v2206 = vmul.f32 %v2205, 1.442695
    %v2207 = vpow.pop %v2206
    %v2208 = vadd.f32 %v2207, 1.0
    %v2209 = vrcp.pop %v2208
    %v2210 = vmul.f32 %v2208, %v2209
    %v2211 = vsub.f32 1.0, %v2210
    %v2212 = vmul.f32 %v2209, %v2211
    %v2213 = vadd.f32 %v2209, %v2212
    %vm2214 = vweird.f32 %v2208
    %vm2215 = vweird.f32 %v2209
    %vm2216 = vmor %vm2214, %vm2215
    %v2217 = vsel %vm2216, %v2209, %v2213
    %v2218 = vand.u32 2147483647, %v2208
    %vm2219 = vcmp.eq.f32.partialorder %v2218, 8.507059e+37
    %v2220 = vand.u32 %v2208, 2147483648
    %v2221 = vor.u32 1.1754944e-38, %v2220
    %v2222 = vsel %vm2219, %v2221, %v2217
    %v2223 = vmul.f32 1.0, %v2222
    %v2224 = vtanh.pop %v2204
    %v2225 = vmul.f32 %v2223, %v2172
    %2227 = vrot.lane.b32.xlu0 %v2224, 68
    %v2228 = vpop.permute.xlu0 %2227
    %v2230 = vmul.f32 %v2223, %v2228
    %2232 = vrot.lane.b32.xlu0 %v2230, 20
    %v2233 = vpop.permute.xlu0 %2232
    %v2235 = vadd.f32 %v2225, %v2233
    %v2236 = vtanh.pop %v2235
    %2238 = vrot.lane.b32.xlu0 %v2236, 20
    %v2239 = vpop.permute.xlu0 %2238
    %v2241 = vmul.f32 %v2223, %v2239
    %2243 = vrot.lane.b32.xlu0 %v2241, 88
    %v2244 = vpop.permute.xlu0 %2243
    %v2245 = vsel %vm164, %v2244, 0
    %2247 = vmatpush.msra.mxu0 0.0
    %2248 = vmatpush.msra.mxu0 0.0
    %2249 = vmatpush.msra.mxu0 0.0
    %2250 = vmatpush.msra.mxu0 0.0
    %2251 = vmatpush.msra.mxu0 0.0
    %2252 = vmatpush.msra.mxu0 0.0
    %2253 = vmatpush.msra.mxu0 0.0
    %2254 = vmatpush.msra.mxu0 0.0
    %2255 = vmatpush.msra.mxu0 0.0
    %2256 = vmatpush.msra.mxu0 0.0
    %2257 = vmatpush.msra.mxu0 0.0
    %2258 = vmatpush.msra.mxu0 0.0
    %2259 = vmatpush.msra.mxu0 0.0
    %2260 = vmatpush.msra.mxu0 %v1930
    %2261 = vmatpush.msra.mxu0 %v1873
    %2262 = vmatpush.msra.mxu0 %v1872
    %2263 = vmatmul.f32.gmra.mxu0 %v2245
    %v2264 = vpop.f32.mrf.mxu0
    %v2265 = vadd.f32 0.0, %v2264
    %2266 = vdwg.mxu0
    %v2267 = vadd.f32 %v1921, %v2265
    %v2268 = vxor.u32 %v2267, 2147483648
    %v2269 = vmul.f32 %v2268, 1.442695
    %v2270 = vpow.pop %v2269
    %v2271 = vadd.f32 %v2270, 1.0
    %v2272 = vrcp.pop %v2271
    %v2273 = vmul.f32 %v2271, %v2272
    %v2274 = vsub.f32 1.0, %v2273
    %v2275 = vmul.f32 %v2272, %v2274
    %v2276 = vadd.f32 %v2272, %v2275
    %vm2277 = vweird.f32 %v2271
    %vm2278 = vweird.f32 %v2272
    %vm2279 = vmor %vm2277, %vm2278
    %v2280 = vsel %vm2279, %v2272, %v2276
    %v2281 = vand.u32 2147483647, %v2271
    %vm2282 = vcmp.eq.f32.partialorder %v2281, 8.507059e+37
    %v2283 = vand.u32 %v2271, 2147483648
    %v2284 = vor.u32 1.1754944e-38, %v2283
    %v2285 = vsel %vm2282, %v2284, %v2280
    %v2286 = vmul.f32 1.0, %v2285
    %v2287 = vtanh.pop %v2267
    %v2288 = vmul.f32 %v2286, %v2235
    %2290 = vrot.lane.b32.xlu0 %v2287, 68
    %v2291 = vpop.permute.xlu0 %2290
    %v2293 = vmul.f32 %v2286, %v2291
    %2295 = vrot.lane.b32.xlu0 %v2293, 20
    %v2296 = vpop.permute.xlu0 %2295
    %v2298 = vadd.f32 %v2288, %v2296
    %v2299 = vtanh.pop %v2298
    %2301 = vrot.lane.b32.xlu0 %v2299, 20
    %v2302 = vpop.permute.xlu0 %2301
    %v2304 = vmul.f32 %v2286, %v2302
    %2306 = vrot.lane.b32.xlu0 %v2304, 88
    %v2307 = vpop.permute.xlu0 %2306
    %v2308 = vsel %vm164, %v2307, 0
    %2310 = vmatpush.msra.mxu0 0.0
    %2311 = vmatpush.msra.mxu0 0.0
    %2312 = vmatpush.msra.mxu0 0.0
    %2313 = vmatpush.msra.mxu0 0.0
    %2314 = vmatpush.msra.mxu0 0.0
    %2315 = vmatpush.msra.mxu0 0.0
    %2316 = vmatpush.msra.mxu0 0.0
    %2317 = vmatpush.msra.mxu0 0.0
    %2318 = vmatpush.msra.mxu0 0.0
    %2319 = vmatpush.msra.mxu0 0.0
    %2320 = vmatpush.msra.mxu0 0.0
    %2321 = vmatpush.msra.mxu0 0.0
    %2322 = vmatpush.msra.mxu0 0.0
    %2323 = vmatpush.msra.mxu0 %v1930
    %2324 = vmatpush.msra.mxu0 %v1873
    %2325 = vmatpush.msra.mxu0 %v1872
    %2326 = vmatmul.f32.gmra.mxu0 %v2308
    %v2327 = vpop.f32.mrf.mxu0
    %v2328 = vadd.f32 0.0, %v2327
    %2329 = vdwg.mxu0
    %v2330 = vadd.f32 %v1924, %v2328
    %v2331 = vxor.u32 %v2330, 2147483648
    %v2332 = vmul.f32 %v2331, 1.442695
    %v2333 = vpow.pop %v2332
    %v2334 = vadd.f32 %v2333, 1.0
    %v2335 = vrcp.pop %v2334
    %v2336 = vmul.f32 %v2334, %v2335
    %v2337 = vsub.f32 1.0, %v2336
    %v2338 = vmul.f32 %v2335, %v2337
    %v2339 = vadd.f32 %v2335, %v2338
    %vm2340 = vweird.f32 %v2334
    %vm2341 = vweird.f32 %v2335
    %vm2342 = vmor %vm2340, %vm2341
    %v2343 = vsel %vm2342, %v2335, %v2339
    %v2344 = vand.u32 2147483647, %v2334
    %vm2345 = vcmp.eq.f32.partialorder %v2344, 8.507059e+37
    %v2346 = vand.u32 %v2334, 2147483648
    %v2347 = vor.u32 1.1754944e-38, %v2346
    %v2348 = vsel %vm2345, %v2347, %v2343
    %v2349 = vmul.f32 1.0, %v2348
    %v2350 = vtanh.pop %v2330
    %v2351 = vmul.f32 %v2349, %v2298
    %2353 = vrot.lane.b32.xlu0 %v2350, 68
    %v2354 = vpop.permute.xlu0 %2353
    %v2356 = vmul.f32 %v2349, %v2354
    %2358 = vrot.lane.b32.xlu0 %v2356, 20
    %v2359 = vpop.permute.xlu0 %2358
    %v2361 = vadd.f32 %v2351, %v2359
    %v2362 = vtanh.pop %v2361
    %2364 = vrot.lane.b32.xlu0 %v2362, 20
    %v2365 = vpop.permute.xlu0 %2364
    %v2367 = vmul.f32 %v2349, %v2365
    %2369 = vrot.lane.b32.xlu0 %v2367, 88
    %v2370 = vpop.permute.xlu0 %2369
    %v2371 = vsel %vm164, %v2370, 0
    %2373 = vmatpush.msra.mxu0 0.0
    %2374 = vmatpush.msra.mxu0 0.0
    %2375 = vmatpush.msra.mxu0 0.0
    %2376 = vmatpush.msra.mxu0 0.0
    %2377 = vmatpush.msra.mxu0 0.0
    %2378 = vmatpush.msra.mxu0 0.0
    %2379 = vmatpush.msra.mxu0 0.0
    %2380 = vmatpush.msra.mxu0 0.0
    %2381 = vmatpush.msra.mxu0 0.0
    %2382 = vmatpush.msra.mxu0 0.0
    %2383 = vmatpush.msra.mxu0 0.0
    %2384 = vmatpush.msra.mxu0 0.0
    %2385 = vmatpush.msra.mxu0 0.0
    %2386 = vmatpush.msra.mxu0 %v1930
    %2387 = vmatpush.msra.mxu0 %v1873
    %2388 = vmatpush.msra.mxu0 %v1872
    %2389 = vmatmul.f32.gmra.mxu0 %v2371
    %v2390 = vpop.f32.mrf.mxu0
    %v2391 = vadd.f32 0.0, %v2390
    %2392 = vdwg.mxu0
    %v2393 = vadd.f32 %v1927, %v2391
    %v2394 = vxor.u32 %v2393, 2147483648
    %v2395 = vmul.f32 %v2394, 1.442695
    %v2396 = vpow.pop %v2395
    %v2397 = vadd.f32 %v2396, 1.0
    %v2398 = vrcp.pop %v2397
    %v2399 = vmul.f32 %v2397, %v2398
    %v2400 = vsub.f32 1.0, %v2399
    %v2401 = vmul.f32 %v2398, %v2400
    %v2402 = vadd.f32 %v2398, %v2401
    %vm2403 = vweird.f32 %v2397
    %vm2404 = vweird.f32 %v2398
    %vm2405 = vmor %vm2403, %vm2404
    %v2406 = vsel %vm2405, %v2398, %v2402
    %v2407 = vand.u32 2147483647, %v2397
    %vm2408 = vcmp.eq.f32.partialorder %v2407, 8.507059e+37
    %v2409 = vand.u32 %v2397, 2147483648
    %v2410 = vor.u32 1.1754944e-38, %v2409
    %v2411 = vsel %vm2408, %v2410, %v2406
    %v2412 = vmul.f32 1.0, %v2411
    %v2413 = vtanh.pop %v2393
    %v2414 = vmul.f32 %v2412, %v2361
    %2416 = vrot.lane.b32.xlu0 %v2413, 68
    %v2417 = vpop.permute.xlu0 %2416
    %v2419 = vmul.f32 %v2412, %v2417
    %2421 = vrot.lane.b32.xlu0 %v2419, 20
    %v2422 = vpop.permute.xlu0 %2421
    %v2424 = vadd.f32 %v2414, %v2422
    %v2425 = vtanh.pop %v2424
    %2427 = vrot.lane.b32.xlu0 %v2425, 20
    %v2428 = vpop.permute.xlu0 %2427
    %v2430 = vmul.f32 %v2412, %v2428
    %v2431 = vld [vmem:[%s5] sm:$0xff]
    %v2432 = vld [vmem:[%s5 + $0x8] sm:$0xff]
    %v2433 = vld [vmem:[%s5 + $0x10] sm:$0xf]
    %v2434 = vld [vmem:[%s6] sm:$0x1]
    %v2436 = vperm.slane %v2434, 0
    %2439 = vrot.lane.b32.xlu0 %v2430, 88
    %v2440 = vpop.permute.xlu0 %2439
    %v2441 = vsel %vm164, %v2440, 0
    %v2444 = vsel %vm189, %v2433, 0
    %2446 = vmatpush.msra.mxu0 0.0
    %2447 = vmatpush.msra.mxu0 0.0
    %2448 = vmatpush.msra.mxu0 0.0
    %2449 = vmatpush.msra.mxu0 0.0
    %2450 = vmatpush.msra.mxu0 0.0
    %2451 = vmatpush.msra.mxu0 0.0
    %2452 = vmatpush.msra.mxu0 0.0
    %2453 = vmatpush.msra.mxu0 0.0
    %2454 = vmatpush.msra.mxu0 0.0
    %2455 = vmatpush.msra.mxu0 0.0
    %2456 = vmatpush.msra.mxu0 0.0
    %2457 = vmatpush.msra.mxu0 0.0
    %2458 = vmatpush.msra.mxu0 0.0
    %2459 = vmatpush.msra.mxu0 %v2444
    %2460 = vmatpush.msra.mxu0 %v2432
    %2461 = vmatpush.msra.mxu0 %v2431
    %2462 = vmatmul.f32.gmra.mxu0 %v1993
    %v2463 = vpop.f32.mrf.mxu0
    %v2464 = vadd.f32 %v2436, %v2463
    %2465 = vmatmul.f32.gmra.mxu0 %v2056
    %v2466 = vpop.f32.mrf.mxu0
    %v2467 = vadd.f32 %v2436, %v2466
    %2468 = vmatmul.f32.gmra.mxu0 %v2119
    %v2469 = vpop.f32.mrf.mxu0
    %v2470 = vadd.f32 %v2436, %v2469
    %2471 = vmatmul.f32.gmra.mxu0 %v2182
    %v2472 = vpop.f32.mrf.mxu0
    %v2473 = vadd.f32 %v2436, %v2472
    %2474 = vmatmul.f32.gmra.mxu0 %v2245
    %v2475 = vpop.f32.mrf.mxu0
    %v2476 = vadd.f32 %v2436, %v2475
    %2477 = vmatmul.f32.gmra.mxu0 %v2308
    %v2478 = vpop.f32.mrf.mxu0
    %v2479 = vadd.f32 %v2436, %v2478
    %2480 = vmatmul.f32.gmra.mxu0 %v2371
    %v2481 = vpop.f32.mrf.mxu0
    %v2482 = vadd.f32 %v2436, %v2481
    %2483 = vmatmul.f32.gmra.mxu0 %v2441
    %v2484 = vpop.f32.mrf.mxu0
    %v2485 = vadd.f32 %v2436, %v2484
    %2486 = vdwg.mxu0
    %v2487 = vmax.f32 %v2464, 0.0
    %v2488 = vmax.f32 %v2467, 0.0
    %v2489 = vmax.f32 %v2470, 0.0
    %v2490 = vmax.f32 %v2473, 0.0
    %v2491 = vmax.f32 %v2476, 0.0
    %v2492 = vmax.f32 %v2479, 0.0
    %v2493 = vmax.f32 %v2482, 0.0
    %v2494 = vmax.f32 %v2485, 0.0
    %v2495 = vld [vmem:[%s7] sm:$0xff]
    %v2496 = vld [vmem:[%s7 + $0x8] sm:$0xff]
    %v2497 = vld [vmem:[%s7 + $0x10] sm:$0xff]
    %v2498 = vld [vmem:[%s7 + $0x18] sm:$0xff]
    %v2499 = vld [vmem:[%s7 + $0x20] sm:$0xff]
    %v2500 = vld [vmem:[%s7 + $0x28] sm:$0xff]
    %v2501 = vld [vmem:[%s7 + $0x30] sm:$0xff]
    %v2502 = vld [vmem:[%s7 + $0x38] sm:$0xff]
    %v2503 = vld [vmem:[#allocation2] sm:$0x1]
    %v2505 = vperm.slane %v2503, 0
    %vm2507 = vcmask 523264
    %v2509 = vsel %vm2507, %v2487, 0
    %v2512 = vsel %vm2507, %v2488, 0
    %v2515 = vsel %vm2507, %v2489, 0
    %v2518 = vsel %vm2507, %v2490, 0
    %v2521 = vsel %vm2507, %v2491, 0
    %v2524 = vsel %vm2507, %v2492, 0
    %v2527 = vsel %vm2507, %v2493, 0
    %v2530 = vsel %vm2507, %v2494, 0
    %2532 = vmatpush.msra.mxu0 0.0
    %2533 = vmatpush.msra.mxu0 0.0
    %2534 = vmatpush.msra.mxu0 0.0
    %2535 = vmatpush.msra.mxu0 0.0
    %2536 = vmatpush.msra.mxu0 0.0
    %2537 = vmatpush.msra.mxu0 0.0
    %2538 = vmatpush.msra.mxu0 0.0
    %2539 = vmatpush.msra.mxu0 0.0
    %2540 = vmatpush.msra.mxu0 %v2502
    %2541 = vmatpush.msra.mxu0 %v2501
    %2542 = vmatpush.msra.mxu0 %v2500
    %2543 = vmatpush.msra.mxu0 %v2499
    %2544 = vmatpush.msra.mxu0 %v2498
    %2545 = vmatpush.msra.mxu0 %v2497
    %2546 = vmatpush.msra.mxu0 %v2496
    %2547 = vmatpush.msra.mxu0 %v2495
    %2548 = vmatmul.f32.gmra.mxu0 %v2509
    %v2549 = vpop.f32.mrf.mxu0
    %v2550 = vadd.f32 %v2505, %v2549
    %2551 = vmatmul.f32.gmra.mxu0 %v2512
    %v2552 = vpop.f32.mrf.mxu0
    %v2553 = vadd.f32 %v2505, %v2552
    %2554 = vmatmul.f32.gmra.mxu0 %v2515
    %v2555 = vpop.f32.mrf.mxu0
    %v2556 = vadd.f32 %v2505, %v2555
    %2557 = vmatmul.f32.gmra.mxu0 %v2518
    %v2558 = vpop.f32.mrf.mxu0
    %v2559 = vadd.f32 %v2505, %v2558
    %2560 = vmatmul.f32.gmra.mxu0 %v2521
    %v2561 = vpop.f32.mrf.mxu0
    %v2562 = vadd.f32 %v2505, %v2561
    %2563 = vmatmul.f32.gmra.mxu0 %v2524
    %v2564 = vpop.f32.mrf.mxu0
    %v2565 = vadd.f32 %v2505, %v2564
    %2566 = vmatmul.f32.gmra.mxu0 %v2527
    %v2567 = vpop.f32.mrf.mxu0
    %v2568 = vadd.f32 %v2505, %v2567
    %2569 = vmatmul.f32.gmra.mxu0 %v2530
    %v2570 = vpop.f32.mrf.mxu0
    %v2571 = vadd.f32 %v2505, %v2570
    %2572 = vdwg.mxu0
    %v2573 = vmax.f32 %v2550, %v2553
    %v2574 = vmax.f32 %v2573, %v2556
    %v2575 = vmax.f32 %v2574, %v2559
    %v2576 = vmax.f32 %v2575, %v2562
    %v2577 = vmax.f32 %v2576, %v2565
    %v2578 = vmax.f32 %v2577, %v2568
    %v2579 = vmax.f32 %v2578, %v2571
    %v2580 = vsub.f32 %v2550, %v2579
    %v2581 = vmul.f32 %v2580, 1.442695
    %v2582 = vpow.pop %v2581
    %v2583 = vsub.f32 %v2553, %v2579
    %v2584 = vmul.f32 %v2583, 1.442695
    %v2585 = vpow.pop %v2584
    %v2586 = vsub.f32 %v2556, %v2579
    %v2587 = vmul.f32 %v2586, 1.442695
    %v2588 = vpow.pop %v2587
    %v2589 = vsub.f32 %v2559, %v2579
    %v2590 = vmul.f32 %v2589, 1.442695
    %v2591 = vpow.pop %v2590
    %v2592 = vsub.f32 %v2562, %v2579
    %v2593 = vmul.f32 %v2592, 1.442695
    %v2594 = vpow.pop %v2593
    %v2595 = vsub.f32 %v2565, %v2579
    %v2596 = vmul.f32 %v2595, 1.442695
    %v2597 = vpow.pop %v2596
    %v2598 = vsub.f32 %v2568, %v2579
    %v2599 = vmul.f32 %v2598, 1.442695
    %v2600 = vpow.pop %v2599
    %v2601 = vsub.f32 %v2571, %v2579
    %v2602 = vmul.f32 %v2601, 1.442695
    %v2603 = vpow.pop %v2602
    %v2604 = vadd.f32 %v2582, %v2585
    %v2605 = vadd.f32 %v2604, %v2588
    %v2606 = vadd.f32 %v2605, %v2591
    %v2607 = vadd.f32 %v2606, %v2594
    %v2608 = vadd.f32 %v2607, %v2597
    %v2609 = vadd.f32 %v2608, %v2600
    %v2610 = vadd.f32 %v2609, %v2603
    %v2611 = vrcp.pop %v2610
    %v2612 = vmul.f32 %v2610, %v2611
    %v2613 = vsub.f32 1.0, %v2612
    %v2614 = vmul.f32 %v2611, %v2613
    %v2615 = vadd.f32 %v2611, %v2614
    %vm2616 = vweird.f32 %v2610
    %vm2617 = vweird.f32 %v2611
    %vm2618 = vmor %vm2616, %vm2617
    %v2619 = vsel %vm2618, %v2611, %v2615
    %v2620 = vand.u32 2147483647, %v2610
    %vm2621 = vcmp.eq.f32.partialorder %v2620, 8.507059e+37
    %v2622 = vand.u32 %v2610, 2147483648
    %v2623 = vor.u32 1.1754944e-38, %v2622
    %v2624 = vsel %vm2621, %v2623, %v2619
    %v2625 = vmul.f32 %v2582, %v2624
    %2627 = vset.pattern.permute.xlu0 0
    %2628 = vperm.xlu0 %2627, %v2625
    %v2629 = vpop.permute.xlu0 %2628
    %v2631 = vmul.f32 %v1989, %v2629
    %v2632 = vadd.f32 %v2631, 0.0
    %v2633 = vmul.f32 %v2585, %v2624
    %2635 = vset.pattern.permute.xlu0 0
    %2636 = vperm.xlu0 %2635, %v2633
    %v2637 = vpop.permute.xlu0 %2636
    %v2639 = vmul.f32 %v2052, %v2637
    %v2640 = vadd.f32 %v2632, %v2639
    %v2641 = vmul.f32 %v2588, %v2624
    %2643 = vset.pattern.permute.xlu0 0
    %2644 = vperm.xlu0 %2643, %v2641
    %v2645 = vpop.permute.xlu0 %2644
    %v2647 = vmul.f32 %v2115, %v2645
    %v2648 = vadd.f32 %v2640, %v2647
    %v2649 = vmul.f32 %v2591, %v2624
    %2651 = vset.pattern.permute.xlu0 0
    %2652 = vperm.xlu0 %2651, %v2649
    %v2653 = vpop.permute.xlu0 %2652
    %v2655 = vmul.f32 %v2178, %v2653
    %v2656 = vadd.f32 %v2648, %v2655
    %v2657 = vmul.f32 %v2594, %v2624
    %2659 = vset.pattern.permute.xlu0 0
    %2660 = vperm.xlu0 %2659, %v2657
    %v2661 = vpop.permute.xlu0 %2660
    %v2663 = vmul.f32 %v2241, %v2661
    %v2664 = vadd.f32 %v2656, %v2663
    %v2665 = vmul.f32 %v2597, %v2624
    %2667 = vset.pattern.permute.xlu0 0
    %2668 = vperm.xlu0 %2667, %v2665
    %v2669 = vpop.permute.xlu0 %2668
    %v2671 = vmul.f32 %v2304, %v2669
    %v2672 = vadd.f32 %v2664, %v2671
    %v2673 = vmul.f32 %v2600, %v2624
    %2675 = vset.pattern.permute.xlu0 0
    %2676 = vperm.xlu0 %2675, %v2673
    %v2677 = vpop.permute.xlu0 %2676
    %v2679 = vmul.f32 %v2367, %v2677
    %v2680 = vadd.f32 %v2672, %v2679
    %v2681 = vmul.f32 %v2603, %v2624
    %2683 = vset.pattern.permute.xlu0 0
    %2684 = vperm.xlu0 %2683, %v2681
    %v2685 = vpop.permute.xlu0 %2684
    %v2687 = vmul.f32 %v2430, %v2685
    %v2688 = vadd.f32 %v2680, %v2687
    %2690 = vrot.lane.b32.xlu0 %v2688, 88
    %v2691 = vpop.permute.xlu0 %2690
    %2693 = vst.msk [vmem:[#allocation3] sm:$0xff] %vm164, %v2691
    %v2694 = vld [vmem:[%s9] sm:$0xff]
    %vm2695 = vcmask 23552
    %v2697 = vsel %vm2695, %v2694, 0
    %2699 = vmatpush.xpose.msra.mxu0 0.0
    %2700 = vmatpush.xpose.msra.mxu0 0.0
    %2701 = vmatpush.xpose.msra.mxu0 0.0
    %2702 = vmatpush.xpose.msra.mxu0 0.0
    %2703 = vmatpush.xpose.msra.mxu0 0.0
    %2704 = vmatpush.xpose.msra.mxu0 0.0
    %2705 = vmatpush.xpose.msra.mxu0 0.0
    %2706 = vmatpush.xpose.msra.mxu0 0.0
    %2707 = vmatpush.xpose.msra.mxu0 0.0
    %2708 = vmatpush.xpose.msra.mxu0 0.0
    %2709 = vmatpush.xpose.msra.mxu0 0.0
    %2710 = vmatpush.xpose.msra.mxu0 0.0
    %2711 = vmatpush.xpose.msra.mxu0 0.0
    %2712 = vmatpush.xpose.msra.mxu0 0.0
    %2713 = vmatpush.xpose.msra.mxu0 0.0
    %2714 = vmatpush.xpose.msra.mxu0 %v2697
    %2715 = vmatmul.f32.gmra.mxu0 %v2697
    %v2716 = vpop.f32.mrf.mxu0
    %v2717 = vadd.f32 0.0, %v2716
    %2718 = vdwg.mxu0
    %vm2719 = vcmp.gt.f32.partialorder %v2717, 0.0
    %v2720 = vsel %vm2719, 1.0, %v2717
    %v2721 = vsel %vm164, %v2691, 0
    %2723 = vmatpush.xpose.msra.mxu0 0.0
    %2724 = vmatpush.xpose.msra.mxu0 0.0
    %2725 = vmatpush.xpose.msra.mxu0 0.0
    %2726 = vmatpush.xpose.msra.mxu0 0.0
    %2727 = vmatpush.xpose.msra.mxu0 0.0
    %2728 = vmatpush.xpose.msra.mxu0 0.0
    %2729 = vmatpush.xpose.msra.mxu0 0.0
    %2730 = vmatpush.xpose.msra.mxu0 0.0
    %2731 = vmatpush.xpose.msra.mxu0 0.0
    %2732 = vmatpush.xpose.msra.mxu0 0.0
    %2733 = vmatpush.xpose.msra.mxu0 0.0
    %2734 = vmatpush.xpose.msra.mxu0 0.0
    %2735 = vmatpush.xpose.msra.mxu0 0.0
    %2736 = vmatpush.xpose.msra.mxu0 0.0
    %2737 = vmatpush.xpose.msra.mxu0 0.0
    %2738 = vmatpush.xpose.msra.mxu0 %v2721
    %2739 = vmatmul.f32.gmra.mxu0 %v2721
    %v2740 = vpop.f32.mrf.mxu0
    %v2741 = vadd.f32 0.0, %v2740
    %2742 = vdwg.mxu0
    %v2743 = vmul.f32 %v2688, %v2688
    %2745 = vrot.lane.b32.xlu0 %v2743, 88
    %v2746 = vpop.permute.xlu0 %2745
    %v2748 = vsel %vm164, %v2746, 0.0
    %2749 = vadd.xlane.f32.xlu0 %v2748
    %v2750 = vpop.xlane.xlu0 %2749
    %v2751 = vrsqrt.pop %v2750
    %v2752 = vmul.f32 %v2751, %v2750
    %v2753 = vmul.f32 %v2752, %v2751
    %v2754 = vmul.f32 0.5, %v2753
    %v2755 = vsub.f32 1.5, %v2754
    %v2756 = vmul.f32 %v2751, %v2755
    %v2757 = vmul.f32 %v2750, %v2756
    %vm2758 = vcmp.eq.f32.partialorder %v2750, inf
    %v2759 = vsel %vm2758, %v2750, %v2757
    %vm2760 = vcmp.eq.f32.partialorder %v2750, 0.0
    %v2761 = vand.u32 %v2750, 2147483648
    %v2762 = vsel %vm2760, %v2761, %v2759
    %vm2763 = vcmask 7168
    %v2765 = vsel %vm2763, %v2762, 0
    %2767 = vmatpush.xpose.msra.mxu0 0.0
    %2768 = vmatpush.xpose.msra.mxu0 0.0
    %2769 = vmatpush.xpose.msra.mxu0 0.0
    %2770 = vmatpush.xpose.msra.mxu0 0.0
    %2771 = vmatpush.xpose.msra.mxu0 0.0
    %2772 = vmatpush.xpose.msra.mxu0 0.0
    %2773 = vmatpush.xpose.msra.mxu0 0.0
    %2774 = vmatpush.xpose.msra.mxu0 0.0
    %2775 = vmatpush.xpose.msra.mxu0 0.0
    %2776 = vmatpush.xpose.msra.mxu0 0.0
    %2777 = vmatpush.xpose.msra.mxu0 0.0
    %2778 = vmatpush.xpose.msra.mxu0 0.0
    %2779 = vmatpush.xpose.msra.mxu0 0.0
    %2780 = vmatpush.xpose.msra.mxu0 0.0
    %2781 = vmatpush.xpose.msra.mxu0 0.0
    %2782 = vmatpush.xpose.msra.mxu0 %v2765
    %2783 = vmatmul.f32.gmra.mxu0 %v2765
    %v2784 = vpop.f32.mrf.mxu0
    %v2785 = vadd.f32 0.0, %v2784
    %2786 = vdwg.mxu0
    %v2787 = vmax.f32 %v2785, 1e-12
    %v2788 = vrcp.pop %v2787
    %v2789 = vmul.f32 %v2787, %v2788
    %v2790 = vsub.f32 1.0, %v2789
    %v2791 = vmul.f32 %v2788, %v2790
    %v2792 = vadd.f32 %v2788, %v2791
    %vm2793 = vweird.f32 %v2787
    %vm2794 = vweird.f32 %v2788
    %vm2795 = vmor %vm2793, %vm2794
    %v2796 = vsel %vm2795, %v2788, %v2792
    %v2797 = vand.u32 2147483647, %v2787
    %vm2798 = vcmp.eq.f32.partialorder %v2797, 8.507059e+37
    %v2799 = vand.u32 %v2787, 2147483648
    %v2800 = vor.u32 1.1754944e-38, %v2799
    %v2801 = vsel %vm2798, %v2800, %v2796
    %v2802 = vmul.f32 %v2741, %v2801
    %v2803 = vmul.f32 %v2802, %v2720
    %v2804 = vlaneseq
    %v2805 = vand.u32 %v2804, 127
    %v2806 = vcvt.s32.f32 %v2805
    %v2807 = vlaneseq
    %v2808 = vshrl.u32 %v2807, 7
    %v2809 = vcvt.s32.f32 %v2808
    %vm2810 = vcmask 64512
    %v2811 = vsel %vm2810, %v2803, -inf
    %2812 = vmax.xlane.f32.xlu0 %v2811
    %v2813 = vpop.xlane.xlu0 %2812
    %vm2814 = vcmp.eq.f32.partialorder %v2803, %v2813
    %v2815 = vsel %vm2814, %v2806, 8.0
    %v2816 = vsel %vm2810, %v2815, inf
    %2817 = vmin.xlane.f32.xlu0 %v2816
    %v2818 = vpop.xlane.xlu0 %2817
    %vm2819 = vcmp.eq.f32.partialorder %v2806, %v2818
    %v2820 = vsel %vm2819, 1, 0
    %v2821 = vcvt.s32.f32 %v2820
    %vm2822 = vcmp.gt.f32.partialorder %v2821, 0.0
    %v2823 = vsel %vm2822, -1e+30, %v2803
    %v2824 = vsel %vm2810, %v2823, -inf
    %2825 = vmax.xlane.f32.xlu0 %v2824
    %v2826 = vpop.xlane.xlu0 %2825
    %vm2827 = vcmp.eq.f32.partialorder %v2823, %v2826
    %v2828 = vsel %vm2827, %v2806, 8.0
    %v2829 = vsel %vm2810, %v2828, inf
    %2830 = vmin.xlane.f32.xlu0 %v2829
    %v2831 = vpop.xlane.xlu0 %2830
    %vm2832 = vcmp.eq.f32.partialorder %v2806, %v2831
    %v2833 = vsel %vm2832, 1, 0
    %v2834 = vcvt.s32.f32 %v2833
    %v2835 = vadd.f32 %v2834, 0.0
    %vm2836 = vcmp.gt.f32.partialorder %v2834, 0.0
    %v2837 = vsel %vm2836, -1e+30, %v2823
    %v2838 = vsel %vm2810, %v2837, -inf
    %2839 = vmax.xlane.f32.xlu0 %v2838
    %v2840 = vpop.xlane.xlu0 %2839
    %vm2841 = vcmp.eq.f32.partialorder %v2837, %v2840
    %v2842 = vsel %vm2841, %v2806, 8.0
    %v2843 = vsel %vm2810, %v2842, inf
    %2844 = vmin.xlane.f32.xlu0 %v2843
    %v2845 = vpop.xlane.xlu0 %2844
    %vm2846 = vcmp.eq.f32.partialorder %v2806, %v2845
    %v2847 = vsel %vm2846, 1, 0
    %v2848 = vcvt.s32.f32 %v2847
    %v2849 = vadd.f32 %v2835, %v2848
    %vm2850 = vcmp.gt.f32.partialorder %v2848, 0.0
    %v2851 = vsel %vm2850, -1e+30, %v2837
    %v2852 = vsel %vm2810, %v2851, -inf
    %2853 = vmax.xlane.f32.xlu0 %v2852
    %v2854 = vpop.xlane.xlu0 %2853
    %vm2855 = vcmp.eq.f32.partialorder %v2851, %v2854
    %v2856 = vsel %vm2855, %v2806, 8.0
    %v2857 = vsel %vm2810, %v2856, inf
    %2858 = vmin.xlane.f32.xlu0 %v2857
    %v2859 = vpop.xlane.xlu0 %2858
    %vm2860 = vcmp.eq.f32.partialorder %v2806, %v2859
    %v2861 = vsel %vm2860, 1, 0
    %v2862 = vcvt.s32.f32 %v2861
    %v2863 = vadd.f32 %v2849, %v2862
    %vm2864 = vcmp.gt.f32.partialorder %v2862, 0.0
    %v2865 = vsel %vm2864, -1e+30, %v2851
    %v2866 = vsel %vm2810, %v2865, -inf
    %2867 = vmax.xlane.f32.xlu0 %v2866
    %v2868 = vpop.xlane.xlu0 %2867
    %vm2869 = vcmp.eq.f32.partialorder %v2865, %v2868
    %v2870 = vsel %vm2869, %v2806, 8.0
    %v2871 = vsel %vm2810, %v2870, inf
    %2872 = vmin.xlane.f32.xlu0 %v2871
    %v2873 = vpop.xlane.xlu0 %2872
    %vm2874 = vcmp.eq.f32.partialorder %v2806, %v2873
    %v2875 = vsel %vm2874, 1, 0
    %v2876 = vcvt.s32.f32 %v2875
    %v2877 = vadd.f32 %v2863, %v2876
    %vm2878 = vcmp.gt.f32.partialorder %v2876, 0.0
    %v2879 = vsel %vm2878, -1e+30, %v2865
    %v2880 = vsel %vm2810, %v2879, -inf
    %2881 = vmax.xlane.f32.xlu0 %v2880
    %v2882 = vpop.xlane.xlu0 %2881
    %vm2883 = vcmp.eq.f32.partialorder %v2879, %v2882
    %v2884 = vsel %vm2883, %v2806, 8.0
    %v2885 = vsel %vm2810, %v2884, inf
    %2886 = vmin.xlane.f32.xlu0 %v2885
    %v2887 = vpop.xlane.xlu0 %2886
    %vm2888 = vcmp.eq.f32.partialorder %v2806, %v2887
    %v2889 = vsel %vm2888, 1, 0
    %v2890 = vcvt.s32.f32 %v2889
    %v2891 = vadd.f32 %v2877, %v2890
    %vm2892 = vcmp.eq.f32.partialorder %v2809, %v2806
    %v2893 = vsel %vm2892, 1, 0
    %v2894 = vcvt.s32.f32 %v2893
    %2895 = vxpose.xlu0.b32.start [1/16] %v2891, 128
    %2896 = vxpose.xlu0.b32.cont [2/16] 0.0, 128
    %2897 = vxpose.xlu0.b32.cont [3/16] 0.0, 128
    %2898 = vxpose.xlu0.b32.cont [4/16] 0.0, 128
    %2899 = vxpose.xlu0.b32.cont [5/16] 0.0, 128
    %2900 = vxpose.xlu0.b32.cont [6/16] 0.0, 128
    %2901 = vxpose.xlu0.b32.cont [7/16] 0.0, 128
    %2902 = vxpose.xlu0.b32.cont [8/16] 0.0, 128
    %2903 = vxpose.xlu0.b32.cont [9/16] 0.0, 128
    %2904 = vxpose.xlu0.b32.cont [10/16] 0.0, 128
    %2905 = vxpose.xlu0.b32.cont [11/16] 0.0, 128
    %2906 = vxpose.xlu0.b32.cont [12/16] 0.0, 128
    %2907 = vxpose.xlu0.b32.cont [13/16] 0.0, 128
    %2908 = vxpose.xlu0.b32.cont [14/16] 0.0, 128
    %2909 = vxpose.xlu0.b32.cont [15/16] 0.0, 128
    %2910 = vxpose.xlu0.b32.end [16/16] 0.0, 128
    %v2911 = vpop.trf.xlu0
    %v2912 = vpop.trf.xlu0
    %v2913 = vpop.trf.xlu0
    %v2914 = vpop.trf.xlu0
    %v2915 = vpop.trf.xlu0
    %v2916 = vpop.trf.xlu0
    %v2917 = vpop.trf.xlu0
    %v2918 = vpop.trf.xlu0
    %v2919 = vpop.trf.xlu0
    %v2920 = vpop.trf.xlu0
    %v2921 = vpop.trf.xlu0
    %v2922 = vpop.trf.xlu0
    %v2923 = vpop.trf.xlu0
    %v2924 = vpop.trf.xlu0
    %v2925 = vpop.trf.xlu0
    %v2926 = vpop.trf.xlu0
    %v2928 = vsel %vm2810, %v2911, 0
    %2930 = vmatpush.msra.mxu0 0.0
    %2931 = vmatpush.msra.mxu0 0.0
    %2932 = vmatpush.msra.mxu0 0.0
    %2933 = vmatpush.msra.mxu0 0.0
    %2934 = vmatpush.msra.mxu0 0.0
    %2935 = vmatpush.msra.mxu0 0.0
    %2936 = vmatpush.msra.mxu0 0.0
    %2937 = vmatpush.msra.mxu0 0.0
    %2938 = vmatpush.msra.mxu0 0.0
    %2939 = vmatpush.msra.mxu0 0.0
    %2940 = vmatpush.msra.mxu0 0.0
    %2941 = vmatpush.msra.mxu0 0.0
    %2942 = vmatpush.msra.mxu0 0.0
    %2943 = vmatpush.msra.mxu0 0.0
    %2944 = vmatpush.msra.mxu0 0.0
    %2945 = vmatpush.msra.mxu0 %v2894
    %2946 = vmatmul.f32.gmra.mxu0 %v2928
    %v2947 = vpop.f32.mrf.mxu0
    %v2948 = vadd.f32 0.0, %v2947
    %2949 = vdwg.mxu0
    %v2950 = vadd.f32 %v2891, %v2948
    %2951 = vst.msk [vmem:[#allocation7] sm:$0xff] %vm2810, %v2950
    %vm2952 = vcmp.gt.f32.partialorder %v2950, 0.0
    %v2953 = vsel %vm2952, 1, 0
    %v2954 = vcvt.s32.f32 %v2953
    %v2955 = vsel %vm2810, %v2954, 0.0
    %2956 = vadd.xlane.f32.xlu0 %v2955
    %v2957 = vpop.xlane.xlu0 %2956
    %v2958 = vmax.f32 %v2957, 1.0
    %v2960 = vsel %vm2810, %v2954, 0
    %2962 = vmatpush.msra.mxu0 0.0
    %2963 = vmatpush.msra.mxu0 0.0
    %2964 = vmatpush.msra.mxu0 0.0
    %2965 = vmatpush.msra.mxu0 0.0
    %2966 = vmatpush.msra.mxu0 0.0
    %2967 = vmatpush.msra.mxu0 0.0
    %2968 = vmatpush.msra.mxu0 0.0
    %2969 = vmatpush.msra.mxu0 0.0
    %2970 = vmatpush.msra.mxu0 0.0
    %2971 = vmatpush.msra.mxu0 0.0
    %2972 = vmatpush.msra.mxu0 0.0
    %2973 = vmatpush.msra.mxu0 0.0
    %2974 = vmatpush.msra.mxu0 0.0
    %2975 = vmatpush.msra.mxu0 0.0
    %2976 = vmatpush.msra.mxu0 0.0
    %2977 = vmatpush.msra.mxu0 %v2691
    %2978 = vmatmul.f32.gmra.mxu0 %v2960
    %v2979 = vpop.f32.mrf.mxu0
    %v2980 = vadd.f32 0.0, %v2979
    %2981 = vdwg.mxu0
    %v2982 = vrcp.pop %v2958
    %v2983 = vmul.f32 %v2958, %v2982
    %v2984 = vsub.f32 1.0, %v2983
    %v2985 = vmul.f32 %v2982, %v2984
    %v2986 = vadd.f32 %v2982, %v2985
    %vm2987 = vweird.f32 %v2958
    %vm2988 = vweird.f32 %v2982
    %vm2989 = vmor %vm2987, %vm2988
    %v2990 = vsel %vm2989, %v2982, %v2986
    %v2991 = vand.u32 2147483647, %v2958
    %vm2992 = vcmp.eq.f32.partialorder %v2991, 8.507059e+37
    %v2993 = vand.u32 %v2958, 2147483648
    %v2994 = vor.u32 1.1754944e-38, %v2993
    %v2995 = vsel %vm2992, %v2994, %v2990
    %v2996 = vmul.f32 %v2980, %v2995
    %v2997 = vld [vmem:[%s10] sm:$0xff]
    %v2998 = vld [vmem:[%s10 + $0x8] sm:$0xff]
    %v2999 = vld [vmem:[%s10 + $0x10] sm:$0xf]
    %v3000 = vld [vmem:[%s11] sm:$0x1]
    %v3002 = vperm.slane %v3000, 0
    %v3005 = vsel %vm164, %v2996, 0
    %v3008 = vsel %vm189, %v2999, 0
    %3010 = vmatpush.msra.mxu0 0.0
    %3011 = vmatpush.msra.mxu0 0.0
    %3012 = vmatpush.msra.mxu0 0.0
    %3013 = vmatpush.msra.mxu0 0.0
    %3014 = vmatpush.msra.mxu0 0.0
    %3015 = vmatpush.msra.mxu0 0.0
    %3016 = vmatpush.msra.mxu0 0.0
    %3017 = vmatpush.msra.mxu0 0.0
    %3018 = vmatpush.msra.mxu0 0.0
    %3019 = vmatpush.msra.mxu0 0.0
    %3020 = vmatpush.msra.mxu0 0.0
    %3021 = vmatpush.msra.mxu0 0.0
    %3022 = vmatpush.msra.mxu0 0.0
    %3023 = vmatpush.msra.mxu0 %v3008
    %3024 = vmatpush.msra.mxu0 %v2998
    %3025 = vmatpush.msra.mxu0 %v2997
    %3026 = vmatmul.f32.gmra.mxu0 %v3005
    %v3027 = vpop.f32.mrf.mxu0
    %v3028 = vadd.f32 %v3002, %v3027
    %3029 = vdwg.mxu0
    %v3030 = vld [vmem:[%s12] sm:$0xff]
    %v3031 = vld [vmem:[%s12 + $0x8] sm:$0xff]
    %v3032 = vld [vmem:[%s12 + $0x10] sm:$0xf]
    %v3034 = vsel %vm189, %v3032, 0
    %3036 = vmatpush.msra.mxu0 0.0
    %3037 = vmatpush.msra.mxu0 0.0
    %3038 = vmatpush.msra.mxu0 0.0
    %3039 = vmatpush.msra.mxu0 0.0
    %3040 = vmatpush.msra.mxu0 0.0
    %3041 = vmatpush.msra.mxu0 0.0
    %3042 = vmatpush.msra.mxu0 0.0
    %3043 = vmatpush.msra.mxu0 0.0
    %3044 = vmatpush.msra.mxu0 0.0
    %3045 = vmatpush.msra.mxu0 0.0
    %3046 = vmatpush.msra.mxu0 0.0
    %3047 = vmatpush.msra.mxu0 0.0
    %3048 = vmatpush.msra.mxu0 0.0
    %3049 = vmatpush.msra.mxu0 %v3034
    %3050 = vmatpush.msra.mxu0 %v3031
    %3051 = vmatpush.msra.mxu0 %v3030
    %3052 = vmatmul.f32.gmra.mxu0 %v2721
    %v3053 = vpop.f32.mrf.mxu0
    %v3054 = vadd.f32 0.0, %v3053
    %3055 = vdwg.mxu0
    %v3056 = vadd.f32 %v3028, %v3054
    %v3057 = vmax.f32 %v3056, 0.0
    %3058 = vmatpush.msra.mxu0 0.0
    %3059 = vmatpush.msra.mxu0 0.0
    %3060 = vmatpush.msra.mxu0 0.0
    %3061 = vmatpush.msra.mxu0 0.0
    %3062 = vmatpush.msra.mxu0 0.0
    %3063 = vmatpush.msra.mxu0 0.0
    %3064 = vmatpush.msra.mxu0 0.0
    %3065 = vmatpush.msra.mxu0 0.0
    %3066 = vmatpush.msra.mxu0 0.0
    %3067 = vmatpush.msra.mxu0 0.0
    %3068 = vmatpush.msra.mxu0 0.0
    %3069 = vmatpush.msra.mxu0 0.0
    %3070 = vmatpush.msra.mxu0 0.0
    %3071 = vmatpush.msra.mxu0 0.0
    %3072 = vmatpush.msra.mxu0 0.0
    %3073 = vmatpush.msra.mxu0 %v3057
    %3074 = vmatmul.f32.gmra.mxu0 %v2960
    %v3075 = vpop.f32.mrf.mxu0
    %v3076 = vadd.f32 0.0, %v3075
    %3077 = vdwg.mxu0
    %v3078 = vmul.f32 %v3076, %v2995
    %v3079 = vld [vmem:[%s13] sm:$0xff]
    %v3080 = vld [vmem:[%s13 + $0x8] sm:$0x7f]
    %v3081 = vld [vmem:[%s14] sm:$0x1]
    %v3083 = vperm.slane %v3081, 0
    %vm3085 = vcmask 121856
    %v3087 = vsel %vm3085, %v3078, 0
    %vm3089 = vcmask 1046528
    %v3091 = vsel %vm3089, %v3080, 0
    %3093 = vmatpush.msra.mxu0 0.0
    %3094 = vmatpush.msra.mxu0 0.0
    %3095 = vmatpush.msra.mxu0 0.0
    %3096 = vmatpush.msra.mxu0 0.0
    %3097 = vmatpush.msra.mxu0 0.0
    %3098 = vmatpush.msra.mxu0 0.0
    %3099 = vmatpush.msra.mxu0 0.0
    %3100 = vmatpush.msra.mxu0 0.0
    %3101 = vmatpush.msra.mxu0 0.0
    %3102 = vmatpush.msra.mxu0 0.0
    %3103 = vmatpush.msra.mxu0 0.0
    %3104 = vmatpush.msra.mxu0 0.0
    %3105 = vmatpush.msra.mxu0 0.0
    %3106 = vmatpush.msra.mxu0 0.0
    %3107 = vmatpush.msra.mxu0 %v3091
    %3108 = vmatpush.msra.mxu0 %v3079
    %3109 = vmatmul.f32.gmra.mxu0 %v3087
    %v3110 = vpop.f32.mrf.mxu0
    %v3111 = vadd.f32 %v3083, %v3110
    %3112 = vdwg.mxu0
    %v3113 = vld [vmem:[%s15] sm:$0xff]
    %v3114 = vld [vmem:[%s15 + $0x8] sm:$0x7f]
    %v3116 = vsel %vm3085, %v3057, 0
    %v3119 = vsel %vm3089, %v3114, 0
    %3121 = vmatpush.msra.mxu0 0.0
    %3122 = vmatpush.msra.mxu0 0.0
    %3123 = vmatpush.msra.mxu0 0.0
    %3124 = vmatpush.msra.mxu0 0.0
    %3125 = vmatpush.msra.mxu0 0.0
    %3126 = vmatpush.msra.mxu0 0.0
    %3127 = vmatpush.msra.mxu0 0.0
    %3128 = vmatpush.msra.mxu0 0.0
    %3129 = vmatpush.msra.mxu0 0.0
    %3130 = vmatpush.msra.mxu0 0.0
    %3131 = vmatpush.msra.mxu0 0.0
    %3132 = vmatpush.msra.mxu0 0.0
    %3133 = vmatpush.msra.mxu0 0.0
    %3134 = vmatpush.msra.mxu0 0.0
    %3135 = vmatpush.msra.mxu0 %v3119
    %3136 = vmatpush.msra.mxu0 %v3113
    %3137 = vmatmul.f32.gmra.mxu0 %v3116
    %v3138 = vpop.f32.mrf.mxu0
    %v3139 = vadd.f32 0.0, %v3138
    %3140 = vdwg.mxu0
    %v3141 = vadd.f32 %v3111, %v3139
    %3142 = vst.msk [vmem:[#allocation5] sm:$0xff] %vm164, %v3141
    %v3143 = vld [vmem:[%s16] sm:$0xff]
    %v3144 = vld [vmem:[%s16 + $0x8] sm:$0xff]
    %v3145 = vld [vmem:[%s16 + $0x10] sm:$0xf]
    %v3146 = vld [vmem:[%s17] sm:$0x1]
    %v3148 = vperm.slane %v3146, 0
    %v3151 = vsel %vm164, %v3141, 0
    %v3154 = vsel %vm189, %v3145, 0
    %3156 = vmatpush.msra.mxu0 0.0
    %3157 = vmatpush.msra.mxu0 0.0
    %3158 = vmatpush.msra.mxu0 0.0
    %3159 = vmatpush.msra.mxu0 0.0
    %3160 = vmatpush.msra.mxu0 0.0
    %3161 = vmatpush.msra.mxu0 0.0
    %3162 = vmatpush.msra.mxu0 0.0
    %3163 = vmatpush.msra.mxu0 0.0
    %3164 = vmatpush.msra.mxu0 0.0
    %3165 = vmatpush.msra.mxu0 0.0
    %3166 = vmatpush.msra.mxu0 0.0
    %3167 = vmatpush.msra.mxu0 0.0
    %3168 = vmatpush.msra.mxu0 0.0
    %3169 = vmatpush.msra.mxu0 %v3154
    %3170 = vmatpush.msra.mxu0 %v3144
    %3171 = vmatpush.msra.mxu0 %v3143
    %3172 = vmatmul.f32.gmra.mxu0 %v3151
    %v3173 = vpop.f32.mrf.mxu0
    %v3174 = vadd.f32 %v3148, %v3173
    %3175 = vdwg.mxu0
    %v3176 = vsel %vm2695, %v3174, -inf
    %3177 = vmax.xlane.f32.xlu0 %v3176
    %v3178 = vpop.xlane.xlu0 %3177
    %v3179 = vsub.f32 %v3174, %v3178
    %v3180 = vmul.f32 %v3179, 1.442695
    %v3181 = vpow.pop %v3180
    %v3182 = vsel %vm2695, %v3181, 0.0
    %3183 = vadd.xlane.f32.xlu0 %v3182
    %v3184 = vpop.xlane.xlu0 %3183
    %v3185 = vrcp.pop %v3184
    %v3186 = vmul.f32 %v3184, %v3185
    %v3187 = vsub.f32 1.0, %v3186
    %v3188 = vmul.f32 %v3185, %v3187
    %v3189 = vadd.f32 %v3185, %v3188
    %vm3190 = vweird.f32 %v3184
    %vm3191 = vweird.f32 %v3185
    %vm3192 = vmor %vm3190, %vm3191
    %v3193 = vsel %vm3192, %v3185, %v3189
    %v3194 = vand.u32 2147483647, %v3184
    %vm3195 = vcmp.eq.f32.partialorder %v3194, 8.507059e+37
    %v3196 = vand.u32 %v3184, 2147483648
    %v3197 = vor.u32 1.1754944e-38, %v3196
    %v3198 = vsel %vm3195, %v3197, %v3193
    %v3199 = vmul.f32 %v3181, %v3198
    %3200 = vst.msk [vmem:[%s18] sm:$0xff] %vm2695, %v3199
    // Predicated region
    $region74: #{gnn_lstm_forward.1} parent=1 // pred_check
      _
    $region75: #{gnn_lstm_forward.1} parent=1 // pred_check_branch
      %3202 = sbr.rel (0) target = $region77
    $region76: #{gnn_lstm_forward.1} parent=1 // pred_region
      _
    $region77: #{gnn_lstm_forward.1} parent=1 // pred_fallthru
      _
    // Predicated region
    $region78: #{gnn_lstm_forward.1} parent=1 // pred_check
      _
    $region79: #{gnn_lstm_forward.1} parent=1 // pred_check_branch
      %3204 = sbr.rel (0) target = $region81
    $region80: #{gnn_lstm_forward.1} parent=1 // pred_region
      %3206 = vsyncadd [#allocation4], 0
      %s3208 = sshll.u32 [#allocation3], 4
      %s3209 = int_to_ptr.vmem [resolvable:$true] %s3208
      %s3210 = sshll.u32 %s19, 4
      %s3211 = int_to_ptr.hbm [resolvable:$true] %s3210
      %3213 = dma.vmem_to_hbm [thread:$0]  %s3209, 128, %s3211, [#allocation4]
    $region81: #{gnn_lstm_forward.1} parent=1 // pred_fallthru
      _
    // Predicated region
    $region82: #{gnn_lstm_forward.1} parent=1 // pred_check
      _
    $region83: #{gnn_lstm_forward.1} parent=1 // pred_check_branch
      %3215 = sbr.rel (0) target = $region85
    $region84: #{gnn_lstm_forward.1} parent=1 // pred_region
      %3217 = vsyncadd [#allocation6], 0
      %s3219 = sshll.u32 [#allocation5], 4
      %s3220 = int_to_ptr.vmem [resolvable:$true] %s3219
      %s3221 = sshll.u32 %s20, 4
      %s3222 = int_to_ptr.hbm [resolvable:$true] %s3221
      %3224 = dma.vmem_to_hbm [thread:$0]  %s3220, 128, %s3222, [#allocation6]
    $region85: #{gnn_lstm_forward.1} parent=1 // pred_fallthru
      _
    // Predicated region
    $region86: #{gnn_lstm_forward.1} parent=1 // pred_check
      _
    $region87: #{gnn_lstm_forward.1} parent=1 // pred_check_branch
      %3226 = sbr.rel (0) target = $region89
    $region88: #{gnn_lstm_forward.1} parent=1 // pred_region
      %3228 = vsyncadd [#allocation6], 0
      %s3230 = sshll.u32 [#allocation7], 4
      %s3231 = int_to_ptr.vmem [resolvable:$true] %s3230
      %s3232 = sshll.u32 %s21, 4
      %s3233 = int_to_ptr.hbm [resolvable:$true] %s3232
      %3235 = dma.vmem_to_hbm [thread:$0]  %s3231, 128, %s3233, [#allocation6]
    $region89: #{gnn_lstm_forward.1} parent=1 // pred_fallthru
      _
    // Predicated region
    $region90: #{gnn_lstm_forward.1} parent=1 // pred_check
      _
    $region91: #{gnn_lstm_forward.1} parent=1 // pred_check_branch
      %3237 = sbr.rel (0) target = $region93
    $region92: #{gnn_lstm_forward.1} parent=1 // pred_region
      _
    $region93: #{gnn_lstm_forward.1} parent=1 // pred_fallthru
      _
    // Predicated region
    $region94: #{gnn_lstm_forward.1} parent=1 // pred_check
      _
    $region95: #{gnn_lstm_forward.1} parent=1 // pred_check_branch
      %3239 = sbr.rel (0) target = $region97
    $region96: #{gnn_lstm_forward.1} parent=1 // pred_region
      %3241 = dma.done [#allocation4], 128
    $region97: #{gnn_lstm_forward.1} parent=1 // pred_fallthru
      _
    // Predicated region
    $region98: #{gnn_lstm_forward.1} parent=1 // pred_check
      _
    $region99: #{gnn_lstm_forward.1} parent=1 // pred_check_branch
      %3243 = sbr.rel (0) target = $region101
    $region100: #{gnn_lstm_forward.1} parent=1 // pred_region
      %3245 = dma.done [#allocation6], 128
    $region101: #{gnn_lstm_forward.1} parent=1 // pred_fallthru
      _
    // Predicated region
    $region102: #{gnn_lstm_forward.1} parent=1 // pred_check
      _
    $region103: #{gnn_lstm_forward.1} parent=1 // pred_check_branch
      %3247 = sbr.rel (0) target = $region105
    $region104: #{gnn_lstm_forward.1} parent=1 // pred_region
      %3249 = dma.done [#allocation6], 128
    $region105: #{gnn_lstm_forward.1} parent=1 // pred_fallthru
      _
    %3250 = vsyncpa [#allocation4], 1
    %3251 = vsyncpa [#allocation6], 1

</llo_original>
